<compile_context>
chip_gen: v7x
topology: tpu7x:2x2x1
jax: 0.10.0
libtpu: 0.0.40
codegen_flags: <defaults>
</compile_context>

<pallas_src>
import functools
import numpy as np
import jax
import jax.numpy as jnp
from jax.experimental import pallas as pl
from jax.experimental.pallas import tpu as pltpu

_LANE = 128
_SUBLANE = 8


# ----------------------------------------------------------------------------
# VMEM budgeting
# ----------------------------------------------------------------------------
def _round_up(x, m):
    return ((x + m - 1) // m) * m


def _vmem_limit_bytes():
    """~75% of the physical per-core VMEM (48 MiB on v7x, 96 MiB on v5e/v6e)."""
    cap = 64 << 20
    try:
        info = pltpu.get_tpu_info()
        cap = int(getattr(info, "vmem_capacity_bytes", cap))
    except Exception:
        pass
    return max(32 << 20, (cap * 3) // 4)


_VMEM_LIMIT = _vmem_limit_bytes()
# working-set budget for the double-buffered blocks of one pallas_call step
_WORKSET_BUDGET = max(16 << 20, _VMEM_LIMIT - (8 << 20))


# ----------------------------------------------------------------------------
# tile selection
# ----------------------------------------------------------------------------
def _conv_tile(p, c_in, c_out, max_tp=8192, budget=None):
    """Lane-dense spatial tile for the 1x1 conv (multiple of 128, ragged grid)."""
    budget = _WORKSET_BUDGET if budget is None else budget
    per_col = 2 * (c_in + c_out) * 4                    # double-buffered x + out
    cap = min(max_tp, max(_LANE, (budget // per_col) // _LANE * _LANE))
    return p if p <= cap else cap


def _resize_tiles(n, h_in, w_in, h_out, w_out, with_acc, budget=None):
    """Pick (NB slabs per step, TM output-row tile) for the resize kernels,
    budgeting double-buffered x / out / (acc) / Ah / AwT blocks."""
    budget = _WORKSET_BUDGET if budget is None else budget
    f32 = 4
    awt_b = 2 * w_in * w_out * f32                      # grid-invariant, still 2-buffered

    def step_bytes(nb, tm):
        x_b = 2 * nb * h_in * w_in * f32
        out_b = (4 if with_acc else 2) * nb * tm * w_out * f32   # out (+ acc input)
        ah_b = 2 * tm * h_in * f32
        return x_b + out_b + ah_b + awt_b

    def pick_nb(tm):
        best = None
        for nb in range(min(n, 16), 0, -1):
            if step_bytes(nb, tm) <= budget:
                if best is None:
                    best = nb
                if n % nb == 0 and nb * 2 >= best:      # prefer divisors (no waste)
                    return nb
        return best

    tm_cands = []
    if h_out <= 256:
        tm_cands.append(h_out)                          # full dim is always legal
    top = min(256, (h_out // _SUBLANE) * _SUBLANE)
    tm_cands.extend(range(top, 0, -_SUBLANE))
    if not tm_cands:
        tm_cands = [h_out]

    nb, tm = 1, tm_cands[-1]
    for cand in tm_cands:
        got = pick_nb(cand)
        if got:
            nb, tm = got, cand
            break

    # v7x megacore: keep at least two steps on a parallel axis when possible.
    if pl.cdiv(n, nb) == 1 and pl.cdiv(h_out, tm) == 1:
        if n >= 2:
            nb = pl.cdiv(n, 2)
        elif h_out >= 2 * _SUBLANE:
            tm = _round_up(pl.cdiv(h_out, 2), _SUBLANE)
    return nb, tm


def _fused_aug_tile(c_in, c_out, h_in, w_in, h_out, w_out, budget=None):
    """Output-row tile for the fused augment+conv kernel, or None if even the
    smallest tile cannot fit (then we fall back to the unfused path)."""
    budget = _WORKSET_BUDGET if budget is None else budget
    f32 = 4
    base = 2 * c_in * h_in * w_in * f32 + 2 * w_in * w_out * f32

    def fits(tm):
        return (base
                + 2 * c_out * tm * w_out * f32          # output block
                + 2 * tm * h_in * f32                   # Ah block
                + c_in * tm * w_out * f32) <= budget    # in-kernel per-channel interp

    cands = []
    if h_out <= 128:
        cands.append(h_out)
    top = min(128, (h_out // _SUBLANE) * _SUBLANE)
    cands.extend(range(top, 0, -_SUBLANE))
    for tm in cands:
        if fits(tm):
            return tm
    return None


# ----------------------------------------------------------------------------
# Pallas kernels
# ----------------------------------------------------------------------------
def _conv1x1_kernel(x_ref, w_ref, b_ref, o_ref):
    # x_ref: (Cin, TP), w_ref: (Cout, Cin), b_ref: (Cout, 1), o_ref: (Cout, TP)
    o_ref[...] = (
        jnp.dot(w_ref[...], x_ref[...], preferred_element_type=jnp.float32)
        + b_ref[...]
    ).astype(o_ref.dtype)


def _resize_kernel(x_ref, ah_ref, awt_ref, o_ref):
    # x_ref: (NB, Hin, Win), ah_ref: (TM, Hin), awt_ref: (Win, Wout)
    # o_ref: (NB, TM, Wout)
    ah = ah_ref[...]
    awt = awt_ref[...]
    nb = x_ref.shape[0]

    def body(i, carry):
        rows = jnp.dot(ah, x_ref[i], preferred_element_type=jnp.float32)
        o_ref[i] = jnp.dot(rows, awt,
                           preferred_element_type=jnp.float32).astype(o_ref.dtype)
        return carry

    jax.lax.fori_loop(0, nb, body, 0, unroll=True)


def _make_resize_acc_kernel(scale):
    """Deaugment resize fused with accumulation (+ optional averaging scale)."""
    def _kernel(acc_ref, x_ref, ah_ref, awt_ref, o_ref):
        # acc_ref/o_ref: (NB, TM, Wout) (aliased), x_ref: (NB, Hin, Win)
        ah = ah_ref[...]
        awt = awt_ref[...]
        nb = x_ref.shape[0]

        def body(i, carry):
            rows = jnp.dot(ah, x_ref[i], preferred_element_type=jnp.float32)
            res = jnp.dot(rows, awt, preferred_element_type=jnp.float32)
            out = acc_ref[i].astype(jnp.float32) + res
            if scale != 1.0:
                out = out * scale
            o_ref[i] = out.astype(o_ref.dtype)
            return carry

        jax.lax.fori_loop(0, nb, body, 0, unroll=True)
    return _kernel


def _resize_conv_kernel(x_ref, ah_ref, awt_ref, w_ref, b_ref, o_ref):
    """Fused augment (bilinear resize) + 1x1 conv.
    x_ref: (Cin, Hin, Win) VMEM, ah_ref: (TM, Hin), awt_ref: (Win, Wm),
    w_ref: (Cout, Cin) SMEM, b_ref: (Cout,) SMEM, o_ref: (Cout, TM, Wm)."""
    ah = ah_ref[...]
    awt = awt_ref[...]
    c_in = x_ref.shape[0]
    c_out = o_ref.shape[0]
    interp = []
    for c in range(c_in):                               # Cin is small and static
        rows = jnp.dot(ah, x_ref[c], preferred_element_type=jnp.float32)
        interp.append(jnp.dot(rows, awt, preferred_element_type=jnp.float32))
    for o in range(c_out):                              # scalar weights from SMEM
        acc = interp[0] * w_ref[o, 0] + b_ref[o]
        for c in range(1, c_in):
            acc = acc + interp[c] * w_ref[o, c]
        o_ref[o] = acc.astype(o_ref.dtype)


# ----------------------------------------------------------------------------
# wrappers around pallas_call
# ----------------------------------------------------------------------------
def conv1x1(x, w, b):
    """Synthetic model forward: 1x1 conv (NCHW). x:(B,Cin,H,W) w:(Cout,Cin) b:(Cout,)."""
    B, Cin, H, W = x.shape
    Cout = w.shape[0]
    P = H * W
    TP = _conv_tile(P, Cin, Cout)                       # lane-dense; ragged last block
    xf = x.reshape(B, Cin, P)
    out = pl.pallas_call(
        _conv1x1_kernel,
        out_shape=jax.ShapeDtypeStruct((B, Cout, P), jnp.float32),
        grid=(B, pl.cdiv(P, TP)),
        in_specs=[
            pl.BlockSpec((None, Cin, TP), lambda bi, pi: (bi, 0, pi)),
            pl.BlockSpec((Cout, Cin), lambda bi, pi: (0, 0)),
            pl.BlockSpec((Cout, 1), lambda bi, pi: (0, 0)),
        ],
        out_specs=pl.BlockSpec((None, Cout, TP), lambda bi, pi: (bi, 0, pi)),
        compiler_params=pltpu.CompilerParams(
            dimension_semantics=("parallel", "parallel"),
            vmem_limit_bytes=_VMEM_LIMIT),
    )(xf, w, b.reshape(Cout, 1))
    return out.reshape(B, Cout, H, W)


def _interp_matrix(out_size, in_size):
    """Row-interpolation matrix matching F.interpolate bilinear, align_corners=False."""
    A = np.zeros((out_size, in_size), np.float32)
    if out_size == in_size:
        np.fill_diagonal(A, 1.0)
        return A
    scale = in_size / out_size
    for i in range(out_size):
        src = max((i + 0.5) * scale - 0.5, 0.0)
        i0 = min(int(np.floor(src)), in_size - 1)
        i1 = min(i0 + 1, in_size - 1)
        w1 = src - i0
        A[i, i0] += 1.0 - w1
        A[i, i1] += w1
    return A


def bilinear_resize(x, h_out, w_out):
    """F.interpolate(x, size=(h_out,w_out), mode='bilinear', align_corners=False)."""
    B, C, Hin, Win = x.shape
    Ah = jnp.asarray(_interp_matrix(h_out, Hin))
    AwT = jnp.asarray(_interp_matrix(w_out, Win).T)
    N = B * C
    NB, TM = _resize_tiles(N, Hin, Win, h_out, w_out, with_acc=False)
    xf = x.reshape(N, Hin, Win)
    out = pl.pallas_call(
        _resize_kernel,
        out_shape=jax.ShapeDtypeStruct((N, h_out, w_out), jnp.float32),
        grid=(pl.cdiv(N, NB), pl.cdiv(h_out, TM)),      # row tile innermost: x reused
        in_specs=[
            pl.BlockSpec((NB, Hin, Win), lambda n, m: (n, 0, 0)),
            pl.BlockSpec((TM, Hin), lambda n, m: (m, 0)),
            pl.BlockSpec((Win, w_out), lambda n, m: (0, 0)),
        ],
        out_specs=pl.BlockSpec((NB, TM, w_out), lambda n, m: (n, m, 0)),
        compiler_params=pltpu.CompilerParams(
            dimension_semantics=("parallel", "parallel"),
            vmem_limit_bytes=_VMEM_LIMIT),
    )(xf, Ah, AwT)
    return out.reshape(B, C, h_out, w_out)


def bilinear_resize_accumulate(acc, x, scale=1.0):
    """(acc + F.interpolate(x, size=acc.shape[2:], bilinear)) * scale, fused into
    one Pallas pass with acc aliased in place (no separate combine pass)."""
    B, C, Hout, Wout = acc.shape
    _, _, Hin, Win = x.shape
    N = B * C
    Ah = jnp.asarray(_interp_matrix(Hout, Hin))
    AwT = jnp.asarray(_interp_matrix(Wout, Win).T)
    NB, TM = _resize_tiles(N, Hin, Win, Hout, Wout, with_acc=True)
    accf = acc.reshape(N, Hout, Wout)
    xf = x.reshape(N, Hin, Win)
    out = pl.pallas_call(
        _make_resize_acc_kernel(float(scale)),
        out_shape=jax.ShapeDtypeStruct((N, Hout, Wout), jnp.float32),
        grid=(pl.cdiv(N, NB), pl.cdiv(Hout, TM)),
        in_specs=[
            pl.BlockSpec((NB, TM, Wout), lambda n, m: (n, m, 0)),   # running accumulator
            pl.BlockSpec((NB, Hin, Win), lambda n, m: (n, 0, 0)),   # term to deaugment
            pl.BlockSpec((TM, Hin), lambda n, m: (m, 0)),
            pl.BlockSpec((Win, Wout), lambda n, m: (0, 0)),
        ],
        out_specs=pl.BlockSpec((NB, TM, Wout), lambda n, m: (n, m, 0)),
        input_output_aliases={0: 0},                    # accumulate in place
        compiler_params=pltpu.CompilerParams(
            dimension_semantics=("parallel", "parallel"),
            vmem_limit_bytes=_VMEM_LIMIT),
    )(accf, xf, Ah, AwT)
    return out.reshape(B, C, Hout, Wout)


def conv1x1_resized(image, w, b, h_out, w_out):
    """model(F.interpolate(image, (h_out,w_out))): fused bilinear augment + 1x1 conv.
    Removes the (B,Cin,Hm,Wm) intermediate HBM round trip per offset."""
    B, Cin, Hin, Win = image.shape
    Cout = w.shape[0]
    TM = _fused_aug_tile(Cin, Cout, Hin, Win, h_out, w_out)
    if TM is None:
        # TODO(synk): band-slice Hin so the fused path also fits very large images.
        return conv1x1(bilinear_resize(image, h_out, w_out), w, b)
    Ah = jnp.asarray(_interp_matrix(h_out, Hin))
    AwT = jnp.asarray(_interp_matrix(w_out, Win).T)
    out = pl.pallas_call(
        _resize_conv_kernel,
        out_shape=jax.ShapeDtypeStruct((B, Cout, h_out, w_out), jnp.float32),
        grid=(B, pl.cdiv(h_out, TM)),
        in_specs=[
            pl.BlockSpec((None, Cin, Hin, Win), lambda bi, m: (bi, 0, 0, 0)),
            pl.BlockSpec((TM, Hin), lambda bi, m: (m, 0)),
            pl.BlockSpec((Win, w_out), lambda bi, m: (0, 0)),
            pl.BlockSpec(memory_space=pltpu.MemorySpace.SMEM),   # w (Cout, Cin)
            pl.BlockSpec(memory_space=pltpu.MemorySpace.SMEM),   # b (Cout,)
        ],
        out_specs=pl.BlockSpec((None, Cout, TM, w_out), lambda bi, m: (bi, 0, m, 0)),
        compiler_params=pltpu.CompilerParams(
            dimension_semantics=("parallel", "parallel"),
            vmem_limit_bytes=_VMEM_LIMIT),
    )(image, Ah, AwT, w, b)
    return out


# ----------------------------------------------------------------------------
# MultiscaleTTA forward (synthetic 1x1-conv model, outputs = ["mask"])
# ----------------------------------------------------------------------------
def multiscale_tta_forward(image, w, b, size_offsets, average=True):
    outputs_keys = ("mask",)

    def model(x):
        return {"mask": conv1x1(x, w, b)}

    def model_on_augmented(x, hm, wm):
        # augment (bilinear resize) fused with the model's 1x1 conv
        return {"mask": conv1x1_resized(x, w, b, hm, wm)}

    outputs = model(image)                              # outputs = self.model(image)
    H, W = int(image.shape[2]), int(image.shape[3])
    n_offsets = len(size_offsets)
    avg_scale = (1.0 / (n_offsets + 1)) if average else 1.0

    for idx, off in enumerate(size_offsets):
        Hm, Wm = H + int(off), W + int(off)
        if Hm < 1 or Wm < 1:
            raise ValueError(f"size offset {off} yields non-positive size ({Hm},{Wm})")
        aug_output = model_on_augmented(image, Hm, Wm)  # augment + model, fused
        # deaugment + accumulate (+ averaging on the final term), fused:
        step_scale = avg_scale if idx == n_offsets - 1 else 1.0
        for k in outputs_keys:
            outputs[k] = bilinear_resize_accumulate(outputs[k], aug_output[k],
                                                    scale=step_scale)
    # (when size_offsets is empty, avg_scale == 1.0, so nothing more to do)
    return outputs


# ----------------------------------------------------------------------------
# Pure-JAX reference (same math, no Pallas) for a sanity check
# ----------------------------------------------------------------------------
def _ref_forward(image, w, b, size_offsets, average=True):
    def model(x):
        return jnp.einsum("oc,bchw->bohw", w, x) + b.reshape(1, -1, 1, 1)

    def resize(x, ho, wo):
        Ah = jnp.asarray(_interp_matrix(ho, x.shape[2]))
        Aw = jnp.asarray(_interp_matrix(wo, x.shape[3]))
        return jnp.einsum("oh,bchw,pw->bcop", Ah, x, Aw)

    H, W = image.shape[2], image.shape[3]
    acc = model(image)
    for off in size_offsets:
        acc = acc + resize(model(resize(image, H + off, W + off)), H, W)
    if average:
        acc = acc * (1.0 / (len(size_offsets) + 1))
    return {"mask": acc}


if __name__ == "__main__":
    key = jax.random.PRNGKey(0)
    k_img, k_w, k_b = jax.random.split(key, 3)

    B, C_in, H, W = 2, 4, 16, 16
    C_out = 5
    size_offsets = (-4, 4)

    image = jax.random.normal(k_img, (B, C_in, H, W), dtype=jnp.float32)
    w = jax.random.normal(k_w, (C_out, C_in), dtype=jnp.float32) * 0.1
    b = jax.random.normal(k_b, (C_out,), dtype=jnp.float32) * 0.1

    fwd = jax.jit(functools.partial(multiscale_tta_forward,
                                    size_offsets=size_offsets, average=True))
    out = fwd(image, w, b)
    out = jax.tree_util.tree_map(jax.block_until_ready, out)

    ref = _ref_forward(image, w, b, size_offsets, average=True)
    np.testing.assert_allclose(np.asarray(out["mask"]), np.asarray(ref["mask"]),
                               rtol=1e-4, atol=1e-4)

    print("KERNEL_OK")
</pallas_src>

<mosaic_0001>
module attributes {stable_mosaic.version = 11 : i64} {
  func.func @_conv1x1_kernel(%arg0: i32, %arg1: i32, %arg2: memref<1x4x256xf32, #tpu.memory_space<vmem>>, %arg3: memref<5x4xf32, #tpu.memory_space<vmem>>, %arg4: memref<5x1xf32, #tpu.memory_space<vmem>>, %arg5: memref<1x5x256xf32, #tpu.memory_space<vmem>>) attributes {dimension_semantics = [#tpu.dimension_semantics<parallel>, #tpu.dimension_semantics<parallel>], iteration_bounds = array<i64: 2, 1>, scalar_prefetch = 0 : i64, scratch_operands = 0 : i64, tpu.core_type = #tpu.core_type<tc>, window_params = [{transform_indices = @transform_0, window_bounds = array<i64: 1, 4, 256>}, {pipeline_mode = #tpu.pipeline_mode<synchronous>, transform_indices = @transform_1, window_bounds = array<i64: 5, 4>}, {pipeline_mode = #tpu.pipeline_mode<synchronous>, transform_indices = @transform_2, window_bounds = array<i64: 5, 1>}, {transform_indices = @transform_3, window_bounds = array<i64: 1, 5, 256>}]} {
    %c0 = arith.constant 0 : index
    %c0_0 = arith.constant 0 : index
    %0 = vector.load %arg3[%c0, %c0_0] : memref<5x4xf32, #tpu.memory_space<vmem>>, vector<5x4xf32>
    %c0_1 = arith.constant 0 : index
    %c0_2 = arith.constant 0 : index
    %c0_3 = arith.constant 0 : index
    %1 = vector.load %arg2[%c0_1, %c0_2, %c0_3] : memref<1x4x256xf32, #tpu.memory_space<vmem>>, vector<1x4x256xf32>
    %2 = vector.shape_cast %1 : vector<1x4x256xf32> to vector<4x256xf32>
    %cst = arith.constant dense<0.000000e+00> : vector<5x256xf32>
    %3 = tpu.matmul %0, %2, %cst {dimension_numbers = #tpu.dot_dimension_numbers<[1], [0], [0], [1], [0, 0, 1, 1], [], []>} : vector<5x4xf32>, vector<4x256xf32>, vector<5x256xf32> -> vector<5x256xf32>
    %c0_4 = arith.constant 0 : index
    %c0_5 = arith.constant 0 : index
    %4 = vector.load %arg4[%c0_4, %c0_5] : memref<5x1xf32, #tpu.memory_space<vmem>>, vector<5x1xf32>
    %5 = vector.broadcast %4 : vector<5x1xf32> to vector<5x256xf32>
    %6 = arith.addf %3, %5 : vector<5x256xf32>
    %c0_6 = arith.constant 0 : index
    %c0_7 = arith.constant 0 : index
    %c0_8 = arith.constant 0 : index
    %7 = vector.load %arg5[%c0_6, %c0_7, %c0_8] : memref<1x5x256xf32, #tpu.memory_space<vmem>>, vector<1x5x256xf32>
    %8 = vector.shape_cast %7 : vector<1x5x256xf32> to vector<5x256xf32>
    %9 = vector.shape_cast %6 : vector<5x256xf32> to vector<1x5x256xf32>
    tpu.vector_store %arg5[%c0_6, %c0_7, %c0_8], %9 {strides = array<i32>} : memref<1x5x256xf32, #tpu.memory_space<vmem>>, vector<1x5x256xf32>,
    return
  }
  func.func @transform_0(%arg0: i32, %arg1: i32) -> (i32, i32, i32) {
    %c0_i32 = arith.constant 0 : i32
    %c0_i32_0 = arith.constant 0 : i32
    return %arg0, %c0_i32, %arg1 : i32, i32, i32
  }
  func.func @transform_1(%arg0: i32, %arg1: i32) -> (i32, i32) {
    %c0_i32 = arith.constant 0 : i32
    %c0_i32_0 = arith.constant 0 : i32
    %c0_i32_1 = arith.constant 0 : i32
    return %c0_i32, %c0_i32_0 : i32, i32
  }
  func.func @transform_2(%arg0: i32, %arg1: i32) -> (i32, i32) {
    %c0_i32 = arith.constant 0 : i32
    %c0_i32_0 = arith.constant 0 : i32
    %c0_i32_1 = arith.constant 0 : i32
    return %c0_i32, %c0_i32_0 : i32, i32
  }
  func.func @transform_3(%arg0: i32, %arg1: i32) -> (i32, i32, i32) {
    %c0_i32 = arith.constant 0 : i32
    %c0_i32_0 = arith.constant 0 : i32
    return %arg0, %c0_i32, %arg1 : i32, i32, i32
  }
}

module attributes {stable_mosaic.version = 11 : i64} {
  func.func @_kernel(%arg0: i32, %arg1: i32, %arg2: memref<5x16x16xf32, #tpu.memory_space<vmem>>, %arg3: memref<5x12x12xf32, #tpu.memory_space<vmem>>, %arg4: memref<16x12xf32, #tpu.memory_space<vmem>>, %arg5: memref<12x16xf32, #tpu.memory_space<vmem>>, %arg6: memref<5x16x16xf32, #tpu.memory_space<vmem>>) attributes {dimension_semantics = [#tpu.dimension_semantics<parallel>, #tpu.dimension_semantics<parallel>], iteration_bounds = array<i64: 2, 1>, scalar_prefetch = 0 : i64, scratch_operands = 0 : i64, tpu.core_type = #tpu.core_type<tc>, window_params = [{transform_indices = @transform_0, window_bounds = array<i64: 5, 16, 16>}, {transform_indices = @transform_1, window_bounds = array<i64: 5, 12, 12>}, {transform_indices = @transform_2, window_bounds = array<i64: 16, 12>}, {pipeline_mode = #tpu.pipeline_mode<synchronous>, transform_indices = @transform_3, window_bounds = array<i64: 12, 16>}, {transform_indices = @transform_4, window_bounds = array<i64: 5, 16, 16>}]} {
    %c0 = arith.constant 0 : index
    %c0_0 = arith.constant 0 : index
    %0 = vector.load %arg4[%c0, %c0_0] : memref<16x12xf32, #tpu.memory_space<vmem>>, vector<16x12xf32>
    %c0_1 = arith.constant 0 : index
    %c0_2 = arith.constant 0 : index
    %1 = vector.load %arg5[%c0_1, %c0_2] : memref<12x16xf32, #tpu.memory_space<vmem>>, vector<12x16xf32>
    %c0_i32 = arith.constant 0 : i32
    %2 = arith.index_cast %c0_i32 : i32 to index
    %c0_3 = arith.constant 0 : index
    %c0_4 = arith.constant 0 : index
    %3 = vector.load %arg3[%2, %c0_3, %c0_4] : memref<5x12x12xf32, #tpu.memory_space<vmem>>, vector<1x12x12xf32>
    %4 = vector.shape_cast %3 : vector<1x12x12xf32> to vector<12x12xf32>
    %cst = arith.constant dense<0.000000e+00> : vector<16x12xf32>
    %5 = tpu.matmul %0, %4, %cst {dimension_numbers = #tpu.dot_dimension_numbers<[1], [0], [0], [1], [0, 0, 1, 1], [], []>} : vector<16x12xf32>, vector<12x12xf32>, vector<16x12xf32> -> vector<16x12xf32>
    %cst_5 = arith.constant dense<0.000000e+00> : vector<16x16xf32>
    %6 = tpu.matmul %5, %1, %cst_5 {dimension_numbers = #tpu.dot_dimension_numbers<[1], [0], [0], [1], [0, 0, 1, 1], [], []>} : vector<16x12xf32>, vector<12x16xf32>, vector<16x16xf32> -> vector<16x16xf32>
    %7 = arith.index_cast %c0_i32 : i32 to index
    %c0_6 = arith.constant 0 : index
    %c0_7 = arith.constant 0 : index
    %8 = vector.load %arg2[%7, %c0_6, %c0_7] : memref<5x16x16xf32, #tpu.memory_space<vmem>>, vector<1x16x16xf32>
    %9 = vector.shape_cast %8 : vector<1x16x16xf32> to vector<16x16xf32>
    %10 = arith.addf %9, %6 : vector<16x16xf32>
    %11 = arith.index_cast %c0_i32 : i32 to index
    %c0_8 = arith.constant 0 : index
    %c0_9 = arith.constant 0 : index
    %12 = vector.load %arg6[%11, %c0_8, %c0_9] : memref<5x16x16xf32, #tpu.memory_space<vmem>>, vector<1x16x16xf32>
    %13 = vector.shape_cast %12 : vector<1x16x16xf32> to vector<16x16xf32>
    %14 = vector.shape_cast %10 : vector<16x16xf32> to vector<1x16x16xf32>
    tpu.vector_store %arg6[%11, %c0_8, %c0_9], %14 {strides = array<i32>} : memref<5x16x16xf32, #tpu.memory_space<vmem>>, vector<1x16x16xf32>,
    %c1_i32 = arith.constant 1 : i32
    %15 = arith.index_cast %c1_i32 : i32 to index
    %c0_10 = arith.constant 0 : index
    %c0_11 = arith.constant 0 : index
    %16 = vector.load %arg3[%15, %c0_10, %c0_11] : memref<5x12x12xf32, #tpu.memory_space<vmem>>, vector<1x12x12xf32>
    %17 = vector.shape_cast %16 : vector<1x12x12xf32> to vector<12x12xf32>
    %cst_12 = arith.constant dense<0.000000e+00> : vector<16x12xf32>
    %18 = tpu.matmul %0, %17, %cst_12 {dimension_numbers = #tpu.dot_dimension_numbers<[1], [0], [0], [1], [0, 0, 1, 1], [], []>} : vector<16x12xf32>, vector<12x12xf32>, vector<16x12xf32> -> vector<16x12xf32>
    %cst_13 = arith.constant dense<0.000000e+00> : vector<16x16xf32>
    %19 = tpu.matmul %18, %1, %cst_13 {dimension_numbers = #tpu.dot_dimension_numbers<[1], [0], [0], [1], [0, 0, 1, 1], [], []>} : vector<16x12xf32>, vector<12x16xf32>, vector<16x16xf32> -> vector<16x16xf32>
    %20 = arith.index_cast %c1_i32 : i32 to index
    %c0_14 = arith.constant 0 : index
    %c0_15 = arith.constant 0 : index
    %21 = vector.load %arg2[%20, %c0_14, %c0_15] : memref<5x16x16xf32, #tpu.memory_space<vmem>>, vector<1x16x16xf32>
    %22 = vector.shape_cast %21 : vector<1x16x16xf32> to vector<16x16xf32>
    %23 = arith.addf %22, %19 : vector<16x16xf32>
    %24 = arith.index_cast %c1_i32 : i32 to index
    %c0_16 = arith.constant 0 : index
    %c0_17 = arith.constant 0 : index
    %25 = vector.load %arg6[%24, %c0_16, %c0_17] : memref<5x16x16xf32, #tpu.memory_space<vmem>>, vector<1x16x16xf32>
    %26 = vector.shape_cast %25 : vector<1x16x16xf32> to vector<16x16xf32>
    %27 = vector.shape_cast %23 : vector<16x16xf32> to vector<1x16x16xf32>
    tpu.vector_store %arg6[%24, %c0_16, %c0_17], %27 {strides = array<i32>} : memref<5x16x16xf32, #tpu.memory_space<vmem>>, vector<1x16x16xf32>,
    %c2_i32 = arith.constant 2 : i32
    %28 = arith.index_cast %c2_i32 : i32 to index
    %c0_18 = arith.constant 0 : index
    %c0_19 = arith.constant 0 : index
    %29 = vector.load %arg3[%28, %c0_18, %c0_19] : memref<5x12x12xf32, #tpu.memory_space<vmem>>, vector<1x12x12xf32>
    %30 = vector.shape_cast %29 : vector<1x12x12xf32> to vector<12x12xf32>
    %cst_20 = arith.constant dense<0.000000e+00> : vector<16x12xf32>
    %31 = tpu.matmul %0, %30, %cst_20 {dimension_numbers = #tpu.dot_dimension_numbers<[1], [0], [0], [1], [0, 0, 1, 1], [], []>} : vector<16x12xf32>, vector<12x12xf32>, vector<16x12xf32> -> vector<16x12xf32>
    %cst_21 = arith.constant dense<0.000000e+00> : vector<16x16xf32>
    %32 = tpu.matmul %31, %1, %cst_21 {dimension_numbers = #tpu.dot_dimension_numbers<[1], [0], [0], [1], [0, 0, 1, 1], [], []>} : vector<16x12xf32>, vector<12x16xf32>, vector<16x16xf32> -> vector<16x16xf32>
    %33 = arith.index_cast %c2_i32 : i32 to index
    %c0_22 = arith.constant 0 : index
    %c0_23 = arith.constant 0 : index
    %34 = vector.load %arg2[%33, %c0_22, %c0_23] : memref<5x16x16xf32, #tpu.memory_space<vmem>>, vector<1x16x16xf32>
    %35 = vector.shape_cast %34 : vector<1x16x16xf32> to vector<16x16xf32>
    %36 = arith.addf %35, %32 : vector<16x16xf32>
    %37 = arith.index_cast %c2_i32 : i32 to index
    %c0_24 = arith.constant 0 : index
    %c0_25 = arith.constant 0 : index
    %38 = vector.load %arg6[%37, %c0_24, %c0_25] : memref<5x16x16xf32, #tpu.memory_space<vmem>>, vector<1x16x16xf32>
    %39 = vector.shape_cast %38 : vector<1x16x16xf32> to vector<16x16xf32>
    %40 = vector.shape_cast %36 : vector<16x16xf32> to vector<1x16x16xf32>
    tpu.vector_store %arg6[%37, %c0_24, %c0_25], %40 {strides = array<i32>} : memref<5x16x16xf32, #tpu.memory_space<vmem>>, vector<1x16x16xf32>,
    %c3_i32 = arith.constant 3 : i32
    %41 = arith.index_cast %c3_i32 : i32 to index
    %c0_26 = arith.constant 0 : index
    %c0_27 = arith.constant 0 : index
    %42 = vector.load %arg3[%41, %c0_26, %c0_27] : memref<5x12x12xf32, #tpu.memory_space<vmem>>, vector<1x12x12xf32>
    %43 = vector.shape_cast %42 : vector<1x12x12xf32> to vector<12x12xf32>
    %cst_28 = arith.constant dense<0.000000e+00> : vector<16x12xf32>
    %44 = tpu.matmul %0, %43, %cst_28 {dimension_numbers = #tpu.dot_dimension_numbers<[1], [0], [0], [1], [0, 0, 1, 1], [], []>} : vector<16x12xf32>, vector<12x12xf32>, vector<16x12xf32> -> vector<16x12xf32>
    %cst_29 = arith.constant dense<0.000000e+00> : vector<16x16xf32>
    %45 = tpu.matmul %44, %1, %cst_29 {dimension_numbers = #tpu.dot_dimension_numbers<[1], [0], [0], [1], [0, 0, 1, 1], [], []>} : vector<16x12xf32>, vector<12x16xf32>, vector<16x16xf32> -> vector<16x16xf32>
    %46 = arith.index_cast %c3_i32 : i32 to index
    %c0_30 = arith.constant 0 : index
    %c0_31 = arith.constant 0 : index
    %47 = vector.load %arg2[%46, %c0_30, %c0_31] : memref<5x16x16xf32, #tpu.memory_space<vmem>>, vector<1x16x16xf32>
    %48 = vector.shape_cast %47 : vector<1x16x16xf32> to vector<16x16xf32>
    %49 = arith.addf %48, %45 : vector<16x16xf32>
    %50 = arith.index_cast %c3_i32 : i32 to index
    %c0_32 = arith.constant 0 : index
    %c0_33 = arith.constant 0 : index
    %51 = vector.load %arg6[%50, %c0_32, %c0_33] : memref<5x16x16xf32, #tpu.memory_space<vmem>>, vector<1x16x16xf32>
    %52 = vector.shape_cast %51 : vector<1x16x16xf32> to vector<16x16xf32>
    %53 = vector.shape_cast %49 : vector<16x16xf32> to vector<1x16x16xf32>
    tpu.vector_store %arg6[%50, %c0_32, %c0_33], %53 {strides = array<i32>} : memref<5x16x16xf32, #tpu.memory_space<vmem>>, vector<1x16x16xf32>,
    %c4_i32 = arith.constant 4 : i32
    %54 = arith.index_cast %c4_i32 : i32 to index
    %c0_34 = arith.constant 0 : index
    %c0_35 = arith.constant 0 : index
    %55 = vector.load %arg3[%54, %c0_34, %c0_35] : memref<5x12x12xf32, #tpu.memory_space<vmem>>, vector<1x12x12xf32>
    %56 = vector.shape_cast %55 : vector<1x12x12xf32> to vector<12x12xf32>
    %cst_36 = arith.constant dense<0.000000e+00> : vector<16x12xf32>
    %57 = tpu.matmul %0, %56, %cst_36 {dimension_numbers = #tpu.dot_dimension_numbers<[1], [0], [0], [1], [0, 0, 1, 1], [], []>} : vector<16x12xf32>, vector<12x12xf32>, vector<16x12xf32> -> vector<16x12xf32>
    %cst_37 = arith.constant dense<0.000000e+00> : vector<16x16xf32>
    %58 = tpu.matmul %57, %1, %cst_37 {dimension_numbers = #tpu.dot_dimension_numbers<[1], [0], [0], [1], [0, 0, 1, 1], [], []>} : vector<16x12xf32>, vector<12x16xf32>, vector<16x16xf32> -> vector<16x16xf32>
    %59 = arith.index_cast %c4_i32 : i32 to index
    %c0_38 = arith.constant 0 : index
    %c0_39 = arith.constant 0 : index
    %60 = vector.load %arg2[%59, %c0_38, %c0_39] : memref<5x16x16xf32, #tpu.memory_space<vmem>>, vector<1x16x16xf32>
    %61 = vector.shape_cast %60 : vector<1x16x16xf32> to vector<16x16xf32>
    %62 = arith.addf %61, %58 : vector<16x16xf32>
    %63 = arith.index_cast %c4_i32 : i32 to index
    %c0_40 = arith.constant 0 : index
    %c0_41 = arith.constant 0 : index
    %64 = vector.load %arg6[%63, %c0_40, %c0_41] : memref<5x16x16xf32, #tpu.memory_space<vmem>>, vector<1x16x16xf32>
    %65 = vector.shape_cast %64 : vector<1x16x16xf32> to vector<16x16xf32>
    %66 = vector.shape_cast %62 : vector<16x16xf32> to vector<1x16x16xf32>
    tpu.vector_store %arg6[%63, %c0_40, %c0_41], %66 {strides = array<i32>} : memref<5x16x16xf32, #tpu.memory_space<vmem>>, vector<1x16x16xf32>,
    %c5_i32 = arith.constant 5 : i32
    return
  }
  func.func @transform_0(%arg0: i32, %arg1: i32) -> (i32, i32, i32) {
    %c0_i32 = arith.constant 0 : i32
    %c0_i32_0 = arith.constant 0 : i32
    return %arg0, %arg1, %c0_i32 : i32, i32, i32
  }
  func.func @transform_1(%arg0: i32, %arg1: i32) -> (i32, i32, i32) {
    %c0_i32 = arith.constant 0 : i32
    %c0_i32_0 = arith.constant 0 : i32
    %c0_i32_1 = arith.constant 0 : i32
    return %arg0, %c0_i32, %c0_i32_0 : i32, i32, i32
  }
  func.func @transform_2(%arg0: i32, %arg1: i32) -> (i32, i32) {
    %c0_i32 = arith.constant 0 : i32
    %c0_i32_0 = arith.constant 0 : i32
    return %arg1, %c0_i32 : i32, i32
  }
  func.func @transform_3(%arg0: i32, %arg1: i32) -> (i32, i32) {
    %c0_i32 = arith.constant 0 : i32
    %c0_i32_0 = arith.constant 0 : i32
    %c0_i32_1 = arith.constant 0 : i32
    return %c0_i32, %c0_i32_0 : i32, i32
  }
  func.func @transform_4(%arg0: i32, %arg1: i32) -> (i32, i32, i32) {
    %c0_i32 = arith.constant 0 : i32
    %c0_i32_0 = arith.constant 0 : i32
    return %arg0, %arg1, %c0_i32 : i32, i32, i32
  }
}

module attributes {stable_mosaic.version = 11 : i64} {
  func.func @_resize_conv_kernel(%arg0: i32, %arg1: i32, %arg2: memref<1x4x16x16xf32, #tpu.memory_space<vmem>>, %arg3: memref<12x16xf32, #tpu.memory_space<vmem>>, %arg4: memref<16x12xf32, #tpu.memory_space<vmem>>, %arg5: memref<5x4xf32, #tpu.memory_space<smem>>, %arg6: memref<5xf32, #tpu.memory_space<smem>>, %arg7: memref<1x5x12x12xf32, #tpu.memory_space<vmem>>) attributes {dimension_semantics = [#tpu.dimension_semantics<parallel>, #tpu.dimension_semantics<parallel>], iteration_bounds = array<i64: 2, 1>, scalar_prefetch = 0 : i64, scratch_operands = 0 : i64, tpu.core_type = #tpu.core_type<tc>, window_params = [{transform_indices = @transform_0, window_bounds = array<i64: 1, 4, 16, 16>}, {transform_indices = @transform_1, window_bounds = array<i64: 12, 16>}, {pipeline_mode = #tpu.pipeline_mode<synchronous>, transform_indices = @transform_2, window_bounds = array<i64: 16, 12>}, {transform_indices = @transform_3, window_bounds = array<i64: 5, 4>}, {transform_indices = @transform_4, window_bounds = array<i64: 5>}, {transform_indices = @transform_5, window_bounds = array<i64: 1, 5, 12, 12>}]} {
    %c0 = arith.constant 0 : index
    %c0_0 = arith.constant 0 : index
    %0 = vector.load %arg3[%c0, %c0_0] : memref<12x16xf32, #tpu.memory_space<vmem>>, vector<12x16xf32>
    %c0_1 = arith.constant 0 : index
    %c0_2 = arith.constant 0 : index
    %1 = vector.load %arg4[%c0_1, %c0_2] : memref<16x12xf32, #tpu.memory_space<vmem>>, vector<16x12xf32>
    %c0_3 = arith.constant 0 : index
    %c0_4 = arith.constant 0 : index
    %c0_5 = arith.constant 0 : index
    %c0_6 = arith.constant 0 : index
    %2 = vector.load %arg2[%c0_3, %c0_4, %c0_5, %c0_6] : memref<1x4x16x16xf32, #tpu.memory_space<vmem>>, vector<1x1x16x16xf32>
    %3 = vector.shape_cast %2 : vector<1x1x16x16xf32> to vector<16x16xf32>
    %cst = arith.constant dense<0.000000e+00> : vector<12x16xf32>
    %4 = tpu.matmul %0, %3, %cst {dimension_numbers = #tpu.dot_dimension_numbers<[1], [0], [0], [1], [0, 0, 1, 1], [], []>} : vector<12x16xf32>, vector<16x16xf32>, vector<12x16xf32> -> vector<12x16xf32>
    %cst_7 = arith.constant dense<0.000000e+00> : vector<12x12xf32>
    %5 = tpu.matmul %4, %1, %cst_7 {dimension_numbers = #tpu.dot_dimension_numbers<[1], [0], [0], [1], [0, 0, 1, 1], [], []>} : vector<12x16xf32>, vector<16x12xf32>, vector<12x12xf32> -> vector<12x12xf32>
    %c0_8 = arith.constant 0 : index
    %c1 = arith.constant 1 : index
    %c0_9 = arith.constant 0 : index
    %c0_10 = arith.constant 0 : index
    %6 = vector.load %arg2[%c0_8, %c1, %c0_9, %c0_10] : memref<1x4x16x16xf32, #tpu.memory_space<vmem>>, vector<1x1x16x16xf32>
    %7 = vector.shape_cast %6 : vector<1x1x16x16xf32> to vector<16x16xf32>
    %cst_11 = arith.constant dense<0.000000e+00> : vector<12x16xf32>
    %8 = tpu.matmul %0, %7, %cst_11 {dimension_numbers = #tpu.dot_dimension_numbers<[1], [0], [0], [1], [0, 0, 1, 1], [], []>} : vector<12x16xf32>, vector<16x16xf32>, vector<12x16xf32> -> vector<12x16xf32>
    %cst_12 = arith.constant dense<0.000000e+00> : vector<12x12xf32>
    %9 = tpu.matmul %8, %1, %cst_12 {dimension_numbers = #tpu.dot_dimension_numbers<[1], [0], [0], [1], [0, 0, 1, 1], [], []>} : vector<12x16xf32>, vector<16x12xf32>, vector<12x12xf32> -> vector<12x12xf32>
    %c0_13 = arith.constant 0 : index
    %c2 = arith.constant 2 : index
    %c0_14 = arith.constant 0 : index
    %c0_15 = arith.constant 0 : index
    %10 = vector.load %arg2[%c0_13, %c2, %c0_14, %c0_15] : memref<1x4x16x16xf32, #tpu.memory_space<vmem>>, vector<1x1x16x16xf32>
    %11 = vector.shape_cast %10 : vector<1x1x16x16xf32> to vector<16x16xf32>
    %cst_16 = arith.constant dense<0.000000e+00> : vector<12x16xf32>
    %12 = tpu.matmul %0, %11, %cst_16 {dimension_numbers = #tpu.dot_dimension_numbers<[1], [0], [0], [1], [0, 0, 1, 1], [], []>} : vector<12x16xf32>, vector<16x16xf32>, vector<12x16xf32> -> vector<12x16xf32>
    %cst_17 = arith.constant dense<0.000000e+00> : vector<12x12xf32>
    %13 = tpu.matmul %12, %1, %cst_17 {dimension_numbers = #tpu.dot_dimension_numbers<[1], [0], [0], [1], [0, 0, 1, 1], [], []>} : vector<12x16xf32>, vector<16x12xf32>, vector<12x12xf32> -> vector<12x12xf32>
    %c0_18 = arith.constant 0 : index
    %c3 = arith.constant 3 : index
    %c0_19 = arith.constant 0 : index
    %c0_20 = arith.constant 0 : index
    %14 = vector.load %arg2[%c0_18, %c3, %c0_19, %c0_20] : memref<1x4x16x16xf32, #tpu.memory_space<vmem>>, vector<1x1x16x16xf32>
    %15 = vector.shape_cast %14 : vector<1x1x16x16xf32> to vector<16x16xf32>
    %cst_21 = arith.constant dense<0.000000e+00> : vector<12x16xf32>
    %16 = tpu.matmul %0, %15, %cst_21 {dimension_numbers = #tpu.dot_dimension_numbers<[1], [0], [0], [1], [0, 0, 1, 1], [], []>} : vector<12x16xf32>, vector<16x16xf32>, vector<12x16xf32> -> vector<12x16xf32>
    %cst_22 = arith.constant dense<0.000000e+00> : vector<12x12xf32>
    %17 = tpu.matmul %16, %1, %cst_22 {dimension_numbers = #tpu.dot_dimension_numbers<[1], [0], [0], [1], [0, 0, 1, 1], [], []>} : vector<12x16xf32>, vector<16x12xf32>, vector<12x12xf32> -> vector<12x12xf32>
    %c0_23 = arith.constant 0 : index
    %c0_24 = arith.constant 0 : index
    %18 = memref.load %arg5[%c0_23, %c0_24] : memref<5x4xf32, #tpu.memory_space<smem>>
    %19 = vector.broadcast %18 : f32 to vector<12x12xf32>
    %20 = arith.mulf %5, %19 : vector<12x12xf32>
    %c0_25 = arith.constant 0 : index
    %21 = memref.load %arg6[%c0_25] : memref<5xf32, #tpu.memory_space<smem>>
    %22 = vector.broadcast %21 : f32 to vector<12x12xf32>
    %23 = arith.addf %20, %22 : vector<12x12xf32>
    %c0_26 = arith.constant 0 : index
    %c1_27 = arith.constant 1 : index
    %24 = memref.load %arg5[%c0_26, %c1_27] : memref<5x4xf32, #tpu.memory_space<smem>>
    %25 = vector.broadcast %24 : f32 to vector<12x12xf32>
    %26 = arith.mulf %9, %25 : vector<12x12xf32>
    %27 = arith.addf %23, %26 : vector<12x12xf32>
    %c0_28 = arith.constant 0 : index
    %c2_29 = arith.constant 2 : index
    %28 = memref.load %arg5[%c0_28, %c2_29] : memref<5x4xf32, #tpu.memory_space<smem>>
    %29 = vector.broadcast %28 : f32 to vector<12x12xf32>
    %30 = arith.mulf %13, %29 : vector<12x12xf32>
    %31 = arith.addf %27, %30 : vector<12x12xf32>
    %c0_30 = arith.constant 0 : index
    %c3_31 = arith.constant 3 : index
    %32 = memref.load %arg5[%c0_30, %c3_31] : memref<5x4xf32, #tpu.memory_space<smem>>
    %33 = vector.broadcast %32 : f32 to vector<12x12xf32>
    %34 = arith.mulf %17, %33 : vector<12x12xf32>
    %35 = arith.addf %31, %34 : vector<12x12xf32>
    %c0_32 = arith.constant 0 : index
    %c0_33 = arith.constant 0 : index
    %c0_34 = arith.constant 0 : index
    %c0_35 = arith.constant 0 : index
    %36 = vector.load %arg7[%c0_32, %c0_33, %c0_34, %c0_35] : memref<1x5x12x12xf32, #tpu.memory_space<vmem>>, vector<1x1x12x12xf32>
    %37 = vector.shape_cast %36 : vector<1x1x12x12xf32> to vector<12x12xf32>
    %38 = vector.shape_cast %35 : vector<12x12xf32> to vector<1x1x12x12xf32>
    tpu.vector_store %arg7[%c0_32, %c0_33, %c0_34, %c0_35], %38 {strides = array<i32>} : memref<1x5x12x12xf32, #tpu.memory_space<vmem>>, vector<1x1x12x12xf32>,
    %c1_36 = arith.constant 1 : index
    %c0_37 = arith.constant 0 : index
    %39 = memref.load %arg5[%c1_36, %c0_37] : memref<5x4xf32, #tpu.memory_space<smem>>
    %40 = vector.broadcast %39 : f32 to vector<12x12xf32>
    %41 = arith.mulf %5, %40 : vector<12x12xf32>
    %c1_38 = arith.constant 1 : index
    %42 = memref.load %arg6[%c1_38] : memref<5xf32, #tpu.memory_space<smem>>
    %43 = vector.broadcast %42 : f32 to vector<12x12xf32>
    %44 = arith.addf %41, %43 : vector<12x12xf32>
    %c1_39 = arith.constant 1 : index
    %c1_40 = arith.constant 1 : index
    %45 = memref.load %arg5[%c1_39, %c1_40] : memref<5x4xf32, #tpu.memory_space<smem>>
    %46 = vector.broadcast %45 : f32 to vector<12x12xf32>
    %47 = arith.mulf %9, %46 : vector<12x12xf32>
    %48 = arith.addf %44, %47 : vector<12x12xf32>
    %c1_41 = arith.constant 1 : index
    %c2_42 = arith.constant 2 : index
    %49 = memref.load %arg5[%c1_41, %c2_42] : memref<5x4xf32, #tpu.memory_space<smem>>
    %50 = vector.broadcast %49 : f32 to vector<12x12xf32>
    %51 = arith.mulf %13, %50 : vector<12x12xf32>
    %52 = arith.addf %48, %51 : vector<12x12xf32>
    %c1_43 = arith.constant 1 : index
    %c3_44 = arith.constant 3 : index
    %53 = memref.load %arg5[%c1_43, %c3_44] : memref<5x4xf32, #tpu.memory_space<smem>>
    %54 = vector.broadcast %53 : f32 to vector<12x12xf32>
    %55 = arith.mulf %17, %54 : vector<12x12xf32>
    %56 = arith.addf %52, %55 : vector<12x12xf32>
    %c0_45 = arith.constant 0 : index
    %c1_46 = arith.constant 1 : index
    %c0_47 = arith.constant 0 : index
    %c0_48 = arith.constant 0 : index
    %57 = vector.load %arg7[%c0_45, %c1_46, %c0_47, %c0_48] : memref<1x5x12x12xf32, #tpu.memory_space<vmem>>, vector<1x1x12x12xf32>
    %58 = vector.shape_cast %57 : vector<1x1x12x12xf32> to vector<12x12xf32>
    %59 = vector.shape_cast %56 : vector<12x12xf32> to vector<1x1x12x12xf32>
    tpu.vector_store %arg7[%c0_45, %c1_46, %c0_47, %c0_48], %59 {strides = array<i32>} : memref<1x5x12x12xf32, #tpu.memory_space<vmem>>, vector<1x1x12x12xf32>,
    %c2_49 = arith.constant 2 : index
    %c0_50 = arith.constant 0 : index
    %60 = memref.load %arg5[%c2_49, %c0_50] : memref<5x4xf32, #tpu.memory_space<smem>>
    %61 = vector.broadcast %60 : f32 to vector<12x12xf32>
    %62 = arith.mulf %5, %61 : vector<12x12xf32>
    %c2_51 = arith.constant 2 : index
    %63 = memref.load %arg6[%c2_51] : memref<5xf32, #tpu.memory_space<smem>>
    %64 = vector.broadcast %63 : f32 to vector<12x12xf32>
    %65 = arith.addf %62, %64 : vector<12x12xf32>
    %c2_52 = arith.constant 2 : index
    %c1_53 = arith.constant 1 : index
    %66 = memref.load %arg5[%c2_52, %c1_53] : memref<5x4xf32, #tpu.memory_space<smem>>
    %67 = vector.broadcast %66 : f32 to vector<12x12xf32>
    %68 = arith.mulf %9, %67 : vector<12x12xf32>
    %69 = arith.addf %65, %68 : vector<12x12xf32>
    %c2_54 = arith.constant 2 : index
    %c2_55 = arith.constant 2 : index
    %70 = memref.load %arg5[%c2_54, %c2_55] : memref<5x4xf32, #tpu.memory_space<smem>>
    %71 = vector.broadcast %70 : f32 to vector<12x12xf32>
    %72 = arith.mulf %13, %71 : vector<12x12xf32>
    %73 = arith.addf %69, %72 : vector<12x12xf32>
    %c2_56 = arith.constant 2 : index
    %c3_57 = arith.constant 3 : index
    %74 = memref.load %arg5[%c2_56, %c3_57] : memref<5x4xf32, #tpu.memory_space<smem>>
    %75 = vector.broadcast %74 : f32 to vector<12x12xf32>
    %76 = arith.mulf %17, %75 : vector<12x12xf32>
    %77 = arith.addf %73, %76 : vector<12x12xf32>
    %c0_58 = arith.constant 0 : index
    %c2_59 = arith.constant 2 : index
    %c0_60 = arith.constant 0 : index
    %c0_61 = arith.constant 0 : index
    %78 = vector.load %arg7[%c0_58, %c2_59, %c0_60, %c0_61] : memref<1x5x12x12xf32, #tpu.memory_space<vmem>>, vector<1x1x12x12xf32>
    %79 = vector.shape_cast %78 : vector<1x1x12x12xf32> to vector<12x12xf32>
    %80 = vector.shape_cast %77 : vector<12x12xf32> to vector<1x1x12x12xf32>
    tpu.vector_store %arg7[%c0_58, %c2_59, %c0_60, %c0_61], %80 {strides = array<i32>} : memref<1x5x12x12xf32, #tpu.memory_space<vmem>>, vector<1x1x12x12xf32>,
    %c3_62 = arith.constant 3 : index
    %c0_63 = arith.constant 0 : index
    %81 = memref.load %arg5[%c3_62, %c0_63] : memref<5x4xf32, #tpu.memory_space<smem>>
    %82 = vector.broadcast %81 : f32 to vector<12x12xf32>
    %83 = arith.mulf %5, %82 : vector<12x12xf32>
    %c3_64 = arith.constant 3 : index
    %84 = memref.load %arg6[%c3_64] : memref<5xf32, #tpu.memory_space<smem>>
    %85 = vector.broadcast %84 : f32 to vector<12x12xf32>
    %86 = arith.addf %83, %85 : vector<12x12xf32>
    %c3_65 = arith.constant 3 : index
    %c1_66 = arith.constant 1 : index
    %87 = memref.load %arg5[%c3_65, %c1_66] : memref<5x4xf32, #tpu.memory_space<smem>>
    %88 = vector.broadcast %87 : f32 to vector<12x12xf32>
    %89 = arith.mulf %9, %88 : vector<12x12xf32>
    %90 = arith.addf %86, %89 : vector<12x12xf32>
    %c3_67 = arith.constant 3 : index
    %c2_68 = arith.constant 2 : index
    %91 = memref.load %arg5[%c3_67, %c2_68] : memref<5x4xf32, #tpu.memory_space<smem>>
    %92 = vector.broadcast %91 : f32 to vector<12x12xf32>
    %93 = arith.mulf %13, %92 : vector<12x12xf32>
    %94 = arith.addf %90, %93 : vector<12x12xf32>
    %c3_69 = arith.constant 3 : index
    %c3_70 = arith.constant 3 : index
    %95 = memref.load %arg5[%c3_69, %c3_70] : memref<5x4xf32, #tpu.memory_space<smem>>
    %96 = vector.broadcast %95 : f32 to vector<12x12xf32>
    %97 = arith.mulf %17, %96 : vector<12x12xf32>
    %98 = arith.addf %94, %97 : vector<12x12xf32>
    %c0_71 = arith.constant 0 : index
    %c3_72 = arith.constant 3 : index
    %c0_73 = arith.constant 0 : index
    %c0_74 = arith.constant 0 : index
    %99 = vector.load %arg7[%c0_71, %c3_72, %c0_73, %c0_74] : memref<1x5x12x12xf32, #tpu.memory_space<vmem>>, vector<1x1x12x12xf32>
    %100 = vector.shape_cast %99 : vector<1x1x12x12xf32> to vector<12x12xf32>
    %101 = vector.shape_cast %98 : vector<12x12xf32> to vector<1x1x12x12xf32>
    tpu.vector_store %arg7[%c0_71, %c3_72, %c0_73, %c0_74], %101 {strides = array<i32>} : memref<1x5x12x12xf32, #tpu.memory_space<vmem>>, vector<1x1x12x12xf32>,
    %c4 = arith.constant 4 : index
    %c0_75 = arith.constant 0 : index
    %102 = memref.load %arg5[%c4, %c0_75] : memref<5x4xf32, #tpu.memory_space<smem>>
    %103 = vector.broadcast %102 : f32 to vector<12x12xf32>
    %104 = arith.mulf %5, %103 : vector<12x12xf32>
    %c4_76 = arith.constant 4 : index
    %105 = memref.load %arg6[%c4_76] : memref<5xf32, #tpu.memory_space<smem>>
    %106 = vector.broadcast %105 : f32 to vector<12x12xf32>
    %107 = arith.addf %104, %106 : vector<12x12xf32>
    %c4_77 = arith.constant 4 : index
    %c1_78 = arith.constant 1 : index
    %108 = memref.load %arg5[%c4_77, %c1_78] : memref<5x4xf32, #tpu.memory_space<smem>>
    %109 = vector.broadcast %108 : f32 to vector<12x12xf32>
    %110 = arith.mulf %9, %109 : vector<12x12xf32>
    %111 = arith.addf %107, %110 : vector<12x12xf32>
    %c4_79 = arith.constant 4 : index
    %c2_80 = arith.constant 2 : index
    %112 = memref.load %arg5[%c4_79, %c2_80] : memref<5x4xf32, #tpu.memory_space<smem>>
    %113 = vector.broadcast %112 : f32 to vector<12x12xf32>
    %114 = arith.mulf %13, %113 : vector<12x12xf32>
    %115 = arith.addf %111, %114 : vector<12x12xf32>
    %c4_81 = arith.constant 4 : index
    %c3_82 = arith.constant 3 : index
    %116 = memref.load %arg5[%c4_81, %c3_82] : memref<5x4xf32, #tpu.memory_space<smem>>
    %117 = vector.broadcast %116 : f32 to vector<12x12xf32>
    %118 = arith.mulf %17, %117 : vector<12x12xf32>
    %119 = arith.addf %115, %118 : vector<12x12xf32>
    %c0_83 = arith.constant 0 : index
    %c4_84 = arith.constant 4 : index
    %c0_85 = arith.constant 0 : index
    %c0_86 = arith.constant 0 : index
    %120 = vector.load %arg7[%c0_83, %c4_84, %c0_85, %c0_86] : memref<1x5x12x12xf32, #tpu.memory_space<vmem>>, vector<1x1x12x12xf32>
    %121 = vector.shape_cast %120 : vector<1x1x12x12xf32> to vector<12x12xf32>
    %122 = vector.shape_cast %119 : vector<12x12xf32> to vector<1x1x12x12xf32>
    tpu.vector_store %arg7[%c0_83, %c4_84, %c0_85, %c0_86], %122 {strides = array<i32>} : memref<1x5x12x12xf32, #tpu.memory_space<vmem>>, vector<1x1x12x12xf32>,
    return
  }
  func.func @transform_0(%arg0: i32, %arg1: i32) -> (i32, i32, i32, i32) {
    %c0_i32 = arith.constant 0 : i32
    %c0_i32_0 = arith.constant 0 : i32
    %c0_i32_1 = arith.constant 0 : i32
    %c0_i32_2 = arith.constant 0 : i32
    return %arg0, %c0_i32, %c0_i32_0, %c0_i32_1 : i32, i32, i32, i32
  }
  func.func @transform_1(%arg0: i32, %arg1: i32) -> (i32, i32) {
    %c0_i32 = arith.constant 0 : i32
    %c0_i32_0 = arith.constant 0 : i32
    return %arg1, %c0_i32 : i32, i32
  }
  func.func @transform_2(%arg0: i32, %arg1: i32) -> (i32, i32) {
    %c0_i32 = arith.constant 0 : i32
    %c0_i32_0 = arith.constant 0 : i32
    %c0_i32_1 = arith.constant 0 : i32
    return %c0_i32, %c0_i32_0 : i32, i32
  }
  func.func @transform_3(%arg0: i32, %arg1: i32) -> (i32, i32) {
    %c0_i32 = arith.constant 0 : i32
    %c0_i32_0 = arith.constant 0 : i32
    %c0_i32_1 = arith.constant 0 : i32
    return %c0_i32, %c0_i32_0 : i32, i32
  }
  func.func @transform_4(%arg0: i32, %arg1: i32) -> i32 {
    %c0_i32 = arith.constant 0 : i32
    %c0_i32_0 = arith.constant 0 : i32
    return %c0_i32 : i32
  }
  func.func @transform_5(%arg0: i32, %arg1: i32) -> (i32, i32, i32, i32) {
    %c0_i32 = arith.constant 0 : i32
    %c0_i32_0 = arith.constant 0 : i32
    %c0_i32_1 = arith.constant 0 : i32
    return %arg0, %c0_i32, %arg1, %c0_i32_0 : i32, i32, i32, i32
  }
}

module attributes {stable_mosaic.version = 11 : i64} {
  func.func @_resize_conv_kernel(%arg0: i32, %arg1: i32, %arg2: memref<1x4x16x16xf32, #tpu.memory_space<vmem>>, %arg3: memref<20x16xf32, #tpu.memory_space<vmem>>, %arg4: memref<16x20xf32, #tpu.memory_space<vmem>>, %arg5: memref<5x4xf32, #tpu.memory_space<smem>>, %arg6: memref<5xf32, #tpu.memory_space<smem>>, %arg7: memref<1x5x20x20xf32, #tpu.memory_space<vmem>>) attributes {dimension_semantics = [#tpu.dimension_semantics<parallel>, #tpu.dimension_semantics<parallel>], iteration_bounds = array<i64: 2, 1>, scalar_prefetch = 0 : i64, scratch_operands = 0 : i64, tpu.core_type = #tpu.core_type<tc>, window_params = [{transform_indices = @transform_0, window_bounds = array<i64: 1, 4, 16, 16>}, {transform_indices = @transform_1, window_bounds = array<i64: 20, 16>}, {pipeline_mode = #tpu.pipeline_mode<synchronous>, transform_indices = @transform_2, window_bounds = array<i64: 16, 20>}, {transform_indices = @transform_3, window_bounds = array<i64: 5, 4>}, {transform_indices = @transform_4, window_bounds = array<i64: 5>}, {transform_indices = @transform_5, window_bounds = array<i64: 1, 5, 20, 20>}]} {
    %c0 = arith.constant 0 : index
    %c0_0 = arith.constant 0 : index
    %0 = vector.load %arg3[%c0, %c0_0] : memref<20x16xf32, #tpu.memory_space<vmem>>, vector<20x16xf32>
    %c0_1 = arith.constant 0 : index
    %c0_2 = arith.constant 0 : index
    %1 = vector.load %arg4[%c0_1, %c0_2] : memref<16x20xf32, #tpu.memory_space<vmem>>, vector<16x20xf32>
    %c0_3 = arith.constant 0 : index
    %c0_4 = arith.constant 0 : index
    %c0_5 = arith.constant 0 : index
    %c0_6 = arith.constant 0 : index
    %2 = vector.load %arg2[%c0_3, %c0_4, %c0_5, %c0_6] : memref<1x4x16x16xf32, #tpu.memory_space<vmem>>, vector<1x1x16x16xf32>
    %3 = vector.shape_cast %2 : vector<1x1x16x16xf32> to vector<16x16xf32>
    %cst = arith.constant dense<0.000000e+00> : vector<20x16xf32>
    %4 = tpu.matmul %0, %3, %cst {dimension_numbers = #tpu.dot_dimension_numbers<[1], [0], [0], [1], [0, 0, 1, 1], [], []>} : vector<20x16xf32>, vector<16x16xf32>, vector<20x16xf32> -> vector<20x16xf32>
    %cst_7 = arith.constant dense<0.000000e+00> : vector<20x20xf32>
    %5 = tpu.matmul %4, %1, %cst_7 {dimension_numbers = #tpu.dot_dimension_numbers<[1], [0], [0], [1], [0, 0, 1, 1], [], []>} : vector<20x16xf32>, vector<16x20xf32>, vector<20x20xf32> -> vector<20x20xf32>
    %c0_8 = arith.constant 0 : index
    %c1 = arith.constant 1 : index
    %c0_9 = arith.constant 0 : index
    %c0_10 = arith.constant 0 : index
    %6 = vector.load %arg2[%c0_8, %c1, %c0_9, %c0_10] : memref<1x4x16x16xf32, #tpu.memory_space<vmem>>, vector<1x1x16x16xf32>
    %7 = vector.shape_cast %6 : vector<1x1x16x16xf32> to vector<16x16xf32>
    %cst_11 = arith.constant dense<0.000000e+00> : vector<20x16xf32>
    %8 = tpu.matmul %0, %7, %cst_11 {dimension_numbers = #tpu.dot_dimension_numbers<[1], [0], [0], [1], [0, 0, 1, 1], [], []>} : vector<20x16xf32>, vector<16x16xf32>, vector<20x16xf32> -> vector<20x16xf32>
    %cst_12 = arith.constant dense<0.000000e+00> : vector<20x20xf32>
    %9 = tpu.matmul %8, %1, %cst_12 {dimension_numbers = #tpu.dot_dimension_numbers<[1], [0], [0], [1], [0, 0, 1, 1], [], []>} : vector<20x16xf32>, vector<16x20xf32>, vector<20x20xf32> -> vector<20x20xf32>
    %c0_13 = arith.constant 0 : index
    %c2 = arith.constant 2 : index
    %c0_14 = arith.constant 0 : index
    %c0_15 = arith.constant 0 : index
    %10 = vector.load %arg2[%c0_13, %c2, %c0_14, %c0_15] : memref<1x4x16x16xf32, #tpu.memory_space<vmem>>, vector<1x1x16x16xf32>
    %11 = vector.shape_cast %10 : vector<1x1x16x16xf32> to vector<16x16xf32>
    %cst_16 = arith.constant dense<0.000000e+00> : vector<20x16xf32>
    %12 = tpu.matmul %0, %11, %cst_16 {dimension_numbers = #tpu.dot_dimension_numbers<[1], [0], [0], [1], [0, 0, 1, 1], [], []>} : vector<20x16xf32>, vector<16x16xf32>, vector<20x16xf32> -> vector<20x16xf32>
    %cst_17 = arith.constant dense<0.000000e+00> : vector<20x20xf32>
    %13 = tpu.matmul %12, %1, %cst_17 {dimension_numbers = #tpu.dot_dimension_numbers<[1], [0], [0], [1], [0, 0, 1, 1], [], []>} : vector<20x16xf32>, vector<16x20xf32>, vector<20x20xf32> -> vector<20x20xf32>
    %c0_18 = arith.constant 0 : index
    %c3 = arith.constant 3 : index
    %c0_19 = arith.constant 0 : index
    %c0_20 = arith.constant 0 : index
    %14 = vector.load %arg2[%c0_18, %c3, %c0_19, %c0_20] : memref<1x4x16x16xf32, #tpu.memory_space<vmem>>, vector<1x1x16x16xf32>
    %15 = vector.shape_cast %14 : vector<1x1x16x16xf32> to vector<16x16xf32>
    %cst_21 = arith.constant dense<0.000000e+00> : vector<20x16xf32>
    %16 = tpu.matmul %0, %15, %cst_21 {dimension_numbers = #tpu.dot_dimension_numbers<[1], [0], [0], [1], [0, 0, 1, 1], [], []>} : vector<20x16xf32>, vector<16x16xf32>, vector<20x16xf32> -> vector<20x16xf32>
    %cst_22 = arith.constant dense<0.000000e+00> : vector<20x20xf32>
    %17 = tpu.matmul %16, %1, %cst_22 {dimension_numbers = #tpu.dot_dimension_numbers<[1], [0], [0], [1], [0, 0, 1, 1], [], []>} : vector<20x16xf32>, vector<16x20xf32>, vector<20x20xf32> -> vector<20x20xf32>
    %c0_23 = arith.constant 0 : index
    %c0_24 = arith.constant 0 : index
    %18 = memref.load %arg5[%c0_23, %c0_24] : memref<5x4xf32, #tpu.memory_space<smem>>
    %19 = vector.broadcast %18 : f32 to vector<20x20xf32>
    %20 = arith.mulf %5, %19 : vector<20x20xf32>
    %c0_25 = arith.constant 0 : index
    %21 = memref.load %arg6[%c0_25] : memref<5xf32, #tpu.memory_space<smem>>
    %22 = vector.broadcast %21 : f32 to vector<20x20xf32>
    %23 = arith.addf %20, %22 : vector<20x20xf32>
    %c0_26 = arith.constant 0 : index
    %c1_27 = arith.constant 1 : index
    %24 = memref.load %arg5[%c0_26, %c1_27] : memref<5x4xf32, #tpu.memory_space<smem>>
    %25 = vector.broadcast %24 : f32 to vector<20x20xf32>
    %26 = arith.mulf %9, %25 : vector<20x20xf32>
    %27 = arith.addf %23, %26 : vector<20x20xf32>
    %c0_28 = arith.constant 0 : index
    %c2_29 = arith.constant 2 : index
    %28 = memref.load %arg5[%c0_28, %c2_29] : memref<5x4xf32, #tpu.memory_space<smem>>
    %29 = vector.broadcast %28 : f32 to vector<20x20xf32>
    %30 = arith.mulf %13, %29 : vector<20x20xf32>
    %31 = arith.addf %27, %30 : vector<20x20xf32>
    %c0_30 = arith.constant 0 : index
    %c3_31 = arith.constant 3 : index
    %32 = memref.load %arg5[%c0_30, %c3_31] : memref<5x4xf32, #tpu.memory_space<smem>>
    %33 = vector.broadcast %32 : f32 to vector<20x20xf32>
    %34 = arith.mulf %17, %33 : vector<20x20xf32>
    %35 = arith.addf %31, %34 : vector<20x20xf32>
    %c0_32 = arith.constant 0 : index
    %c0_33 = arith.constant 0 : index
    %c0_34 = arith.constant 0 : index
    %c0_35 = arith.constant 0 : index
    %36 = vector.load %arg7[%c0_32, %c0_33, %c0_34, %c0_35] : memref<1x5x20x20xf32, #tpu.memory_space<vmem>>, vector<1x1x20x20xf32>
    %37 = vector.shape_cast %36 : vector<1x1x20x20xf32> to vector<20x20xf32>
    %38 = vector.shape_cast %35 : vector<20x20xf32> to vector<1x1x20x20xf32>
    tpu.vector_store %arg7[%c0_32, %c0_33, %c0_34, %c0_35], %38 {strides = array<i32>} : memref<1x5x20x20xf32, #tpu.memory_space<vmem>>, vector<1x1x20x20xf32>,
    %c1_36 = arith.constant 1 : index
    %c0_37 = arith.constant 0 : index
    %39 = memref.load %arg5[%c1_36, %c0_37] : memref<5x4xf32, #tpu.memory_space<smem>>
    %40 = vector.broadcast %39 : f32 to vector<20x20xf32>
    %41 = arith.mulf %5, %40 : vector<20x20xf32>
    %c1_38 = arith.constant 1 : index
    %42 = memref.load %arg6[%c1_38] : memref<5xf32, #tpu.memory_space<smem>>
    %43 = vector.broadcast %42 : f32 to vector<20x20xf32>
    %44 = arith.addf %41, %43 : vector<20x20xf32>
    %c1_39 = arith.constant 1 : index
    %c1_40 = arith.constant 1 : index
    %45 = memref.load %arg5[%c1_39, %c1_40] : memref<5x4xf32, #tpu.memory_space<smem>>
    %46 = vector.broadcast %45 : f32 to vector<20x20xf32>
    %47 = arith.mulf %9, %46 : vector<20x20xf32>
    %48 = arith.addf %44, %47 : vector<20x20xf32>
    %c1_41 = arith.constant 1 : index
    %c2_42 = arith.constant 2 : index
    %49 = memref.load %arg5[%c1_41, %c2_42] : memref<5x4xf32, #tpu.memory_space<smem>>
    %50 = vector.broadcast %49 : f32 to vector<20x20xf32>
    %51 = arith.mulf %13, %50 : vector<20x20xf32>
    %52 = arith.addf %48, %51 : vector<20x20xf32>
    %c1_43 = arith.constant 1 : index
    %c3_44 = arith.constant 3 : index
    %53 = memref.load %arg5[%c1_43, %c3_44] : memref<5x4xf32, #tpu.memory_space<smem>>
    %54 = vector.broadcast %53 : f32 to vector<20x20xf32>
    %55 = arith.mulf %17, %54 : vector<20x20xf32>
    %56 = arith.addf %52, %55 : vector<20x20xf32>
    %c0_45 = arith.constant 0 : index
    %c1_46 = arith.constant 1 : index
    %c0_47 = arith.constant 0 : index
    %c0_48 = arith.constant 0 : index
    %57 = vector.load %arg7[%c0_45, %c1_46, %c0_47, %c0_48] : memref<1x5x20x20xf32, #tpu.memory_space<vmem>>, vector<1x1x20x20xf32>
    %58 = vector.shape_cast %57 : vector<1x1x20x20xf32> to vector<20x20xf32>
    %59 = vector.shape_cast %56 : vector<20x20xf32> to vector<1x1x20x20xf32>
    tpu.vector_store %arg7[%c0_45, %c1_46, %c0_47, %c0_48], %59 {strides = array<i32>} : memref<1x5x20x20xf32, #tpu.memory_space<vmem>>, vector<1x1x20x20xf32>,
    %c2_49 = arith.constant 2 : index
    %c0_50 = arith.constant 0 : index
    %60 = memref.load %arg5[%c2_49, %c0_50] : memref<5x4xf32, #tpu.memory_space<smem>>
    %61 = vector.broadcast %60 : f32 to vector<20x20xf32>
    %62 = arith.mulf %5, %61 : vector<20x20xf32>
    %c2_51 = arith.constant 2 : index
    %63 = memref.load %arg6[%c2_51] : memref<5xf32, #tpu.memory_space<smem>>
    %64 = vector.broadcast %63 : f32 to vector<20x20xf32>
    %65 = arith.addf %62, %64 : vector<20x20xf32>
    %c2_52 = arith.constant 2 : index
    %c1_53 = arith.constant 1 : index
    %66 = memref.load %arg5[%c2_52, %c1_53] : memref<5x4xf32, #tpu.memory_space<smem>>
    %67 = vector.broadcast %66 : f32 to vector<20x20xf32>
    %68 = arith.mulf %9, %67 : vector<20x20xf32>
    %69 = arith.addf %65, %68 : vector<20x20xf32>
    %c2_54 = arith.constant 2 : index
    %c2_55 = arith.constant 2 : index
    %70 = memref.load %arg5[%c2_54, %c2_55] : memref<5x4xf32, #tpu.memory_space<smem>>
    %71 = vector.broadcast %70 : f32 to vector<20x20xf32>
    %72 = arith.mulf %13, %71 : vector<20x20xf32>
    %73 = arith.addf %69, %72 : vector<20x20xf32>
    %c2_56 = arith.constant 2 : index
    %c3_57 = arith.constant 3 : index
    %74 = memref.load %arg5[%c2_56, %c3_57] : memref<5x4xf32, #tpu.memory_space<smem>>
    %75 = vector.broadcast %74 : f32 to vector<20x20xf32>
    %76 = arith.mulf %17, %75 : vector<20x20xf32>
    %77 = arith.addf %73, %76 : vector<20x20xf32>
    %c0_58 = arith.constant 0 : index
    %c2_59 = arith.constant 2 : index
    %c0_60 = arith.constant 0 : index
    %c0_61 = arith.constant 0 : index
    %78 = vector.load %arg7[%c0_58, %c2_59, %c0_60, %c0_61] : memref<1x5x20x20xf32, #tpu.memory_space<vmem>>, vector<1x1x20x20xf32>
    %79 = vector.shape_cast %78 : vector<1x1x20x20xf32> to vector<20x20xf32>
    %80 = vector.shape_cast %77 : vector<20x20xf32> to vector<1x1x20x20xf32>
    tpu.vector_store %arg7[%c0_58, %c2_59, %c0_60, %c0_61], %80 {strides = array<i32>} : memref<1x5x20x20xf32, #tpu.memory_space<vmem>>, vector<1x1x20x20xf32>,
    %c3_62 = arith.constant 3 : index
    %c0_63 = arith.constant 0 : index
    %81 = memref.load %arg5[%c3_62, %c0_63] : memref<5x4xf32, #tpu.memory_space<smem>>
    %82 = vector.broadcast %81 : f32 to vector<20x20xf32>
    %83 = arith.mulf %5, %82 : vector<20x20xf32>
    %c3_64 = arith.constant 3 : index
    %84 = memref.load %arg6[%c3_64] : memref<5xf32, #tpu.memory_space<smem>>
    %85 = vector.broadcast %84 : f32 to vector<20x20xf32>
    %86 = arith.addf %83, %85 : vector<20x20xf32>
    %c3_65 = arith.constant 3 : index
    %c1_66 = arith.constant 1 : index
    %87 = memref.load %arg5[%c3_65, %c1_66] : memref<5x4xf32, #tpu.memory_space<smem>>
    %88 = vector.broadcast %87 : f32 to vector<20x20xf32>
    %89 = arith.mulf %9, %88 : vector<20x20xf32>
    %90 = arith.addf %86, %89 : vector<20x20xf32>
    %c3_67 = arith.constant 3 : index
    %c2_68 = arith.constant 2 : index
    %91 = memref.load %arg5[%c3_67, %c2_68] : memref<5x4xf32, #tpu.memory_space<smem>>
    %92 = vector.broadcast %91 : f32 to vector<20x20xf32>
    %93 = arith.mulf %13, %92 : vector<20x20xf32>
    %94 = arith.addf %90, %93 : vector<20x20xf32>
    %c3_69 = arith.constant 3 : index
    %c3_70 = arith.constant 3 : index
    %95 = memref.load %arg5[%c3_69, %c3_70] : memref<5x4xf32, #tpu.memory_space<smem>>
    %96 = vector.broadcast %95 : f32 to vector<20x20xf32>
    %97 = arith.mulf %17, %96 : vector<20x20xf32>
    %98 = arith.addf %94, %97 : vector<20x20xf32>
    %c0_71 = arith.constant 0 : index
    %c3_72 = arith.constant 3 : index
    %c0_73 = arith.constant 0 : index
    %c0_74 = arith.constant 0 : index
    %99 = vector.load %arg7[%c0_71, %c3_72, %c0_73, %c0_74] : memref<1x5x20x20xf32, #tpu.memory_space<vmem>>, vector<1x1x20x20xf32>
    %100 = vector.shape_cast %99 : vector<1x1x20x20xf32> to vector<20x20xf32>
    %101 = vector.shape_cast %98 : vector<20x20xf32> to vector<1x1x20x20xf32>
    tpu.vector_store %arg7[%c0_71, %c3_72, %c0_73, %c0_74], %101 {strides = array<i32>} : memref<1x5x20x20xf32, #tpu.memory_space<vmem>>, vector<1x1x20x20xf32>,
    %c4 = arith.constant 4 : index
    %c0_75 = arith.constant 0 : index
    %102 = memref.load %arg5[%c4, %c0_75] : memref<5x4xf32, #tpu.memory_space<smem>>
    %103 = vector.broadcast %102 : f32 to vector<20x20xf32>
    %104 = arith.mulf %5, %103 : vector<20x20xf32>
    %c4_76 = arith.constant 4 : index
    %105 = memref.load %arg6[%c4_76] : memref<5xf32, #tpu.memory_space<smem>>
    %106 = vector.broadcast %105 : f32 to vector<20x20xf32>
    %107 = arith.addf %104, %106 : vector<20x20xf32>
    %c4_77 = arith.constant 4 : index
    %c1_78 = arith.constant 1 : index
    %108 = memref.load %arg5[%c4_77, %c1_78] : memref<5x4xf32, #tpu.memory_space<smem>>
    %109 = vector.broadcast %108 : f32 to vector<20x20xf32>
    %110 = arith.mulf %9, %109 : vector<20x20xf32>
    %111 = arith.addf %107, %110 : vector<20x20xf32>
    %c4_79 = arith.constant 4 : index
    %c2_80 = arith.constant 2 : index
    %112 = memref.load %arg5[%c4_79, %c2_80] : memref<5x4xf32, #tpu.memory_space<smem>>
    %113 = vector.broadcast %112 : f32 to vector<20x20xf32>
    %114 = arith.mulf %13, %113 : vector<20x20xf32>
    %115 = arith.addf %111, %114 : vector<20x20xf32>
    %c4_81 = arith.constant 4 : index
    %c3_82 = arith.constant 3 : index
    %116 = memref.load %arg5[%c4_81, %c3_82] : memref<5x4xf32, #tpu.memory_space<smem>>
    %117 = vector.broadcast %116 : f32 to vector<20x20xf32>
    %118 = arith.mulf %17, %117 : vector<20x20xf32>
    %119 = arith.addf %115, %118 : vector<20x20xf32>
    %c0_83 = arith.constant 0 : index
    %c4_84 = arith.constant 4 : index
    %c0_85 = arith.constant 0 : index
    %c0_86 = arith.constant 0 : index
    %120 = vector.load %arg7[%c0_83, %c4_84, %c0_85, %c0_86] : memref<1x5x20x20xf32, #tpu.memory_space<vmem>>, vector<1x1x20x20xf32>
    %121 = vector.shape_cast %120 : vector<1x1x20x20xf32> to vector<20x20xf32>
    %122 = vector.shape_cast %119 : vector<20x20xf32> to vector<1x1x20x20xf32>
    tpu.vector_store %arg7[%c0_83, %c4_84, %c0_85, %c0_86], %122 {strides = array<i32>} : memref<1x5x20x20xf32, #tpu.memory_space<vmem>>, vector<1x1x20x20xf32>,
    return
  }
  func.func @transform_0(%arg0: i32, %arg1: i32) -> (i32, i32, i32, i32) {
    %c0_i32 = arith.constant 0 : i32
    %c0_i32_0 = arith.constant 0 : i32
    %c0_i32_1 = arith.constant 0 : i32
    %c0_i32_2 = arith.constant 0 : i32
    return %arg0, %c0_i32, %c0_i32_0, %c0_i32_1 : i32, i32, i32, i32
  }
  func.func @transform_1(%arg0: i32, %arg1: i32) -> (i32, i32) {
    %c0_i32 = arith.constant 0 : i32
    %c0_i32_0 = arith.constant 0 : i32
    return %arg1, %c0_i32 : i32, i32
  }
  func.func @transform_2(%arg0: i32, %arg1: i32) -> (i32, i32) {
    %c0_i32 = arith.constant 0 : i32
    %c0_i32_0 = arith.constant 0 : i32
    %c0_i32_1 = arith.constant 0 : i32
    return %c0_i32, %c0_i32_0 : i32, i32
  }
  func.func @transform_3(%arg0: i32, %arg1: i32) -> (i32, i32) {
    %c0_i32 = arith.constant 0 : i32
    %c0_i32_0 = arith.constant 0 : i32
    %c0_i32_1 = arith.constant 0 : i32
    return %c0_i32, %c0_i32_0 : i32, i32
  }
  func.func @transform_4(%arg0: i32, %arg1: i32) -> i32 {
    %c0_i32 = arith.constant 0 : i32
    %c0_i32_0 = arith.constant 0 : i32
    return %c0_i32 : i32
  }
  func.func @transform_5(%arg0: i32, %arg1: i32) -> (i32, i32, i32, i32) {
    %c0_i32 = arith.constant 0 : i32
    %c0_i32_0 = arith.constant 0 : i32
    %c0_i32_1 = arith.constant 0 : i32
    return %arg0, %c0_i32, %arg1, %c0_i32_0 : i32, i32, i32, i32
  }
}

module attributes {stable_mosaic.version = 11 : i64} {
  func.func @_kernel(%arg0: i32, %arg1: i32, %arg2: memref<5x16x16xf32, #tpu.memory_space<vmem>>, %arg3: memref<5x20x20xf32, #tpu.memory_space<vmem>>, %arg4: memref<16x20xf32, #tpu.memory_space<vmem>>, %arg5: memref<20x16xf32, #tpu.memory_space<vmem>>, %arg6: memref<5x16x16xf32, #tpu.memory_space<vmem>>) attributes {dimension_semantics = [#tpu.dimension_semantics<parallel>, #tpu.dimension_semantics<parallel>], iteration_bounds = array<i64: 2, 1>, scalar_prefetch = 0 : i64, scratch_operands = 0 : i64, tpu.core_type = #tpu.core_type<tc>, window_params = [{transform_indices = @transform_0, window_bounds = array<i64: 5, 16, 16>}, {transform_indices = @transform_1, window_bounds = array<i64: 5, 20, 20>}, {transform_indices = @transform_2, window_bounds = array<i64: 16, 20>}, {pipeline_mode = #tpu.pipeline_mode<synchronous>, transform_indices = @transform_3, window_bounds = array<i64: 20, 16>}, {transform_indices = @transform_4, window_bounds = array<i64: 5, 16, 16>}]} {
    %c0 = arith.constant 0 : index
    %c0_0 = arith.constant 0 : index
    %0 = vector.load %arg4[%c0, %c0_0] : memref<16x20xf32, #tpu.memory_space<vmem>>, vector<16x20xf32>
    %c0_1 = arith.constant 0 : index
    %c0_2 = arith.constant 0 : index
    %1 = vector.load %arg5[%c0_1, %c0_2] : memref<20x16xf32, #tpu.memory_space<vmem>>, vector<20x16xf32>
    %c0_i32 = arith.constant 0 : i32
    %2 = arith.index_cast %c0_i32 : i32 to index
    %c0_3 = arith.constant 0 : index
    %c0_4 = arith.constant 0 : index
    %3 = vector.load %arg3[%2, %c0_3, %c0_4] : memref<5x20x20xf32, #tpu.memory_space<vmem>>, vector<1x20x20xf32>
    %4 = vector.shape_cast %3 : vector<1x20x20xf32> to vector<20x20xf32>
    %cst = arith.constant dense<0.000000e+00> : vector<16x20xf32>
    %5 = tpu.matmul %0, %4, %cst {dimension_numbers = #tpu.dot_dimension_numbers<[1], [0], [0], [1], [0, 0, 1, 1], [], []>} : vector<16x20xf32>, vector<20x20xf32>, vector<16x20xf32> -> vector<16x20xf32>
    %cst_5 = arith.constant dense<0.000000e+00> : vector<16x16xf32>
    %6 = tpu.matmul %5, %1, %cst_5 {dimension_numbers = #tpu.dot_dimension_numbers<[1], [0], [0], [1], [0, 0, 1, 1], [], []>} : vector<16x20xf32>, vector<20x16xf32>, vector<16x16xf32> -> vector<16x16xf32>
    %7 = arith.index_cast %c0_i32 : i32 to index
    %c0_6 = arith.constant 0 : index
    %c0_7 = arith.constant 0 : index
    %8 = vector.load %arg2[%7, %c0_6, %c0_7] : memref<5x16x16xf32, #tpu.memory_space<vmem>>, vector<1x16x16xf32>
    %9 = vector.shape_cast %8 : vector<1x16x16xf32> to vector<16x16xf32>
    %10 = arith.addf %9, %6 : vector<16x16xf32>
    %cst_8 = arith.constant 0.333333343 : f32
    %11 = vector.broadcast %cst_8 : f32 to vector<16x16xf32>
    %12 = arith.mulf %10, %11 : vector<16x16xf32>
    %13 = arith.index_cast %c0_i32 : i32 to index
    %c0_9 = arith.constant 0 : index
    %c0_10 = arith.constant 0 : index
    %14 = vector.load %arg6[%13, %c0_9, %c0_10] : memref<5x16x16xf32, #tpu.memory_space<vmem>>, vector<1x16x16xf32>
    %15 = vector.shape_cast %14 : vector<1x16x16xf32> to vector<16x16xf32>
    %16 = vector.shape_cast %12 : vector<16x16xf32> to vector<1x16x16xf32>
    tpu.vector_store %arg6[%13, %c0_9, %c0_10], %16 {strides = array<i32>} : memref<5x16x16xf32, #tpu.memory_space<vmem>>, vector<1x16x16xf32>,
    %c1_i32 = arith.constant 1 : i32
    %17 = arith.index_cast %c1_i32 : i32 to index
    %c0_11 = arith.constant 0 : index
    %c0_12 = arith.constant 0 : index
    %18 = vector.load %arg3[%17, %c0_11, %c0_12] : memref<5x20x20xf32, #tpu.memory_space<vmem>>, vector<1x20x20xf32>
    %19 = vector.shape_cast %18 : vector<1x20x20xf32> to vector<20x20xf32>
    %cst_13 = arith.constant dense<0.000000e+00> : vector<16x20xf32>
    %20 = tpu.matmul %0, %19, %cst_13 {dimension_numbers = #tpu.dot_dimension_numbers<[1], [0], [0], [1], [0, 0, 1, 1], [], []>} : vector<16x20xf32>, vector<20x20xf32>, vector<16x20xf32> -> vector<16x20xf32>
    %cst_14 = arith.constant dense<0.000000e+00> : vector<16x16xf32>
    %21 = tpu.matmul %20, %1, %cst_14 {dimension_numbers = #tpu.dot_dimension_numbers<[1], [0], [0], [1], [0, 0, 1, 1], [], []>} : vector<16x20xf32>, vector<20x16xf32>, vector<16x16xf32> -> vector<16x16xf32>
    %22 = arith.index_cast %c1_i32 : i32 to index
    %c0_15 = arith.constant 0 : index
    %c0_16 = arith.constant 0 : index
    %23 = vector.load %arg2[%22, %c0_15, %c0_16] : memref<5x16x16xf32, #tpu.memory_space<vmem>>, vector<1x16x16xf32>
    %24 = vector.shape_cast %23 : vector<1x16x16xf32> to vector<16x16xf32>
    %25 = arith.addf %24, %21 : vector<16x16xf32>
    %cst_17 = arith.constant 0.333333343 : f32
    %26 = vector.broadcast %cst_17 : f32 to vector<16x16xf32>
    %27 = arith.mulf %25, %26 : vector<16x16xf32>
    %28 = arith.index_cast %c1_i32 : i32 to index
    %c0_18 = arith.constant 0 : index
    %c0_19 = arith.constant 0 : index
    %29 = vector.load %arg6[%28, %c0_18, %c0_19] : memref<5x16x16xf32, #tpu.memory_space<vmem>>, vector<1x16x16xf32>
    %30 = vector.shape_cast %29 : vector<1x16x16xf32> to vector<16x16xf32>
    %31 = vector.shape_cast %27 : vector<16x16xf32> to vector<1x16x16xf32>
    tpu.vector_store %arg6[%28, %c0_18, %c0_19], %31 {strides = array<i32>} : memref<5x16x16xf32, #tpu.memory_space<vmem>>, vector<1x16x16xf32>,
    %c2_i32 = arith.constant 2 : i32
    %32 = arith.index_cast %c2_i32 : i32 to index
    %c0_20 = arith.constant 0 : index
    %c0_21 = arith.constant 0 : index
    %33 = vector.load %arg3[%32, %c0_20, %c0_21] : memref<5x20x20xf32, #tpu.memory_space<vmem>>, vector<1x20x20xf32>
    %34 = vector.shape_cast %33 : vector<1x20x20xf32> to vector<20x20xf32>
    %cst_22 = arith.constant dense<0.000000e+00> : vector<16x20xf32>
    %35 = tpu.matmul %0, %34, %cst_22 {dimension_numbers = #tpu.dot_dimension_numbers<[1], [0], [0], [1], [0, 0, 1, 1], [], []>} : vector<16x20xf32>, vector<20x20xf32>, vector<16x20xf32> -> vector<16x20xf32>
    %cst_23 = arith.constant dense<0.000000e+00> : vector<16x16xf32>
    %36 = tpu.matmul %35, %1, %cst_23 {dimension_numbers = #tpu.dot_dimension_numbers<[1], [0], [0], [1], [0, 0, 1, 1], [], []>} : vector<16x20xf32>, vector<20x16xf32>, vector<16x16xf32> -> vector<16x16xf32>
    %37 = arith.index_cast %c2_i32 : i32 to index
    %c0_24 = arith.constant 0 : index
    %c0_25 = arith.constant 0 : index
    %38 = vector.load %arg2[%37, %c0_24, %c0_25] : memref<5x16x16xf32, #tpu.memory_space<vmem>>, vector<1x16x16xf32>
    %39 = vector.shape_cast %38 : vector<1x16x16xf32> to vector<16x16xf32>
    %40 = arith.addf %39, %36 : vector<16x16xf32>
    %cst_26 = arith.constant 0.333333343 : f32
    %41 = vector.broadcast %cst_26 : f32 to vector<16x16xf32>
    %42 = arith.mulf %40, %41 : vector<16x16xf32>
    %43 = arith.index_cast %c2_i32 : i32 to index
    %c0_27 = arith.constant 0 : index
    %c0_28 = arith.constant 0 : index
    %44 = vector.load %arg6[%43, %c0_27, %c0_28] : memref<5x16x16xf32, #tpu.memory_space<vmem>>, vector<1x16x16xf32>
    %45 = vector.shape_cast %44 : vector<1x16x16xf32> to vector<16x16xf32>
    %46 = vector.shape_cast %42 : vector<16x16xf32> to vector<1x16x16xf32>
    tpu.vector_store %arg6[%43, %c0_27, %c0_28], %46 {strides = array<i32>} : memref<5x16x16xf32, #tpu.memory_space<vmem>>, vector<1x16x16xf32>,
    %c3_i32 = arith.constant 3 : i32
    %47 = arith.index_cast %c3_i32 : i32 to index
    %c0_29 = arith.constant 0 : index
    %c0_30 = arith.constant 0 : index
    %48 = vector.load %arg3[%47, %c0_29, %c0_30] : memref<5x20x20xf32, #tpu.memory_space<vmem>>, vector<1x20x20xf32>
    %49 = vector.shape_cast %48 : vector<1x20x20xf32> to vector<20x20xf32>
    %cst_31 = arith.constant dense<0.000000e+00> : vector<16x20xf32>
    %50 = tpu.matmul %0, %49, %cst_31 {dimension_numbers = #tpu.dot_dimension_numbers<[1], [0], [0], [1], [0, 0, 1, 1], [], []>} : vector<16x20xf32>, vector<20x20xf32>, vector<16x20xf32> -> vector<16x20xf32>
    %cst_32 = arith.constant dense<0.000000e+00> : vector<16x16xf32>
    %51 = tpu.matmul %50, %1, %cst_32 {dimension_numbers = #tpu.dot_dimension_numbers<[1], [0], [0], [1], [0, 0, 1, 1], [], []>} : vector<16x20xf32>, vector<20x16xf32>, vector<16x16xf32> -> vector<16x16xf32>
    %52 = arith.index_cast %c3_i32 : i32 to index
    %c0_33 = arith.constant 0 : index
    %c0_34 = arith.constant 0 : index
    %53 = vector.load %arg2[%52, %c0_33, %c0_34] : memref<5x16x16xf32, #tpu.memory_space<vmem>>, vector<1x16x16xf32>
    %54 = vector.shape_cast %53 : vector<1x16x16xf32> to vector<16x16xf32>
    %55 = arith.addf %54, %51 : vector<16x16xf32>
    %cst_35 = arith.constant 0.333333343 : f32
    %56 = vector.broadcast %cst_35 : f32 to vector<16x16xf32>
    %57 = arith.mulf %55, %56 : vector<16x16xf32>
    %58 = arith.index_cast %c3_i32 : i32 to index
    %c0_36 = arith.constant 0 : index
    %c0_37 = arith.constant 0 : index
    %59 = vector.load %arg6[%58, %c0_36, %c0_37] : memref<5x16x16xf32, #tpu.memory_space<vmem>>, vector<1x16x16xf32>
    %60 = vector.shape_cast %59 : vector<1x16x16xf32> to vector<16x16xf32>
    %61 = vector.shape_cast %57 : vector<16x16xf32> to vector<1x16x16xf32>
    tpu.vector_store %arg6[%58, %c0_36, %c0_37], %61 {strides = array<i32>} : memref<5x16x16xf32, #tpu.memory_space<vmem>>, vector<1x16x16xf32>,
    %c4_i32 = arith.constant 4 : i32
    %62 = arith.index_cast %c4_i32 : i32 to index
    %c0_38 = arith.constant 0 : index
    %c0_39 = arith.constant 0 : index
    %63 = vector.load %arg3[%62, %c0_38, %c0_39] : memref<5x20x20xf32, #tpu.memory_space<vmem>>, vector<1x20x20xf32>
    %64 = vector.shape_cast %63 : vector<1x20x20xf32> to vector<20x20xf32>
    %cst_40 = arith.constant dense<0.000000e+00> : vector<16x20xf32>
    %65 = tpu.matmul %0, %64, %cst_40 {dimension_numbers = #tpu.dot_dimension_numbers<[1], [0], [0], [1], [0, 0, 1, 1], [], []>} : vector<16x20xf32>, vector<20x20xf32>, vector<16x20xf32> -> vector<16x20xf32>
    %cst_41 = arith.constant dense<0.000000e+00> : vector<16x16xf32>
    %66 = tpu.matmul %65, %1, %cst_41 {dimension_numbers = #tpu.dot_dimension_numbers<[1], [0], [0], [1], [0, 0, 1, 1], [], []>} : vector<16x20xf32>, vector<20x16xf32>, vector<16x16xf32> -> vector<16x16xf32>
    %67 = arith.index_cast %c4_i32 : i32 to index
    %c0_42 = arith.constant 0 : index
    %c0_43 = arith.constant 0 : index
    %68 = vector.load %arg2[%67, %c0_42, %c0_43] : memref<5x16x16xf32, #tpu.memory_space<vmem>>, vector<1x16x16xf32>
    %69 = vector.shape_cast %68 : vector<1x16x16xf32> to vector<16x16xf32>
    %70 = arith.addf %69, %66 : vector<16x16xf32>
    %cst_44 = arith.constant 0.333333343 : f32
    %71 = vector.broadcast %cst_44 : f32 to vector<16x16xf32>
    %72 = arith.mulf %70, %71 : vector<16x16xf32>
    %73 = arith.index_cast %c4_i32 : i32 to index
    %c0_45 = arith.constant 0 : index
    %c0_46 = arith.constant 0 : index
    %74 = vector.load %arg6[%73, %c0_45, %c0_46] : memref<5x16x16xf32, #tpu.memory_space<vmem>>, vector<1x16x16xf32>
    %75 = vector.shape_cast %74 : vector<1x16x16xf32> to vector<16x16xf32>
    %76 = vector.shape_cast %72 : vector<16x16xf32> to vector<1x16x16xf32>
    tpu.vector_store %arg6[%73, %c0_45, %c0_46], %76 {strides = array<i32>} : memref<5x16x16xf32, #tpu.memory_space<vmem>>, vector<1x16x16xf32>,
    %c5_i32 = arith.constant 5 : i32
    return
  }
  func.func @transform_0(%arg0: i32, %arg1: i32) -> (i32, i32, i32) {
    %c0_i32 = arith.constant 0 : i32
    %c0_i32_0 = arith.constant 0 : i32
    return %arg0, %arg1, %c0_i32 : i32, i32, i32
  }
  func.func @transform_1(%arg0: i32, %arg1: i32) -> (i32, i32, i32) {
    %c0_i32 = arith.constant 0 : i32
    %c0_i32_0 = arith.constant 0 : i32
    %c0_i32_1 = arith.constant 0 : i32
    return %arg0, %c0_i32, %c0_i32_0 : i32, i32, i32
  }
  func.func @transform_2(%arg0: i32, %arg1: i32) -> (i32, i32) {
    %c0_i32 = arith.constant 0 : i32
    %c0_i32_0 = arith.constant 0 : i32
    return %arg1, %c0_i32 : i32, i32
  }
  func.func @transform_3(%arg0: i32, %arg1: i32) -> (i32, i32) {
    %c0_i32 = arith.constant 0 : i32
    %c0_i32_0 = arith.constant 0 : i32
    %c0_i32_1 = arith.constant 0 : i32
    return %c0_i32, %c0_i32_0 : i32, i32
  }
  func.func @transform_4(%arg0: i32, %arg1: i32) -> (i32, i32, i32) {
    %c0_i32 = arith.constant 0 : i32
    %c0_i32_0 = arith.constant 0 : i32
    return %arg0, %arg1, %c0_i32 : i32, i32, i32
  }
}

</mosaic_0001>

<llo_original>
// kernel: multiscale_tta_forward.5
$region0: #{multiscale_tta_forward.5}
  #allocation0 [shape = 'u32[]', space=smem, size = 0x4, offset = 0x4, fixed_abs, tag = 'smem constant byte address 0x4 - core index']
  #allocation1 [shape = 'u32[144,128]{1,0:T(1,128)}', space=vmem, size = 0x12000, scoped, tag = 'internal scratch']
  %s0 = inlined_call_operand.vmem [shape: f32[2,4,256], index: 0, kind: input, shape index: {}]
  %s1 = inlined_call_operand.vmem [shape: f32[5,4], index: 1, kind: input, shape index: {}]
  %s2 = inlined_call_operand.vmem [shape: f32[5,1], index: 2, kind: input, shape index: {}]
  %s3 = inlined_call_operand.vmem [shape: f32[2,5,256], index: 3, kind: output, shape index: {}]
  %s4 = sld [smem:[#allocation0]]
  $region45: #{multiscale_tta_forward.5} parent=0
    _
  %s6 = ssub.s32 1, %s4
  %s7 = scalar_select 0, %s6, %s4
  loop: start=0, step=1, limit=4
  $region2: #{multiscale_tta_forward.5} parent=0 // loop_pre_header
    _
  $region3: #{multiscale_tta_forward.5} parent=0 // loop_header
    %s9 = sphi 0, %s13
    %p10 = scmp.ge.s32.totalorder %s9, 4
    %s16 = sphi 0, %s28
    %s17 = sphi 0, %s24
    %s18 = sphi 0, %s16
    %s19 = sphi 0, %s17
    %s20 = sphi 0, %s18
    %s21 = sphi 0, %s19
    %s33 = sphi 0, %s35
    %s36 = sphi 0, %s33
    %s37 = sphi 0, %s36
    %s53 = sphi 0, %s37
    %s57 = sphi 0, %s57
    %s59 = sphi 0, %s57
    %s60 = sphi 0, %s59
    %s74 = sphi 0, %s60
    %s78 = sphi 0, %s78
    %s80 = sphi 0, %s78
    %s81 = sphi 0, %s80
    %s95 = sphi 0, %s81
    %s103 = sphi 0, %s105
    %s106 = sphi 0, %s103
    %s107 = sphi 0, %s106
    %s123 = sphi 0, %s107
  $region4: #{multiscale_tta_forward.5} parent=0 // loop_header_branch
    %12 = sbr.rel (%p10) target = $region8
  $region5: #{multiscale_tta_forward.5} parent=0 // loop_body
    %s14 = ssub.s32 %s9, 1
    %s15 = ssub.s32 %s9, 2
    %s22 = sadd.s32 1, %s17
    %p23 = scmp.ge.s32.totalorder %s22, 1
    %s24 = scalar_select %p23, 0, %s22
    %s25 = sadd.s32 1, %s16
    %s26 = scalar_select %p23, %s25, %s16
    %p27 = scmp.ge.s32.totalorder %s26, 2
    %s28 = scalar_select %p27, 0, %s26
    %s29 = ssub.s32 %s16, %s28
    %s30 = ssub.s32 %s17, %s24
    %s31 = sor.u32 %s29, %s30
    %p32 = scmp.eq.s32.totalorder %s31, 0
    %s34 = sadd.s32 %s33, 1
    %s35 = scalar_select %p32, %s33, %s34
    %p38 = pneg %p32
    %p39 = scmp.eq.s32.totalorder %s9, 1
    %p40 = por %p38, %p39
    %p41 = scmp.ne.s32.totalorder %s33, %s36
    %p42 = scmp.eq.s32.totalorder %s9, 0
    %p43 = por %p41, %p42
    %p44 = scmp.ne.s32.totalorder %s33, %s36
    %p45 = scmp.eq.s32.totalorder %s14, 1
    %p46 = por %p44, %p45
    %p47 = scmp.ne.s32.totalorder %s36, %s37
    %p48 = scmp.eq.s32.totalorder %s14, 0
    %p49 = por %p47, %p48
    %p50 = scmp.ne.s32.totalorder %s36, %s37
    %p51 = scmp.eq.s32.totalorder %s15, 1
    %p52 = por %p50, %p51
    %p54 = scmp.ne.s32.totalorder %s37, %s53
    %p55 = scmp.eq.s32.totalorder %s15, 0
    %p56 = por %p54, %p55
    %s58 = sadd.s32 %s57, 1
    %p61 = scmp.eq.s32.totalorder %s9, 1
    %p62 = scmp.ne.s32.totalorder %s57, %s59
    %p63 = scmp.eq.s32.totalorder %s9, 0
    %p64 = por %p62, %p63
    %p65 = scmp.ne.s32.totalorder %s57, %s59
    %p66 = scmp.eq.s32.totalorder %s14, 1
    %p67 = por %p65, %p66
    %p68 = scmp.ne.s32.totalorder %s59, %s60
    %p69 = scmp.eq.s32.totalorder %s14, 0
    %p70 = por %p68, %p69
    %p71 = scmp.ne.s32.totalorder %s59, %s60
    %p72 = scmp.eq.s32.totalorder %s15, 1
    %p73 = por %p71, %p72
    %p75 = scmp.ne.s32.totalorder %s60, %s74
    %p76 = scmp.eq.s32.totalorder %s15, 0
    %p77 = por %p75, %p76
    %s79 = sadd.s32 %s78, 1
    %p82 = scmp.eq.s32.totalorder %s9, 1
    %p83 = scmp.ne.s32.totalorder %s78, %s80
    %p84 = scmp.eq.s32.totalorder %s9, 0
    %p85 = por %p83, %p84
    %p86 = scmp.ne.s32.totalorder %s78, %s80
    %p87 = scmp.eq.s32.totalorder %s14, 1
    %p88 = por %p86, %p87
    %p89 = scmp.ne.s32.totalorder %s80, %s81
    %p90 = scmp.eq.s32.totalorder %s14, 0
    %p91 = por %p89, %p90
    %p92 = scmp.ne.s32.totalorder %s80, %s81
    %p93 = scmp.eq.s32.totalorder %s15, 1
    %p94 = por %p92, %p93
    %p96 = scmp.ne.s32.totalorder %s81, %s95
    %p97 = scmp.eq.s32.totalorder %s15, 0
    %p98 = por %p96, %p97
    %s99 = ssub.s32 %s16, %s28
    %s100 = ssub.s32 %s17, %s24
    %s101 = sor.u32 %s99, %s100
    %p102 = scmp.eq.s32.totalorder %s101, 0
    %s104 = sadd.s32 %s103, 1
    %s105 = scalar_select %p102, %s103, %s104
    %p108 = pneg %p102
    %p109 = scmp.eq.s32.totalorder %s9, 1
    %p110 = por %p108, %p109
    %p111 = scmp.ne.s32.totalorder %s103, %s106
    %p112 = scmp.eq.s32.totalorder %s9, 0
    %p113 = por %p111, %p112
    %p114 = scmp.ne.s32.totalorder %s103, %s106
    %p115 = scmp.eq.s32.totalorder %s14, 1
    %p116 = por %p114, %p115
    %p117 = scmp.ne.s32.totalorder %s106, %s107
    %p118 = scmp.eq.s32.totalorder %s14, 0
    %p119 = por %p117, %p118
    %p120 = scmp.ne.s32.totalorder %s106, %s107
    %p121 = scmp.eq.s32.totalorder %s15, 1
    %p122 = por %p120, %p121
    %p124 = scmp.ne.s32.totalorder %s107, %s123
    %p125 = scmp.eq.s32.totalorder %s15, 0
    %p126 = por %p124, %p125
    %p127 = scmp.le.s32.totalorder 1, %s9
    %p128 = scmp.lt.s32.totalorder %s9, 3
    %p129 = pnand %p127, %p128
    %p130 = pneg %p129
    // Predicated region
    $region9: #{multiscale_tta_forward.5} parent=5 // pred_check
      _
    $region10: #{multiscale_tta_forward.5} parent=5 // pred_check_branch
      %132 = sbr.rel (%p129) target = $region12
    $region11: #{multiscale_tta_forward.5} parent=5 // pred_region
      %s133 = ssub.s32 %s9, 1
      // Predicated region
      $region13: #{multiscale_tta_forward.5} parent=11 // pred_check
        %p134 = pneg %p70
      $region14: #{multiscale_tta_forward.5} parent=11 // pred_check_branch
        %136 = sbr.rel (%p134) target = $region16
      $region15: #{multiscale_tta_forward.5} parent=11 // pred_region
        _
      $region16: #{multiscale_tta_forward.5} parent=11 // pred_fallthru
        _
      // Predicated region
      $region17: #{multiscale_tta_forward.5} parent=11 // pred_check
        %p137 = pneg %p91
      $region18: #{multiscale_tta_forward.5} parent=11 // pred_check_branch
        %139 = sbr.rel (%p137) target = $region20
      $region19: #{multiscale_tta_forward.5} parent=11 // pred_region
        _
      $region20: #{multiscale_tta_forward.5} parent=11 // pred_fallthru
        _
    $region12: #{multiscale_tta_forward.5} parent=5 // pred_fallthru
      _
    %p140 = scmp.lt.s32.totalorder %s9, 2
    // Predicated region
    $region21: #{multiscale_tta_forward.5} parent=5 // pred_check
      %p141 = pneg %p140
    $region22: #{multiscale_tta_forward.5} parent=5 // pred_check_branch
      %143 = sbr.rel (%p141) target = $region24
    $region23: #{multiscale_tta_forward.5} parent=5 // pred_region
      // Predicated region
      $region25: #{multiscale_tta_forward.5} parent=23 // pred_check
        %p144 = pneg %p43
      $region26: #{multiscale_tta_forward.5} parent=23 // pred_check_branch
        %146 = sbr.rel (%p144) target = $region28
      $region27: #{multiscale_tta_forward.5} parent=23 // pred_region
        %s147 = smul.u32 2, %s17
        %p148 = scmp.lt.s32.totalorder %s16, 1
        %s149 = scalar_select %p148, %s16, 1
        %p150 = scmp.lt.s32.totalorder %s147, 1
        %s151 = scalar_select %p150, %s147, 1
        %s152 = smul.addr %s149, 2
        %s153 = sadd.s32 %s151, %s152
        %s154 = smul.addr %s153, 4
        %s155 = scalar_lea.vmem %s0, %s154
        %s156 = smul.u32 2, %s17
      $region28: #{multiscale_tta_forward.5} parent=23 // pred_fallthru
        _
    $region24: #{multiscale_tta_forward.5} parent=5 // pred_fallthru
      _
    %p157 = scmp.le.s32.totalorder 1, %s9
    %p158 = scmp.lt.s32.totalorder %s9, 3
    %p159 = pnand %p157, %p158
    %p160 = pneg %p159
    // Predicated region
    $region29: #{multiscale_tta_forward.5} parent=5 // pred_check
      _
    $region30: #{multiscale_tta_forward.5} parent=5 // pred_check_branch
      %162 = sbr.rel (%p159) target = $region32
    $region31: #{multiscale_tta_forward.5} parent=5 // pred_region
      %s163 = ssub.s32 %s9, 1
      %s164 = smul.u32 2, %s19
      %p165 = scmp.lt.s32.totalorder %s18, 1
      %s166 = scalar_select %p165, %s18, 1
      %p167 = scmp.lt.s32.totalorder %s164, 1
      %s168 = scalar_select %p167, %s164, 1
      %s169 = smul.addr %s166, 2
      %s170 = sadd.s32 %s168, %s169
      %s171 = smul.addr %s170, 4
      %s172 = scalar_lea.vmem %s0, %s171
      %p173 = pneg %p49
      %p174 = pneg %p46
      %p175 = pneg %p70
      %p176 = pneg %p67
      %p177 = pneg %p91
      %p178 = pneg %p88
      %p179 = pneg %p119
      %p180 = pneg %p116
      %s181 = smul.u32 2, %s19
      %p182 = scmp.lt.s32.totalorder %s18, 1
      %s183 = scalar_select %p182, %s18, 1
      %p184 = scmp.lt.s32.totalorder %s181, 1
      %s185 = scalar_select %p184, %s181, 1
      %s186 = smul.addr %s183, 2
      %s187 = sadd.s32 %s185, %s186
      %s188 = smul.addr %s187, 8
      %s189 = scalar_lea.vmem %s3, %s188
      %s190 = smul.u32 2, %s19
      %p191 = scmp.lt.s32.totalorder %s18, 1
      %s192 = scalar_select %p191, %s18, 1
      %p193 = scmp.lt.s32.totalorder %s190, 1
      %s194 = scalar_select %p193, %s190, 1
      %s195 = smul.addr %s192, 2
      %s196 = sadd.s32 %s194, %s195
      %s197 = smul.addr %s196, 4
      %s198 = scalar_lea.vmem %s0, %s197
      %s199 = smul.u32 2, %s19
      %s200 = smul.u32 2, %s19
      %p201 = scmp.lt.s32.totalorder %s18, 1
      %s202 = scalar_select %p201, %s18, 1
      %p203 = scmp.lt.s32.totalorder %s200, 1
      %s204 = scalar_select %p203, %s200, 1
      %s205 = smul.addr %s202, 2
      %s206 = sadd.s32 %s204, %s205
      %s207 = smul.addr %s206, 8
      %s208 = scalar_lea.vmem %s3, %s207
      %s209 = smul.u32 2, %s19
      %v210 = vld [vmem:[%s1] sm:$0x1f]
      %v211 = vld [vmem:[%s198] sm:$0xff]
      %v212 = vld [vmem:[%s2] sm:$0x1f]
      %214 = vset.pattern.permute.xlu0 0
      %215 = vperm.xlu0 %214, %v212
      %v216 = vpop.permute.xlu0 %215
      %v219 = vcombine.high %v211, %v211
      %vm220 = vcmask 31744
      %v222 = vsel %vm220, %v210, 0
      %vm224 = vcmask 1043456
      %v225 = vsel %vm224, %v211, 0
      %v227 = vsel %vm224, %v219, 0
      %229 = vmatprep.subr.mxu0 %v227
      %230 = vmatpush1.msra.mxu0 %v225
      %231 = vmatprep.subr.mxu0 0.0
      %232 = vmatpush1.msra.mxu0 0.0
      %233 = vmatprep.subr.mxu0 0.0
      %234 = vmatpush1.msra.mxu0 0.0
      %235 = vmatprep.subr.mxu0 0.0
      %236 = vmatpush1.msra.mxu0 0.0
      %237 = vmatprep.subr.mxu0 0.0
      %238 = vmatpush1.msra.mxu0 0.0
      %239 = vmatprep.subr.mxu0 0.0
      %240 = vmatpush1.msra.mxu0 0.0
      %241 = vmatprep.subr.mxu0 0.0
      %242 = vmatpush1.msra.mxu0 0.0
      %243 = vmatprep.subr.mxu0 0.0
      %244 = vmatpush1.msra.mxu0 0.0
      %245 = vmatprep.subr.mxu0 0.0
      %246 = vmatpush1.msra.mxu0 0.0
      %247 = vmatprep.subr.mxu0 0.0
      %248 = vmatpush1.msra.mxu0 0.0
      %249 = vmatprep.subr.mxu0 0.0
      %250 = vmatpush1.msra.mxu0 0.0
      %251 = vmatprep.subr.mxu0 0.0
      %252 = vmatpush1.msra.mxu0 0.0
      %253 = vmatprep.subr.mxu0 0.0
      %254 = vmatpush1.msra.mxu0 0.0
      %255 = vmatprep.subr.mxu0 0.0
      %256 = vmatpush1.msra.mxu0 0.0
      %257 = vmatprep.subr.mxu0 0.0
      %258 = vmatpush1.msra.mxu0 0.0
      %259 = vmatprep.subr.mxu0 0.0
      %260 = vmatpush1.msra.mxu0 0.0
      %261 = vmatprep.subr.mxu0 0.0
      %262 = vmatpush1.msra.mxu0 0.0
      %263 = vmatprep.subr.mxu0 0.0
      %264 = vmatpush1.msra.mxu0 0.0
      %265 = vmatprep.subr.mxu0 0.0
      %266 = vmatpush1.msra.mxu0 0.0
      %267 = vmatprep.subr.mxu0 0.0
      %268 = vmatpush1.msra.mxu0 0.0
      %269 = vmatprep.subr.mxu0 0.0
      %270 = vmatpush1.msra.mxu0 0.0
      %271 = vmatprep.subr.mxu0 0.0
      %272 = vmatpush1.msra.mxu0 0.0
      %273 = vmatprep.subr.mxu0 0.0
      %274 = vmatpush1.msra.mxu0 0.0
      %275 = vmatprep.subr.mxu0 0.0
      %276 = vmatpush1.msra.mxu0 0.0
      %277 = vmatprep.subr.mxu0 0.0
      %278 = vmatpush1.msra.mxu0 0.0
      %279 = vmatprep.subr.mxu0 0.0
      %280 = vmatpush1.msra.mxu0 0.0
      %281 = vmatprep.subr.mxu0 0.0
      %282 = vmatpush1.msra.mxu0 0.0
      %283 = vmatprep.subr.mxu0 0.0
      %284 = vmatpush1.msra.mxu0 0.0
      %285 = vmatprep.subr.mxu0 0.0
      %286 = vmatpush1.msra.mxu0 0.0
      %287 = vmatprep.subr.mxu0 0.0
      %288 = vmatpush1.msra.mxu0 0.0
      %289 = vmatprep.subr.mxu0 0.0
      %290 = vmatpush1.msra.mxu0 0.0
      %291 = vmatprep.subr.mxu0 0.0
      %292 = vmatpush1.msra.mxu0 0.0
      %293 = vmatprep.mubr.f32.mxu0 0.0
      %294 = vmatmul.mubr.f32.gmra.mrb[0].mxu0 %v222
      %v295 = vpop.f32.mrb[0].mxu0
      %v296 = vadd.f32 %v216, %v295
      %v297 = vpop.f32.mrb[0].mxu0
      %v298 = vadd.f32 %v216, %v297
      %299 = vdwg.mxu0
      %300 = vst [vmem:[%s208] sm:$0x1f] %v296
      %301 = vst [vmem:[%s208 + $0x8] sm:$0x1f] %v298
      %s302 = smul.u32 2, %s19
      %p303 = scmp.lt.s32.totalorder %s18, 1
      %s304 = scalar_select %p303, %s18, 1
      %p305 = scmp.lt.s32.totalorder %s302, 1
      %s306 = scalar_select %p305, %s302, 1
      %s307 = smul.addr %s304, 2
      %s308 = sadd.s32 %s306, %s307
      %s309 = smul.addr %s308, 8
      %s310 = scalar_lea.vmem %s3, %s309
      // Predicated region
      $region33: #{multiscale_tta_forward.5} parent=31 // pred_check
        %p311 = pneg %p116
      $region34: #{multiscale_tta_forward.5} parent=31 // pred_check_branch
        %313 = sbr.rel (%p311) target = $region36
      $region35: #{multiscale_tta_forward.5} parent=31 // pred_region
        %s314 = smul.u32 2, %s19
      $region36: #{multiscale_tta_forward.5} parent=31 // pred_fallthru
        _
    $region32: #{multiscale_tta_forward.5} parent=5 // pred_fallthru
      _
    %p315 = scmp.le.s32.totalorder 2, %s9
    // Predicated region
    $region37: #{multiscale_tta_forward.5} parent=5 // pred_check
      %p316 = pneg %p315
    $region38: #{multiscale_tta_forward.5} parent=5 // pred_check_branch
      %318 = sbr.rel (%p316) target = $region40
    $region39: #{multiscale_tta_forward.5} parent=5 // pred_region
      %s319 = ssub.s32 %s9, 2
      // Predicated region
      $region41: #{multiscale_tta_forward.5} parent=39 // pred_check
        %p320 = pneg %p122
      $region42: #{multiscale_tta_forward.5} parent=39 // pred_check_branch
        %322 = sbr.rel (%p320) target = $region44
      $region43: #{multiscale_tta_forward.5} parent=39 // pred_region
        %s323 = smul.u32 2, %s21
        %p324 = scmp.lt.s32.totalorder %s20, 1
        %s325 = scalar_select %p324, %s20, 1
        %p326 = scmp.lt.s32.totalorder %s323, 1
        %s327 = scalar_select %p326, %s323, 1
        %s328 = smul.addr %s325, 2
        %s329 = sadd.s32 %s327, %s328
        %s330 = smul.addr %s329, 8
        %s331 = scalar_lea.vmem %s3, %s330
      $region44: #{multiscale_tta_forward.5} parent=39 // pred_fallthru
        _
    $region40: #{multiscale_tta_forward.5} parent=5 // pred_fallthru
      _
  $region6: #{multiscale_tta_forward.5} parent=0 // loop_footer
    %s13 = sadd.s32 1, %s9
  $region7: #{multiscale_tta_forward.5} parent=0 // loop_footer_branch
    %8 = sbr.rel target = $region3
  $region8: #{multiscale_tta_forward.5} parent=0 // loop_exit
    _

// kernel: multiscale_tta_forward.7
$region0: #{multiscale_tta_forward.7}
  #allocation0 [shape = 'u32[]', space=smem, size = 0x4, offset = 0x4, fixed_abs, tag = 'smem constant byte address 0x4 - core index']
  #allocation1 [shape = 'u32[144,128]{1,0:T(1,128)}', space=vmem, size = 0x12000, scoped, tag = 'internal scratch']
  %s0 = inlined_call_operand.vmem [shape: f32[10,16,16], index: 0, kind: input, shape index: {}, may-alias: {0,4}]
  %s1 = inlined_call_operand.vmem [shape: f32[10,12,12], index: 1, kind: input, shape index: {}]
  %s2 = inlined_call_operand.vmem [shape: f32[16,12], index: 2, kind: input, shape index: {}]
  %s3 = inlined_call_operand.vmem [shape: f32[12,16], index: 3, kind: input, shape index: {}]
  %s4 = inlined_call_operand.vmem [shape: f32[10,16,16], index: 4, kind: output, shape index: {}, may-alias: {0,4}]
  %s5 = sld [smem:[#allocation0]]
  $region49: #{multiscale_tta_forward.7} parent=0
    _
  %s7 = ssub.s32 1, %s5
  %s8 = scalar_select 0, %s7, %s5
  loop: start=0, step=1, limit=4
  $region2: #{multiscale_tta_forward.7} parent=0 // loop_pre_header
    _
  $region3: #{multiscale_tta_forward.7} parent=0 // loop_header
    %s10 = sphi 0, %s14
    %p11 = scmp.ge.s32.totalorder %s10, 4
    %s17 = sphi 0, %s29
    %s18 = sphi 0, %s25
    %s19 = sphi 0, %s17
    %s20 = sphi 0, %s18
    %s21 = sphi 0, %s19
    %s22 = sphi 0, %s20
    %s34 = sphi 0, %s36
    %s37 = sphi 0, %s34
    %s38 = sphi 0, %s37
    %s54 = sphi 0, %s38
    %s60 = sphi 0, %s62
    %s63 = sphi 0, %s60
    %s64 = sphi 0, %s63
    %s80 = sphi 0, %s64
    %s86 = sphi 0, %s88
    %s89 = sphi 0, %s86
    %s90 = sphi 0, %s89
    %s106 = sphi 0, %s90
    %s110 = sphi 0, %s110
    %s112 = sphi 0, %s110
    %s113 = sphi 0, %s112
    %s127 = sphi 0, %s113
    %s135 = sphi 0, %s137
    %s138 = sphi 0, %s135
    %s139 = sphi 0, %s138
    %s155 = sphi 0, %s139
  $region4: #{multiscale_tta_forward.7} parent=0 // loop_header_branch
    %13 = sbr.rel (%p11) target = $region8
  $region5: #{multiscale_tta_forward.7} parent=0 // loop_body
    %s15 = ssub.s32 %s10, 1
    %s16 = ssub.s32 %s10, 2
    %s23 = sadd.s32 1, %s18
    %p24 = scmp.ge.s32.totalorder %s23, 1
    %s25 = scalar_select %p24, 0, %s23
    %s26 = sadd.s32 1, %s17
    %s27 = scalar_select %p24, %s26, %s17
    %p28 = scmp.ge.s32.totalorder %s27, 2
    %s29 = scalar_select %p28, 0, %s27
    %s30 = ssub.s32 %s17, %s29
    %s31 = ssub.s32 %s18, %s25
    %s32 = sor.u32 %s30, %s31
    %p33 = scmp.eq.s32.totalorder %s32, 0
    %s35 = sadd.s32 %s34, 1
    %s36 = scalar_select %p33, %s34, %s35
    %p39 = pneg %p33
    %p40 = scmp.eq.s32.totalorder %s10, 1
    %p41 = por %p39, %p40
    %p42 = scmp.ne.s32.totalorder %s34, %s37
    %p43 = scmp.eq.s32.totalorder %s10, 0
    %p44 = por %p42, %p43
    %p45 = scmp.ne.s32.totalorder %s34, %s37
    %p46 = scmp.eq.s32.totalorder %s15, 1
    %p47 = por %p45, %p46
    %p48 = scmp.ne.s32.totalorder %s37, %s38
    %p49 = scmp.eq.s32.totalorder %s15, 0
    %p50 = por %p48, %p49
    %p51 = scmp.ne.s32.totalorder %s37, %s38
    %p52 = scmp.eq.s32.totalorder %s16, 1
    %p53 = por %p51, %p52
    %p55 = scmp.ne.s32.totalorder %s38, %s54
    %p56 = scmp.eq.s32.totalorder %s16, 0
    %p57 = por %p55, %p56
    %s58 = ssub.s32 %s17, %s29
    %p59 = scmp.eq.s32.totalorder %s58, 0
    %s61 = sadd.s32 %s60, 1
    %s62 = scalar_select %p59, %s60, %s61
    %p65 = pneg %p59
    %p66 = scmp.eq.s32.totalorder %s10, 1
    %p67 = por %p65, %p66
    %p68 = scmp.ne.s32.totalorder %s60, %s63
    %p69 = scmp.eq.s32.totalorder %s10, 0
    %p70 = por %p68, %p69
    %p71 = scmp.ne.s32.totalorder %s60, %s63
    %p72 = scmp.eq.s32.totalorder %s15, 1
    %p73 = por %p71, %p72
    %p74 = scmp.ne.s32.totalorder %s63, %s64
    %p75 = scmp.eq.s32.totalorder %s15, 0
    %p76 = por %p74, %p75
    %p77 = scmp.ne.s32.totalorder %s63, %s64
    %p78 = scmp.eq.s32.totalorder %s16, 1
    %p79 = por %p77, %p78
    %p81 = scmp.ne.s32.totalorder %s64, %s80
    %p82 = scmp.eq.s32.totalorder %s16, 0
    %p83 = por %p81, %p82
    %s84 = ssub.s32 %s18, %s25
    %p85 = scmp.eq.s32.totalorder %s84, 0
    %s87 = sadd.s32 %s86, 1
    %s88 = scalar_select %p85, %s86, %s87
    %p91 = pneg %p85
    %p92 = scmp.eq.s32.totalorder %s10, 1
    %p93 = por %p91, %p92
    %p94 = scmp.ne.s32.totalorder %s86, %s89
    %p95 = scmp.eq.s32.totalorder %s10, 0
    %p96 = por %p94, %p95
    %p97 = scmp.ne.s32.totalorder %s86, %s89
    %p98 = scmp.eq.s32.totalorder %s15, 1
    %p99 = por %p97, %p98
    %p100 = scmp.ne.s32.totalorder %s89, %s90
    %p101 = scmp.eq.s32.totalorder %s15, 0
    %p102 = por %p100, %p101
    %p103 = scmp.ne.s32.totalorder %s89, %s90
    %p104 = scmp.eq.s32.totalorder %s16, 1
    %p105 = por %p103, %p104
    %p107 = scmp.ne.s32.totalorder %s90, %s106
    %p108 = scmp.eq.s32.totalorder %s16, 0
    %p109 = por %p107, %p108
    %s111 = sadd.s32 %s110, 1
    %p114 = scmp.eq.s32.totalorder %s10, 1
    %p115 = scmp.ne.s32.totalorder %s110, %s112
    %p116 = scmp.eq.s32.totalorder %s10, 0
    %p117 = por %p115, %p116
    %p118 = scmp.ne.s32.totalorder %s110, %s112
    %p119 = scmp.eq.s32.totalorder %s15, 1
    %p120 = por %p118, %p119
    %p121 = scmp.ne.s32.totalorder %s112, %s113
    %p122 = scmp.eq.s32.totalorder %s15, 0
    %p123 = por %p121, %p122
    %p124 = scmp.ne.s32.totalorder %s112, %s113
    %p125 = scmp.eq.s32.totalorder %s16, 1
    %p126 = por %p124, %p125
    %p128 = scmp.ne.s32.totalorder %s113, %s127
    %p129 = scmp.eq.s32.totalorder %s16, 0
    %p130 = por %p128, %p129
    %s131 = ssub.s32 %s17, %s29
    %s132 = ssub.s32 %s18, %s25
    %s133 = sor.u32 %s131, %s132
    %p134 = scmp.eq.s32.totalorder %s133, 0
    %s136 = sadd.s32 %s135, 1
    %s137 = scalar_select %p134, %s135, %s136
    %p140 = pneg %p134
    %p141 = scmp.eq.s32.totalorder %s10, 1
    %p142 = por %p140, %p141
    %p143 = scmp.ne.s32.totalorder %s135, %s138
    %p144 = scmp.eq.s32.totalorder %s10, 0
    %p145 = por %p143, %p144
    %p146 = scmp.ne.s32.totalorder %s135, %s138
    %p147 = scmp.eq.s32.totalorder %s15, 1
    %p148 = por %p146, %p147
    %p149 = scmp.ne.s32.totalorder %s138, %s139
    %p150 = scmp.eq.s32.totalorder %s15, 0
    %p151 = por %p149, %p150
    %p152 = scmp.ne.s32.totalorder %s138, %s139
    %p153 = scmp.eq.s32.totalorder %s16, 1
    %p154 = por %p152, %p153
    %p156 = scmp.ne.s32.totalorder %s139, %s155
    %p157 = scmp.eq.s32.totalorder %s16, 0
    %p158 = por %p156, %p157
    %p159 = scmp.le.s32.totalorder 1, %s10
    %p160 = scmp.lt.s32.totalorder %s10, 3
    %p161 = pnand %p159, %p160
    %p162 = pneg %p161
    // Predicated region
    $region9: #{multiscale_tta_forward.7} parent=5 // pred_check
      _
    $region10: #{multiscale_tta_forward.7} parent=5 // pred_check_branch
      %164 = sbr.rel (%p161) target = $region12
    $region11: #{multiscale_tta_forward.7} parent=5 // pred_region
      %s165 = ssub.s32 %s10, 1
      // Predicated region
      $region13: #{multiscale_tta_forward.7} parent=11 // pred_check
        %p166 = pneg %p102
      $region14: #{multiscale_tta_forward.7} parent=11 // pred_check_branch
        %168 = sbr.rel (%p166) target = $region16
      $region15: #{multiscale_tta_forward.7} parent=11 // pred_region
        %s169 = smul.u32 2, %s20
        %p170 = scmp.lt.s32.totalorder %s169, 1
        %s171 = scalar_select %p170, %s169, 1
        %s172 = smul.addr %s171, 8
        %s173 = scalar_lea.vmem %s2, %s172
        %s174 = smul.u32 2, %s20
      $region16: #{multiscale_tta_forward.7} parent=11 // pred_fallthru
        _
      // Predicated region
      $region17: #{multiscale_tta_forward.7} parent=11 // pred_check
        %p175 = pneg %p123
      $region18: #{multiscale_tta_forward.7} parent=11 // pred_check_branch
        %177 = sbr.rel (%p175) target = $region20
      $region19: #{multiscale_tta_forward.7} parent=11 // pred_region
        _
      $region20: #{multiscale_tta_forward.7} parent=11 // pred_fallthru
        _
    $region12: #{multiscale_tta_forward.7} parent=5 // pred_fallthru
      _
    %p178 = scmp.lt.s32.totalorder %s10, 2
    // Predicated region
    $region21: #{multiscale_tta_forward.7} parent=5 // pred_check
      %p179 = pneg %p178
    $region22: #{multiscale_tta_forward.7} parent=5 // pred_check_branch
      %181 = sbr.rel (%p179) target = $region24
    $region23: #{multiscale_tta_forward.7} parent=5 // pred_region
      // Predicated region
      $region25: #{multiscale_tta_forward.7} parent=23 // pred_check
        %p182 = pneg %p44
      $region26: #{multiscale_tta_forward.7} parent=23 // pred_check_branch
        %184 = sbr.rel (%p182) target = $region28
      $region27: #{multiscale_tta_forward.7} parent=23 // pred_region
        %s185 = smul.u32 5, %s17
        %s186 = smul.u32 2, %s18
        %p187 = scmp.lt.s32.totalorder %s185, 9
        %s188 = scalar_select %p187, %s185, 9
        %p189 = scmp.lt.s32.totalorder %s186, 1
        %s190 = scalar_select %p189, %s186, 1
        %s191 = smul.addr %s188, 2
        %s192 = sadd.s32 %s190, %s191
        %s193 = smul.addr %s192, 8
        %s194 = scalar_lea.vmem %s0, %s193
        %s195 = smul.u32 5, %s17
        %s196 = smul.u32 2, %s18
      $region28: #{multiscale_tta_forward.7} parent=23 // pred_fallthru
        _
      // Predicated region
      $region29: #{multiscale_tta_forward.7} parent=23 // pred_check
        %p197 = pneg %p70
      $region30: #{multiscale_tta_forward.7} parent=23 // pred_check_branch
        %199 = sbr.rel (%p197) target = $region32
      $region31: #{multiscale_tta_forward.7} parent=23 // pred_region
        %s200 = smul.u32 5, %s17
        %p201 = scmp.lt.s32.totalorder %s200, 9
        %s202 = scalar_select %p201, %s200, 9
        %s203 = smul.addr %s202, 2
        %s204 = smul.addr %s203, 8
        %s205 = scalar_lea.vmem %s1, %s204
        %s206 = smul.u32 5, %s17
      $region32: #{multiscale_tta_forward.7} parent=23 // pred_fallthru
        _
    $region24: #{multiscale_tta_forward.7} parent=5 // pred_fallthru
      _
    %p207 = scmp.le.s32.totalorder 1, %s10
    %p208 = scmp.lt.s32.totalorder %s10, 3
    %p209 = pnand %p207, %p208
    %p210 = pneg %p209
    // Predicated region
    $region33: #{multiscale_tta_forward.7} parent=5 // pred_check
      _
    $region34: #{multiscale_tta_forward.7} parent=5 // pred_check_branch
      %212 = sbr.rel (%p209) target = $region36
    $region35: #{multiscale_tta_forward.7} parent=5 // pred_region
      %s213 = ssub.s32 %s10, 1
      %s214 = smul.u32 5, %s19
      %s215 = smul.u32 2, %s20
      %p216 = scmp.lt.s32.totalorder %s214, 9
      %s217 = scalar_select %p216, %s214, 9
      %p218 = scmp.lt.s32.totalorder %s215, 1
      %s219 = scalar_select %p218, %s215, 1
      %s220 = smul.addr %s217, 2
      %s221 = sadd.s32 %s219, %s220
      %s222 = smul.addr %s221, 8
      %s223 = scalar_lea.vmem %s0, %s222
      %p224 = pneg %p50
      %p225 = pneg %p47
      %s226 = smul.u32 5, %s19
      %p227 = scmp.lt.s32.totalorder %s226, 9
      %s228 = scalar_select %p227, %s226, 9
      %s229 = smul.addr %s228, 2
      %s230 = smul.addr %s229, 8
      %s231 = scalar_lea.vmem %s1, %s230
      %p232 = pneg %p76
      %p233 = pneg %p73
      %s234 = smul.u32 2, %s20
      %p235 = scmp.lt.s32.totalorder %s234, 1
      %s236 = scalar_select %p235, %s234, 1
      %s237 = smul.addr %s236, 8
      %s238 = scalar_lea.vmem %s2, %s237
      %p239 = pneg %p102
      %p240 = pneg %p99
      %p241 = pneg %p123
      %p242 = pneg %p120
      %p243 = pneg %p151
      %p244 = pneg %p148
      %s245 = smul.u32 5, %s19
      %s246 = smul.u32 2, %s20
      %p247 = scmp.lt.s32.totalorder %s245, 9
      %s248 = scalar_select %p247, %s245, 9
      %p249 = scmp.lt.s32.totalorder %s246, 1
      %s250 = scalar_select %p249, %s246, 1
      %s251 = smul.addr %s248, 2
      %s252 = sadd.s32 %s250, %s251
      %s253 = smul.addr %s252, 8
      %s254 = scalar_lea.vmem %s4, %s253
      %s255 = smul.u32 5, %s19
      %s256 = smul.u32 2, %s20
      %p257 = scmp.lt.s32.totalorder %s255, 9
      %s258 = scalar_select %p257, %s255, 9
      %p259 = scmp.lt.s32.totalorder %s256, 1
      %s260 = scalar_select %p259, %s256, 1
      %s261 = smul.addr %s258, 2
      %s262 = sadd.s32 %s260, %s261
      %s263 = smul.addr %s262, 8
      %s264 = scalar_lea.vmem %s0, %s263
      %s265 = smul.u32 5, %s19
      %s266 = smul.u32 2, %s20
      %s267 = smul.u32 5, %s19
      %p268 = scmp.lt.s32.totalorder %s267, 9
      %s269 = scalar_select %p268, %s267, 9
      %s270 = smul.addr %s269, 2
      %s271 = smul.addr %s270, 8
      %s272 = scalar_lea.vmem %s1, %s271
      %s273 = smul.u32 5, %s19
      %s274 = smul.u32 2, %s20
      %p275 = scmp.lt.s32.totalorder %s274, 1
      %s276 = scalar_select %p275, %s274, 1
      %s277 = smul.addr %s276, 8
      %s278 = scalar_lea.vmem %s2, %s277
      %s279 = smul.u32 2, %s20
      %s280 = smul.u32 5, %s19
      %s281 = smul.u32 2, %s20
      %p282 = scmp.lt.s32.totalorder %s280, 9
      %s283 = scalar_select %p282, %s280, 9
      %p284 = scmp.lt.s32.totalorder %s281, 1
      %s285 = scalar_select %p284, %s281, 1
      %s286 = smul.addr %s283, 2
      %s287 = sadd.s32 %s285, %s286
      %s288 = smul.addr %s287, 8
      %s289 = scalar_lea.vmem %s4, %s288
      %s290 = smul.u32 5, %s19
      %s291 = smul.u32 2, %s20
      %v292 = vld [vmem:[%s278] sm:$0xff]
      %v293 = vld [vmem:[%s278 + $0x8] sm:$0xff]
      %v294 = vld [vmem:[%s3] sm:$0xff]
      %v295 = vld [vmem:[%s3 + $0x8] sm:$0xf]
      %v296 = vld [vmem:[%s272] sm:$0xff]
      %v297 = vld [vmem:[%s272 + $0x8] sm:$0xf]
      %vm298 = vcmask 97280
      %v300 = vsel %vm298, %v292, 0
      %v303 = vsel %vm298, %v293, 0
      %vm305 = vcmask 1043456
      %v307 = vsel %vm305, %v297, 0
      %309 = vmatprep.subr.mxu0 0.0
      %310 = vmatpush1.msra.mxu0 %v296
      %311 = vmatprep.subr.mxu0 0.0
      %312 = vmatpush1.msra.mxu0 %v307
      %313 = vmatprep.subr.mxu0 0.0
      %314 = vmatpush1.msra.mxu0 0.0
      %315 = vmatprep.subr.mxu0 0.0
      %316 = vmatpush1.msra.mxu0 0.0
      %317 = vmatprep.subr.mxu0 0.0
      %318 = vmatpush1.msra.mxu0 0.0
      %319 = vmatprep.subr.mxu0 0.0
      %320 = vmatpush1.msra.mxu0 0.0
      %321 = vmatprep.subr.mxu0 0.0
      %322 = vmatpush1.msra.mxu0 0.0
      %323 = vmatprep.subr.mxu0 0.0
      %324 = vmatpush1.msra.mxu0 0.0
      %325 = vmatprep.subr.mxu0 0.0
      %326 = vmatpush1.msra.mxu0 0.0
      %327 = vmatprep.subr.mxu0 0.0
      %328 = vmatpush1.msra.mxu0 0.0
      %329 = vmatprep.subr.mxu0 0.0
      %330 = vmatpush1.msra.mxu0 0.0
      %331 = vmatprep.subr.mxu0 0.0
      %332 = vmatpush1.msra.mxu0 0.0
      %333 = vmatprep.subr.mxu0 0.0
      %334 = vmatpush1.msra.mxu0 0.0
      %335 = vmatprep.subr.mxu0 0.0
      %336 = vmatpush1.msra.mxu0 0.0
      %337 = vmatprep.subr.mxu0 0.0
      %338 = vmatpush1.msra.mxu0 0.0
      %339 = vmatprep.subr.mxu0 0.0
      %340 = vmatpush1.msra.mxu0 0.0
      %341 = vmatprep.subr.mxu0 0.0
      %342 = vmatpush1.msra.mxu0 0.0
      %343 = vmatprep.subr.mxu0 0.0
      %344 = vmatpush1.msra.mxu0 0.0
      %345 = vmatprep.subr.mxu0 0.0
      %346 = vmatpush1.msra.mxu0 0.0
      %347 = vmatprep.subr.mxu0 0.0
      %348 = vmatpush1.msra.mxu0 0.0
      %349 = vmatprep.subr.mxu0 0.0
      %350 = vmatpush1.msra.mxu0 0.0
      %351 = vmatprep.subr.mxu0 0.0
      %352 = vmatpush1.msra.mxu0 0.0
      %353 = vmatprep.subr.mxu0 0.0
      %354 = vmatpush1.msra.mxu0 0.0
      %355 = vmatprep.subr.mxu0 0.0
      %356 = vmatpush1.msra.mxu0 0.0
      %357 = vmatprep.subr.mxu0 0.0
      %358 = vmatpush1.msra.mxu0 0.0
      %359 = vmatprep.subr.mxu0 0.0
      %360 = vmatpush1.msra.mxu0 0.0
      %361 = vmatprep.subr.mxu0 0.0
      %362 = vmatpush1.msra.mxu0 0.0
      %363 = vmatprep.subr.mxu0 0.0
      %364 = vmatpush1.msra.mxu0 0.0
      %365 = vmatprep.subr.mxu0 0.0
      %366 = vmatpush1.msra.mxu0 0.0
      %367 = vmatprep.subr.mxu0 0.0
      %368 = vmatpush1.msra.mxu0 0.0
      %369 = vmatprep.subr.mxu0 0.0
      %370 = vmatpush1.msra.mxu0 0.0
      %371 = vmatprep.subr.mxu0 0.0
      %372 = vmatpush1.msra.mxu0 0.0
      %373 = vmatprep.mubr.f32.mxu0 0.0
      %374 = vmatmul.mubr.f32.gmra.mrb[0].mxu0 %v300
      %v375 = vpop.f32.mrb[0].mxu0
      %v376 = vadd.f32 0.0, %v375
      %v377 = vpop.f32.mrb[0].mxu0
      %378 = vmatprep.mubr.f32.mxu0 0.0
      %379 = vmatmul.mubr.f32.gmra.mrb[0].mxu0 %v303
      %v380 = vpop.f32.mrb[0].mxu0
      %v381 = vadd.f32 0.0, %v380
      %v382 = vpop.f32.mrb[0].mxu0
      %383 = vdwg.mxu0
      %v385 = vsel %vm298, %v376, 0
      %v388 = vsel %vm298, %v381, 0
      %v391 = vsel %vm305, %v295, 0
      %393 = vmatprep.subr.mxu0 0.0
      %394 = vmatpush1.msra.mxu0 %v294
      %395 = vmatprep.subr.mxu0 0.0
      %396 = vmatpush1.msra.mxu0 %v391
      %397 = vmatprep.subr.mxu0 0.0
      %398 = vmatpush1.msra.mxu0 0.0
      %399 = vmatprep.subr.mxu0 0.0
      %400 = vmatpush1.msra.mxu0 0.0
      %401 = vmatprep.subr.mxu0 0.0
      %402 = vmatpush1.msra.mxu0 0.0
      %403 = vmatprep.subr.mxu0 0.0
      %404 = vmatpush1.msra.mxu0 0.0
      %405 = vmatprep.subr.mxu0 0.0
      %406 = vmatpush1.msra.mxu0 0.0
      %407 = vmatprep.subr.mxu0 0.0
      %408 = vmatpush1.msra.mxu0 0.0
      %409 = vmatprep.subr.mxu0 0.0
      %410 = vmatpush1.msra.mxu0 0.0
      %411 = vmatprep.subr.mxu0 0.0
      %412 = vmatpush1.msra.mxu0 0.0
      %413 = vmatprep.subr.mxu0 0.0
      %414 = vmatpush1.msra.mxu0 0.0
      %415 = vmatprep.subr.mxu0 0.0
      %416 = vmatpush1.msra.mxu0 0.0
      %417 = vmatprep.subr.mxu0 0.0
      %418 = vmatpush1.msra.mxu0 0.0
      %419 = vmatprep.subr.mxu0 0.0
      %420 = vmatpush1.msra.mxu0 0.0
      %421 = vmatprep.subr.mxu0 0.0
      %422 = vmatpush1.msra.mxu0 0.0
      %423 = vmatprep.subr.mxu0 0.0
      %424 = vmatpush1.msra.mxu0 0.0
      %425 = vmatprep.subr.mxu0 0.0
      %426 = vmatpush1.msra.mxu0 0.0
      %427 = vmatprep.subr.mxu0 0.0
      %428 = vmatpush1.msra.mxu0 0.0
      %429 = vmatprep.subr.mxu0 0.0
      %430 = vmatpush1.msra.mxu0 0.0
      %431 = vmatprep.subr.mxu0 0.0
      %432 = vmatpush1.msra.mxu0 0.0
      %433 = vmatprep.subr.mxu0 0.0
      %434 = vmatpush1.msra.mxu0 0.0
      %435 = vmatprep.subr.mxu0 0.0
      %436 = vmatpush1.msra.mxu0 0.0
      %437 = vmatprep.subr.mxu0 0.0
      %438 = vmatpush1.msra.mxu0 0.0
      %439 = vmatprep.subr.mxu0 0.0
      %440 = vmatpush1.msra.mxu0 0.0
      %441 = vmatprep.subr.mxu0 0.0
      %442 = vmatpush1.msra.mxu0 0.0
      %443 = vmatprep.subr.mxu0 0.0
      %444 = vmatpush1.msra.mxu0 0.0
      %445 = vmatprep.subr.mxu0 0.0
      %446 = vmatpush1.msra.mxu0 0.0
      %447 = vmatprep.subr.mxu0 0.0
      %448 = vmatpush1.msra.mxu0 0.0
      %449 = vmatprep.subr.mxu0 0.0
      %450 = vmatpush1.msra.mxu0 0.0
      %451 = vmatprep.subr.mxu0 0.0
      %452 = vmatpush1.msra.mxu0 0.0
      %453 = vmatprep.subr.mxu0 0.0
      %454 = vmatpush1.msra.mxu0 0.0
      %455 = vmatprep.subr.mxu0 0.0
      %456 = vmatpush1.msra.mxu0 0.0
      %457 = vmatprep.mubr.f32.mxu0 0.0
      %458 = vmatmul.mubr.f32.gmra.mrb[0].mxu0 %v385
      %v459 = vpop.f32.mrb[0].mxu0
      %v460 = vadd.f32 0.0, %v459
      %v461 = vpop.f32.mrb[0].mxu0
      %462 = vmatprep.mubr.f32.mxu0 0.0
      %463 = vmatmul.mubr.f32.gmra.mrb[0].mxu0 %v388
      %v464 = vpop.f32.mrb[0].mxu0
      %v465 = vadd.f32 0.0, %v464
      %v466 = vpop.f32.mrb[0].mxu0
      %467 = vdwg.mxu0
      %v468 = vld [vmem:[%s264] sm:$0xff]
      %v469 = vld [vmem:[%s264 + $0x8] sm:$0xff]
      %v470 = vadd.f32 %v468, %v460
      %v471 = vadd.f32 %v469, %v465
      %vm472 = vcmask 130048
      %473 = vst.msk [vmem:[%s289] sm:$0xff] %vm472, %v470
      %474 = vst.msk [vmem:[%s289 + $0x8] sm:$0xff] %vm472, %v471
      %s475 = scalar_lea.vmem %s272, 16
      %v476 = vld [vmem:[%s475] sm:$0xff]
      %v477 = vld [vmem:[%s475 + $0x8] sm:$0xf]
      %v479 = vsel %vm305, %v477, 0
      %481 = vmatprep.subr.mxu0 0.0
      %482 = vmatpush1.msra.mxu0 %v476
      %483 = vmatprep.subr.mxu0 0.0
      %484 = vmatpush1.msra.mxu0 %v479
      %485 = vmatprep.subr.mxu0 0.0
      %486 = vmatpush1.msra.mxu0 0.0
      %487 = vmatprep.subr.mxu0 0.0
      %488 = vmatpush1.msra.mxu0 0.0
      %489 = vmatprep.subr.mxu0 0.0
      %490 = vmatpush1.msra.mxu0 0.0
      %491 = vmatprep.subr.mxu0 0.0
      %492 = vmatpush1.msra.mxu0 0.0
      %493 = vmatprep.subr.mxu0 0.0
      %494 = vmatpush1.msra.mxu0 0.0
      %495 = vmatprep.subr.mxu0 0.0
      %496 = vmatpush1.msra.mxu0 0.0
      %497 = vmatprep.subr.mxu0 0.0
      %498 = vmatpush1.msra.mxu0 0.0
      %499 = vmatprep.subr.mxu0 0.0
      %500 = vmatpush1.msra.mxu0 0.0
      %501 = vmatprep.subr.mxu0 0.0
      %502 = vmatpush1.msra.mxu0 0.0
      %503 = vmatprep.subr.mxu0 0.0
      %504 = vmatpush1.msra.mxu0 0.0
      %505 = vmatprep.subr.mxu0 0.0
      %506 = vmatpush1.msra.mxu0 0.0
      %507 = vmatprep.subr.mxu0 0.0
      %508 = vmatpush1.msra.mxu0 0.0
      %509 = vmatprep.subr.mxu0 0.0
      %510 = vmatpush1.msra.mxu0 0.0
      %511 = vmatprep.subr.mxu0 0.0
      %512 = vmatpush1.msra.mxu0 0.0
      %513 = vmatprep.subr.mxu0 0.0
      %514 = vmatpush1.msra.mxu0 0.0
      %515 = vmatprep.subr.mxu0 0.0
      %516 = vmatpush1.msra.mxu0 0.0
      %517 = vmatprep.subr.mxu0 0.0
      %518 = vmatpush1.msra.mxu0 0.0
      %519 = vmatprep.subr.mxu0 0.0
      %520 = vmatpush1.msra.mxu0 0.0
      %521 = vmatprep.subr.mxu0 0.0
      %522 = vmatpush1.msra.mxu0 0.0
      %523 = vmatprep.subr.mxu0 0.0
      %524 = vmatpush1.msra.mxu0 0.0
      %525 = vmatprep.subr.mxu0 0.0
      %526 = vmatpush1.msra.mxu0 0.0
      %527 = vmatprep.subr.mxu0 0.0
      %528 = vmatpush1.msra.mxu0 0.0
      %529 = vmatprep.subr.mxu0 0.0
      %530 = vmatpush1.msra.mxu0 0.0
      %531 = vmatprep.subr.mxu0 0.0
      %532 = vmatpush1.msra.mxu0 0.0
      %533 = vmatprep.subr.mxu0 0.0
      %534 = vmatpush1.msra.mxu0 0.0
      %535 = vmatprep.subr.mxu0 0.0
      %536 = vmatpush1.msra.mxu0 0.0
      %537 = vmatprep.subr.mxu0 0.0
      %538 = vmatpush1.msra.mxu0 0.0
      %539 = vmatprep.subr.mxu0 0.0
      %540 = vmatpush1.msra.mxu0 0.0
      %541 = vmatprep.subr.mxu0 0.0
      %542 = vmatpush1.msra.mxu0 0.0
      %543 = vmatprep.subr.mxu0 0.0
      %544 = vmatpush1.msra.mxu0 0.0
      %545 = vmatprep.mubr.f32.mxu0 0.0
      %546 = vmatmul.mubr.f32.gmra.mrb[0].mxu0 %v300
      %v547 = vpop.f32.mrb[0].mxu0
      %v548 = vadd.f32 0.0, %v547
      %v549 = vpop.f32.mrb[0].mxu0
      %550 = vmatprep.mubr.f32.mxu0 0.0
      %551 = vmatmul.mubr.f32.gmra.mrb[0].mxu0 %v303
      %v552 = vpop.f32.mrb[0].mxu0
      %v553 = vadd.f32 0.0, %v552
      %v554 = vpop.f32.mrb[0].mxu0
      %555 = vdwg.mxu0
      %v557 = vsel %vm298, %v548, 0
      %v560 = vsel %vm298, %v553, 0
      %562 = vmatprep.subr.mxu0 0.0
      %563 = vmatpush1.msra.mxu0 %v294
      %564 = vmatprep.subr.mxu0 0.0
      %565 = vmatpush1.msra.mxu0 %v391
      %566 = vmatprep.subr.mxu0 0.0
      %567 = vmatpush1.msra.mxu0 0.0
      %568 = vmatprep.subr.mxu0 0.0
      %569 = vmatpush1.msra.mxu0 0.0
      %570 = vmatprep.subr.mxu0 0.0
      %571 = vmatpush1.msra.mxu0 0.0
      %572 = vmatprep.subr.mxu0 0.0
      %573 = vmatpush1.msra.mxu0 0.0
      %574 = vmatprep.subr.mxu0 0.0
      %575 = vmatpush1.msra.mxu0 0.0
      %576 = vmatprep.subr.mxu0 0.0
      %577 = vmatpush1.msra.mxu0 0.0
      %578 = vmatprep.subr.mxu0 0.0
      %579 = vmatpush1.msra.mxu0 0.0
      %580 = vmatprep.subr.mxu0 0.0
      %581 = vmatpush1.msra.mxu0 0.0
      %582 = vmatprep.subr.mxu0 0.0
      %583 = vmatpush1.msra.mxu0 0.0
      %584 = vmatprep.subr.mxu0 0.0
      %585 = vmatpush1.msra.mxu0 0.0
      %586 = vmatprep.subr.mxu0 0.0
      %587 = vmatpush1.msra.mxu0 0.0
      %588 = vmatprep.subr.mxu0 0.0
      %589 = vmatpush1.msra.mxu0 0.0
      %590 = vmatprep.subr.mxu0 0.0
      %591 = vmatpush1.msra.mxu0 0.0
      %592 = vmatprep.subr.mxu0 0.0
      %593 = vmatpush1.msra.mxu0 0.0
      %594 = vmatprep.subr.mxu0 0.0
      %595 = vmatpush1.msra.mxu0 0.0
      %596 = vmatprep.subr.mxu0 0.0
      %597 = vmatpush1.msra.mxu0 0.0
      %598 = vmatprep.subr.mxu0 0.0
      %599 = vmatpush1.msra.mxu0 0.0
      %600 = vmatprep.subr.mxu0 0.0
      %601 = vmatpush1.msra.mxu0 0.0
      %602 = vmatprep.subr.mxu0 0.0
      %603 = vmatpush1.msra.mxu0 0.0
      %604 = vmatprep.subr.mxu0 0.0
      %605 = vmatpush1.msra.mxu0 0.0
      %606 = vmatprep.subr.mxu0 0.0
      %607 = vmatpush1.msra.mxu0 0.0
      %608 = vmatprep.subr.mxu0 0.0
      %609 = vmatpush1.msra.mxu0 0.0
      %610 = vmatprep.subr.mxu0 0.0
      %611 = vmatpush1.msra.mxu0 0.0
      %612 = vmatprep.subr.mxu0 0.0
      %613 = vmatpush1.msra.mxu0 0.0
      %614 = vmatprep.subr.mxu0 0.0
      %615 = vmatpush1.msra.mxu0 0.0
      %616 = vmatprep.subr.mxu0 0.0
      %617 = vmatpush1.msra.mxu0 0.0
      %618 = vmatprep.subr.mxu0 0.0
      %619 = vmatpush1.msra.mxu0 0.0
      %620 = vmatprep.subr.mxu0 0.0
      %621 = vmatpush1.msra.mxu0 0.0
      %622 = vmatprep.subr.mxu0 0.0
      %623 = vmatpush1.msra.mxu0 0.0
      %624 = vmatprep.subr.mxu0 0.0
      %625 = vmatpush1.msra.mxu0 0.0
      %626 = vmatprep.mubr.f32.mxu0 0.0
      %627 = vmatmul.mubr.f32.gmra.mrb[0].mxu0 %v557
      %v628 = vpop.f32.mrb[0].mxu0
      %v629 = vadd.f32 0.0, %v628
      %v630 = vpop.f32.mrb[0].mxu0
      %631 = vmatprep.mubr.f32.mxu0 0.0
      %632 = vmatmul.mubr.f32.gmra.mrb[0].mxu0 %v560
      %v633 = vpop.f32.mrb[0].mxu0
      %v634 = vadd.f32 0.0, %v633
      %v635 = vpop.f32.mrb[0].mxu0
      %636 = vdwg.mxu0
      %s637 = scalar_lea.vmem %s264, 16
      %v638 = vld [vmem:[%s637] sm:$0xff]
      %v639 = vld [vmem:[%s637 + $0x8] sm:$0xff]
      %v640 = vadd.f32 %v638, %v629
      %v641 = vadd.f32 %v639, %v634
      %s642 = scalar_lea.vmem %s289, 16
      %643 = vst.msk [vmem:[%s642] sm:$0xff] %vm472, %v640
      %644 = vst.msk [vmem:[%s642 + $0x8] sm:$0xff] %vm472, %v641
      %s645 = scalar_lea.vmem %s272, 32
      %v646 = vld [vmem:[%s645] sm:$0xff]
      %v647 = vld [vmem:[%s645 + $0x8] sm:$0xf]
      %v649 = vsel %vm305, %v647, 0
      %651 = vmatprep.subr.mxu0 0.0
      %652 = vmatpush1.msra.mxu0 %v646
      %653 = vmatprep.subr.mxu0 0.0
      %654 = vmatpush1.msra.mxu0 %v649
      %655 = vmatprep.subr.mxu0 0.0
      %656 = vmatpush1.msra.mxu0 0.0
      %657 = vmatprep.subr.mxu0 0.0
      %658 = vmatpush1.msra.mxu0 0.0
      %659 = vmatprep.subr.mxu0 0.0
      %660 = vmatpush1.msra.mxu0 0.0
      %661 = vmatprep.subr.mxu0 0.0
      %662 = vmatpush1.msra.mxu0 0.0
      %663 = vmatprep.subr.mxu0 0.0
      %664 = vmatpush1.msra.mxu0 0.0
      %665 = vmatprep.subr.mxu0 0.0
      %666 = vmatpush1.msra.mxu0 0.0
      %667 = vmatprep.subr.mxu0 0.0
      %668 = vmatpush1.msra.mxu0 0.0
      %669 = vmatprep.subr.mxu0 0.0
      %670 = vmatpush1.msra.mxu0 0.0
      %671 = vmatprep.subr.mxu0 0.0
      %672 = vmatpush1.msra.mxu0 0.0
      %673 = vmatprep.subr.mxu0 0.0
      %674 = vmatpush1.msra.mxu0 0.0
      %675 = vmatprep.subr.mxu0 0.0
      %676 = vmatpush1.msra.mxu0 0.0
      %677 = vmatprep.subr.mxu0 0.0
      %678 = vmatpush1.msra.mxu0 0.0
      %679 = vmatprep.subr.mxu0 0.0
      %680 = vmatpush1.msra.mxu0 0.0
      %681 = vmatprep.subr.mxu0 0.0
      %682 = vmatpush1.msra.mxu0 0.0
      %683 = vmatprep.subr.mxu0 0.0
      %684 = vmatpush1.msra.mxu0 0.0
      %685 = vmatprep.subr.mxu0 0.0
      %686 = vmatpush1.msra.mxu0 0.0
      %687 = vmatprep.subr.mxu0 0.0
      %688 = vmatpush1.msra.mxu0 0.0
      %689 = vmatprep.subr.mxu0 0.0
      %690 = vmatpush1.msra.mxu0 0.0
      %691 = vmatprep.subr.mxu0 0.0
      %692 = vmatpush1.msra.mxu0 0.0
      %693 = vmatprep.subr.mxu0 0.0
      %694 = vmatpush1.msra.mxu0 0.0
      %695 = vmatprep.subr.mxu0 0.0
      %696 = vmatpush1.msra.mxu0 0.0
      %697 = vmatprep.subr.mxu0 0.0
      %698 = vmatpush1.msra.mxu0 0.0
      %699 = vmatprep.subr.mxu0 0.0
      %700 = vmatpush1.msra.mxu0 0.0
      %701 = vmatprep.subr.mxu0 0.0
      %702 = vmatpush1.msra.mxu0 0.0
      %703 = vmatprep.subr.mxu0 0.0
      %704 = vmatpush1.msra.mxu0 0.0
      %705 = vmatprep.subr.mxu0 0.0
      %706 = vmatpush1.msra.mxu0 0.0
      %707 = vmatprep.subr.mxu0 0.0
      %708 = vmatpush1.msra.mxu0 0.0
      %709 = vmatprep.subr.mxu0 0.0
      %710 = vmatpush1.msra.mxu0 0.0
      %711 = vmatprep.subr.mxu0 0.0
      %712 = vmatpush1.msra.mxu0 0.0
      %713 = vmatprep.subr.mxu0 0.0
      %714 = vmatpush1.msra.mxu0 0.0
      %715 = vmatprep.mubr.f32.mxu0 0.0
      %716 = vmatmul.mubr.f32.gmra.mrb[0].mxu0 %v300
      %v717 = vpop.f32.mrb[0].mxu0
      %v718 = vadd.f32 0.0, %v717
      %v719 = vpop.f32.mrb[0].mxu0
      %720 = vmatprep.mubr.f32.mxu0 0.0
      %721 = vmatmul.mubr.f32.gmra.mrb[0].mxu0 %v303
      %v722 = vpop.f32.mrb[0].mxu0
      %v723 = vadd.f32 0.0, %v722
      %v724 = vpop.f32.mrb[0].mxu0
      %725 = vdwg.mxu0
      %v727 = vsel %vm298, %v718, 0
      %v730 = vsel %vm298, %v723, 0
      %732 = vmatprep.subr.mxu0 0.0
      %733 = vmatpush1.msra.mxu0 %v294
      %734 = vmatprep.subr.mxu0 0.0
      %735 = vmatpush1.msra.mxu0 %v391
      %736 = vmatprep.subr.mxu0 0.0
      %737 = vmatpush1.msra.mxu0 0.0
      %738 = vmatprep.subr.mxu0 0.0
      %739 = vmatpush1.msra.mxu0 0.0
      %740 = vmatprep.subr.mxu0 0.0
      %741 = vmatpush1.msra.mxu0 0.0
      %742 = vmatprep.subr.mxu0 0.0
      %743 = vmatpush1.msra.mxu0 0.0
      %744 = vmatprep.subr.mxu0 0.0
      %745 = vmatpush1.msra.mxu0 0.0
      %746 = vmatprep.subr.mxu0 0.0
      %747 = vmatpush1.msra.mxu0 0.0
      %748 = vmatprep.subr.mxu0 0.0
      %749 = vmatpush1.msra.mxu0 0.0
      %750 = vmatprep.subr.mxu0 0.0
      %751 = vmatpush1.msra.mxu0 0.0
      %752 = vmatprep.subr.mxu0 0.0
      %753 = vmatpush1.msra.mxu0 0.0
      %754 = vmatprep.subr.mxu0 0.0
      %755 = vmatpush1.msra.mxu0 0.0
      %756 = vmatprep.subr.mxu0 0.0
      %757 = vmatpush1.msra.mxu0 0.0
      %758 = vmatprep.subr.mxu0 0.0
      %759 = vmatpush1.msra.mxu0 0.0
      %760 = vmatprep.subr.mxu0 0.0
      %761 = vmatpush1.msra.mxu0 0.0
      %762 = vmatprep.subr.mxu0 0.0
      %763 = vmatpush1.msra.mxu0 0.0
      %764 = vmatprep.subr.mxu0 0.0
      %765 = vmatpush1.msra.mxu0 0.0
      %766 = vmatprep.subr.mxu0 0.0
      %767 = vmatpush1.msra.mxu0 0.0
      %768 = vmatprep.subr.mxu0 0.0
      %769 = vmatpush1.msra.mxu0 0.0
      %770 = vmatprep.subr.mxu0 0.0
      %771 = vmatpush1.msra.mxu0 0.0
      %772 = vmatprep.subr.mxu0 0.0
      %773 = vmatpush1.msra.mxu0 0.0
      %774 = vmatprep.subr.mxu0 0.0
      %775 = vmatpush1.msra.mxu0 0.0
      %776 = vmatprep.subr.mxu0 0.0
      %777 = vmatpush1.msra.mxu0 0.0
      %778 = vmatprep.subr.mxu0 0.0
      %779 = vmatpush1.msra.mxu0 0.0
      %780 = vmatprep.subr.mxu0 0.0
      %781 = vmatpush1.msra.mxu0 0.0
      %782 = vmatprep.subr.mxu0 0.0
      %783 = vmatpush1.msra.mxu0 0.0
      %784 = vmatprep.subr.mxu0 0.0
      %785 = vmatpush1.msra.mxu0 0.0
      %786 = vmatprep.subr.mxu0 0.0
      %787 = vmatpush1.msra.mxu0 0.0
      %788 = vmatprep.subr.mxu0 0.0
      %789 = vmatpush1.msra.mxu0 0.0
      %790 = vmatprep.subr.mxu0 0.0
      %791 = vmatpush1.msra.mxu0 0.0
      %792 = vmatprep.subr.mxu0 0.0
      %793 = vmatpush1.msra.mxu0 0.0
      %794 = vmatprep.subr.mxu0 0.0
      %795 = vmatpush1.msra.mxu0 0.0
      %796 = vmatprep.mubr.f32.mxu0 0.0
      %797 = vmatmul.mubr.f32.gmra.mrb[0].mxu0 %v727
      %v798 = vpop.f32.mrb[0].mxu0
      %v799 = vadd.f32 0.0, %v798
      %v800 = vpop.f32.mrb[0].mxu0
      %801 = vmatprep.mubr.f32.mxu0 0.0
      %802 = vmatmul.mubr.f32.gmra.mrb[0].mxu0 %v730
      %v803 = vpop.f32.mrb[0].mxu0
      %v804 = vadd.f32 0.0, %v803
      %v805 = vpop.f32.mrb[0].mxu0
      %806 = vdwg.mxu0
      %s807 = scalar_lea.vmem %s264, 32
      %v808 = vld [vmem:[%s807] sm:$0xff]
      %v809 = vld [vmem:[%s807 + $0x8] sm:$0xff]
      %v810 = vadd.f32 %v808, %v799
      %v811 = vadd.f32 %v809, %v804
      %s812 = scalar_lea.vmem %s289, 32
      %813 = vst.msk [vmem:[%s812] sm:$0xff] %vm472, %v810
      %814 = vst.msk [vmem:[%s812 + $0x8] sm:$0xff] %vm472, %v811
      %s815 = scalar_lea.vmem %s272, 48
      %v816 = vld [vmem:[%s815] sm:$0xff]
      %v817 = vld [vmem:[%s815 + $0x8] sm:$0xf]
      %v819 = vsel %vm305, %v817, 0
      %821 = vmatprep.subr.mxu0 0.0
      %822 = vmatpush1.msra.mxu0 %v816
      %823 = vmatprep.subr.mxu0 0.0
      %824 = vmatpush1.msra.mxu0 %v819
      %825 = vmatprep.subr.mxu0 0.0
      %826 = vmatpush1.msra.mxu0 0.0
      %827 = vmatprep.subr.mxu0 0.0
      %828 = vmatpush1.msra.mxu0 0.0
      %829 = vmatprep.subr.mxu0 0.0
      %830 = vmatpush1.msra.mxu0 0.0
      %831 = vmatprep.subr.mxu0 0.0
      %832 = vmatpush1.msra.mxu0 0.0
      %833 = vmatprep.subr.mxu0 0.0
      %834 = vmatpush1.msra.mxu0 0.0
      %835 = vmatprep.subr.mxu0 0.0
      %836 = vmatpush1.msra.mxu0 0.0
      %837 = vmatprep.subr.mxu0 0.0
      %838 = vmatpush1.msra.mxu0 0.0
      %839 = vmatprep.subr.mxu0 0.0
      %840 = vmatpush1.msra.mxu0 0.0
      %841 = vmatprep.subr.mxu0 0.0
      %842 = vmatpush1.msra.mxu0 0.0
      %843 = vmatprep.subr.mxu0 0.0
      %844 = vmatpush1.msra.mxu0 0.0
      %845 = vmatprep.subr.mxu0 0.0
      %846 = vmatpush1.msra.mxu0 0.0
      %847 = vmatprep.subr.mxu0 0.0
      %848 = vmatpush1.msra.mxu0 0.0
      %849 = vmatprep.subr.mxu0 0.0
      %850 = vmatpush1.msra.mxu0 0.0
      %851 = vmatprep.subr.mxu0 0.0
      %852 = vmatpush1.msra.mxu0 0.0
      %853 = vmatprep.subr.mxu0 0.0
      %854 = vmatpush1.msra.mxu0 0.0
      %855 = vmatprep.subr.mxu0 0.0
      %856 = vmatpush1.msra.mxu0 0.0
      %857 = vmatprep.subr.mxu0 0.0
      %858 = vmatpush1.msra.mxu0 0.0
      %859 = vmatprep.subr.mxu0 0.0
      %860 = vmatpush1.msra.mxu0 0.0
      %861 = vmatprep.subr.mxu0 0.0
      %862 = vmatpush1.msra.mxu0 0.0
      %863 = vmatprep.subr.mxu0 0.0
      %864 = vmatpush1.msra.mxu0 0.0
      %865 = vmatprep.subr.mxu0 0.0
      %866 = vmatpush1.msra.mxu0 0.0
      %867 = vmatprep.subr.mxu0 0.0
      %868 = vmatpush1.msra.mxu0 0.0
      %869 = vmatprep.subr.mxu0 0.0
      %870 = vmatpush1.msra.mxu0 0.0
      %871 = vmatprep.subr.mxu0 0.0
      %872 = vmatpush1.msra.mxu0 0.0
      %873 = vmatprep.subr.mxu0 0.0
      %874 = vmatpush1.msra.mxu0 0.0
      %875 = vmatprep.subr.mxu0 0.0
      %876 = vmatpush1.msra.mxu0 0.0
      %877 = vmatprep.subr.mxu0 0.0
      %878 = vmatpush1.msra.mxu0 0.0
      %879 = vmatprep.subr.mxu0 0.0
      %880 = vmatpush1.msra.mxu0 0.0
      %881 = vmatprep.subr.mxu0 0.0
      %882 = vmatpush1.msra.mxu0 0.0
      %883 = vmatprep.subr.mxu0 0.0
      %884 = vmatpush1.msra.mxu0 0.0
      %885 = vmatprep.mubr.f32.mxu0 0.0
      %886 = vmatmul.mubr.f32.gmra.mrb[0].mxu0 %v300
      %v887 = vpop.f32.mrb[0].mxu0
      %v888 = vadd.f32 0.0, %v887
      %v889 = vpop.f32.mrb[0].mxu0
      %890 = vmatprep.mubr.f32.mxu0 0.0
      %891 = vmatmul.mubr.f32.gmra.mrb[0].mxu0 %v303
      %v892 = vpop.f32.mrb[0].mxu0
      %v893 = vadd.f32 0.0, %v892
      %v894 = vpop.f32.mrb[0].mxu0
      %895 = vdwg.mxu0
      %v897 = vsel %vm298, %v888, 0
      %v900 = vsel %vm298, %v893, 0
      %902 = vmatprep.subr.mxu0 0.0
      %903 = vmatpush1.msra.mxu0 %v294
      %904 = vmatprep.subr.mxu0 0.0
      %905 = vmatpush1.msra.mxu0 %v391
      %906 = vmatprep.subr.mxu0 0.0
      %907 = vmatpush1.msra.mxu0 0.0
      %908 = vmatprep.subr.mxu0 0.0
      %909 = vmatpush1.msra.mxu0 0.0
      %910 = vmatprep.subr.mxu0 0.0
      %911 = vmatpush1.msra.mxu0 0.0
      %912 = vmatprep.subr.mxu0 0.0
      %913 = vmatpush1.msra.mxu0 0.0
      %914 = vmatprep.subr.mxu0 0.0
      %915 = vmatpush1.msra.mxu0 0.0
      %916 = vmatprep.subr.mxu0 0.0
      %917 = vmatpush1.msra.mxu0 0.0
      %918 = vmatprep.subr.mxu0 0.0
      %919 = vmatpush1.msra.mxu0 0.0
      %920 = vmatprep.subr.mxu0 0.0
      %921 = vmatpush1.msra.mxu0 0.0
      %922 = vmatprep.subr.mxu0 0.0
      %923 = vmatpush1.msra.mxu0 0.0
      %924 = vmatprep.subr.mxu0 0.0
      %925 = vmatpush1.msra.mxu0 0.0
      %926 = vmatprep.subr.mxu0 0.0
      %927 = vmatpush1.msra.mxu0 0.0
      %928 = vmatprep.subr.mxu0 0.0
      %929 = vmatpush1.msra.mxu0 0.0
      %930 = vmatprep.subr.mxu0 0.0
      %931 = vmatpush1.msra.mxu0 0.0
      %932 = vmatprep.subr.mxu0 0.0
      %933 = vmatpush1.msra.mxu0 0.0
      %934 = vmatprep.subr.mxu0 0.0
      %935 = vmatpush1.msra.mxu0 0.0
      %936 = vmatprep.subr.mxu0 0.0
      %937 = vmatpush1.msra.mxu0 0.0
      %938 = vmatprep.subr.mxu0 0.0
      %939 = vmatpush1.msra.mxu0 0.0
      %940 = vmatprep.subr.mxu0 0.0
      %941 = vmatpush1.msra.mxu0 0.0
      %942 = vmatprep.subr.mxu0 0.0
      %943 = vmatpush1.msra.mxu0 0.0
      %944 = vmatprep.subr.mxu0 0.0
      %945 = vmatpush1.msra.mxu0 0.0
      %946 = vmatprep.subr.mxu0 0.0
      %947 = vmatpush1.msra.mxu0 0.0
      %948 = vmatprep.subr.mxu0 0.0
      %949 = vmatpush1.msra.mxu0 0.0
      %950 = vmatprep.subr.mxu0 0.0
      %951 = vmatpush1.msra.mxu0 0.0
      %952 = vmatprep.subr.mxu0 0.0
      %953 = vmatpush1.msra.mxu0 0.0
      %954 = vmatprep.subr.mxu0 0.0
      %955 = vmatpush1.msra.mxu0 0.0
      %956 = vmatprep.subr.mxu0 0.0
      %957 = vmatpush1.msra.mxu0 0.0
      %958 = vmatprep.subr.mxu0 0.0
      %959 = vmatpush1.msra.mxu0 0.0
      %960 = vmatprep.subr.mxu0 0.0
      %961 = vmatpush1.msra.mxu0 0.0
      %962 = vmatprep.subr.mxu0 0.0
      %963 = vmatpush1.msra.mxu0 0.0
      %964 = vmatprep.subr.mxu0 0.0
      %965 = vmatpush1.msra.mxu0 0.0
      %966 = vmatprep.mubr.f32.mxu0 0.0
      %967 = vmatmul.mubr.f32.gmra.mrb[0].mxu0 %v897
      %v968 = vpop.f32.mrb[0].mxu0
      %v969 = vadd.f32 0.0, %v968
      %v970 = vpop.f32.mrb[0].mxu0
      %971 = vmatprep.mubr.f32.mxu0 0.0
      %972 = vmatmul.mubr.f32.gmra.mrb[0].mxu0 %v900
      %v973 = vpop.f32.mrb[0].mxu0
      %v974 = vadd.f32 0.0, %v973
      %v975 = vpop.f32.mrb[0].mxu0
      %976 = vdwg.mxu0
      %s977 = scalar_lea.vmem %s264, 48
      %v978 = vld [vmem:[%s977] sm:$0xff]
      %v979 = vld [vmem:[%s977 + $0x8] sm:$0xff]
      %v980 = vadd.f32 %v978, %v969
      %v981 = vadd.f32 %v979, %v974
      %s982 = scalar_lea.vmem %s289, 48
      %983 = vst.msk [vmem:[%s982] sm:$0xff] %vm472, %v980
      %984 = vst.msk [vmem:[%s982 + $0x8] sm:$0xff] %vm472, %v981
      %s985 = scalar_lea.vmem %s272, 64
      %v986 = vld [vmem:[%s985] sm:$0xff]
      %v987 = vld [vmem:[%s985 + $0x8] sm:$0xf]
      %v989 = vsel %vm305, %v987, 0
      %991 = vmatprep.subr.mxu0 0.0
      %992 = vmatpush1.msra.mxu0 %v986
      %993 = vmatprep.subr.mxu0 0.0
      %994 = vmatpush1.msra.mxu0 %v989
      %995 = vmatprep.subr.mxu0 0.0
      %996 = vmatpush1.msra.mxu0 0.0
      %997 = vmatprep.subr.mxu0 0.0
      %998 = vmatpush1.msra.mxu0 0.0
      %999 = vmatprep.subr.mxu0 0.0
      %1000 = vmatpush1.msra.mxu0 0.0
      %1001 = vmatprep.subr.mxu0 0.0
      %1002 = vmatpush1.msra.mxu0 0.0
      %1003 = vmatprep.subr.mxu0 0.0
      %1004 = vmatpush1.msra.mxu0 0.0
      %1005 = vmatprep.subr.mxu0 0.0
      %1006 = vmatpush1.msra.mxu0 0.0
      %1007 = vmatprep.subr.mxu0 0.0
      %1008 = vmatpush1.msra.mxu0 0.0
      %1009 = vmatprep.subr.mxu0 0.0
      %1010 = vmatpush1.msra.mxu0 0.0
      %1011 = vmatprep.subr.mxu0 0.0
      %1012 = vmatpush1.msra.mxu0 0.0
      %1013 = vmatprep.subr.mxu0 0.0
      %1014 = vmatpush1.msra.mxu0 0.0
      %1015 = vmatprep.subr.mxu0 0.0
      %1016 = vmatpush1.msra.mxu0 0.0
      %1017 = vmatprep.subr.mxu0 0.0
      %1018 = vmatpush1.msra.mxu0 0.0
      %1019 = vmatprep.subr.mxu0 0.0
      %1020 = vmatpush1.msra.mxu0 0.0
      %1021 = vmatprep.subr.mxu0 0.0
      %1022 = vmatpush1.msra.mxu0 0.0
      %1023 = vmatprep.subr.mxu0 0.0
      %1024 = vmatpush1.msra.mxu0 0.0
      %1025 = vmatprep.subr.mxu0 0.0
      %1026 = vmatpush1.msra.mxu0 0.0
      %1027 = vmatprep.subr.mxu0 0.0
      %1028 = vmatpush1.msra.mxu0 0.0
      %1029 = vmatprep.subr.mxu0 0.0
      %1030 = vmatpush1.msra.mxu0 0.0
      %1031 = vmatprep.subr.mxu0 0.0
      %1032 = vmatpush1.msra.mxu0 0.0
      %1033 = vmatprep.subr.mxu0 0.0
      %1034 = vmatpush1.msra.mxu0 0.0
      %1035 = vmatprep.subr.mxu0 0.0
      %1036 = vmatpush1.msra.mxu0 0.0
      %1037 = vmatprep.subr.mxu0 0.0
      %1038 = vmatpush1.msra.mxu0 0.0
      %1039 = vmatprep.subr.mxu0 0.0
      %1040 = vmatpush1.msra.mxu0 0.0
      %1041 = vmatprep.subr.mxu0 0.0
      %1042 = vmatpush1.msra.mxu0 0.0
      %1043 = vmatprep.subr.mxu0 0.0
      %1044 = vmatpush1.msra.mxu0 0.0
      %1045 = vmatprep.subr.mxu0 0.0
      %1046 = vmatpush1.msra.mxu0 0.0
      %1047 = vmatprep.subr.mxu0 0.0
      %1048 = vmatpush1.msra.mxu0 0.0
      %1049 = vmatprep.subr.mxu0 0.0
      %1050 = vmatpush1.msra.mxu0 0.0
      %1051 = vmatprep.subr.mxu0 0.0
      %1052 = vmatpush1.msra.mxu0 0.0
      %1053 = vmatprep.subr.mxu0 0.0
      %1054 = vmatpush1.msra.mxu0 0.0
      %1055 = vmatprep.mubr.f32.mxu0 0.0
      %1056 = vmatmul.mubr.f32.gmra.mrb[0].mxu0 %v300
      %v1057 = vpop.f32.mrb[0].mxu0
      %v1058 = vadd.f32 0.0, %v1057
      %v1059 = vpop.f32.mrb[0].mxu0
      %1060 = vmatprep.mubr.f32.mxu0 0.0
      %1061 = vmatmul.mubr.f32.gmra.mrb[0].mxu0 %v303
      %v1062 = vpop.f32.mrb[0].mxu0
      %v1063 = vadd.f32 0.0, %v1062
      %v1064 = vpop.f32.mrb[0].mxu0
      %1065 = vdwg.mxu0
      %v1067 = vsel %vm298, %v1058, 0
      %v1070 = vsel %vm298, %v1063, 0
      %1072 = vmatprep.subr.mxu0 0.0
      %1073 = vmatpush1.msra.mxu0 %v294
      %1074 = vmatprep.subr.mxu0 0.0
      %1075 = vmatpush1.msra.mxu0 %v391
      %1076 = vmatprep.subr.mxu0 0.0
      %1077 = vmatpush1.msra.mxu0 0.0
      %1078 = vmatprep.subr.mxu0 0.0
      %1079 = vmatpush1.msra.mxu0 0.0
      %1080 = vmatprep.subr.mxu0 0.0
      %1081 = vmatpush1.msra.mxu0 0.0
      %1082 = vmatprep.subr.mxu0 0.0
      %1083 = vmatpush1.msra.mxu0 0.0
      %1084 = vmatprep.subr.mxu0 0.0
      %1085 = vmatpush1.msra.mxu0 0.0
      %1086 = vmatprep.subr.mxu0 0.0
      %1087 = vmatpush1.msra.mxu0 0.0
      %1088 = vmatprep.subr.mxu0 0.0
      %1089 = vmatpush1.msra.mxu0 0.0
      %1090 = vmatprep.subr.mxu0 0.0
      %1091 = vmatpush1.msra.mxu0 0.0
      %1092 = vmatprep.subr.mxu0 0.0
      %1093 = vmatpush1.msra.mxu0 0.0
      %1094 = vmatprep.subr.mxu0 0.0
      %1095 = vmatpush1.msra.mxu0 0.0
      %1096 = vmatprep.subr.mxu0 0.0
      %1097 = vmatpush1.msra.mxu0 0.0
      %1098 = vmatprep.subr.mxu0 0.0
      %1099 = vmatpush1.msra.mxu0 0.0
      %1100 = vmatprep.subr.mxu0 0.0
      %1101 = vmatpush1.msra.mxu0 0.0
      %1102 = vmatprep.subr.mxu0 0.0
      %1103 = vmatpush1.msra.mxu0 0.0
      %1104 = vmatprep.subr.mxu0 0.0
      %1105 = vmatpush1.msra.mxu0 0.0
      %1106 = vmatprep.subr.mxu0 0.0
      %1107 = vmatpush1.msra.mxu0 0.0
      %1108 = vmatprep.subr.mxu0 0.0
      %1109 = vmatpush1.msra.mxu0 0.0
      %1110 = vmatprep.subr.mxu0 0.0
      %1111 = vmatpush1.msra.mxu0 0.0
      %1112 = vmatprep.subr.mxu0 0.0
      %1113 = vmatpush1.msra.mxu0 0.0
      %1114 = vmatprep.subr.mxu0 0.0
      %1115 = vmatpush1.msra.mxu0 0.0
      %1116 = vmatprep.subr.mxu0 0.0
      %1117 = vmatpush1.msra.mxu0 0.0
      %1118 = vmatprep.subr.mxu0 0.0
      %1119 = vmatpush1.msra.mxu0 0.0
      %1120 = vmatprep.subr.mxu0 0.0
      %1121 = vmatpush1.msra.mxu0 0.0
      %1122 = vmatprep.subr.mxu0 0.0
      %1123 = vmatpush1.msra.mxu0 0.0
      %1124 = vmatprep.subr.mxu0 0.0
      %1125 = vmatpush1.msra.mxu0 0.0
      %1126 = vmatprep.subr.mxu0 0.0
      %1127 = vmatpush1.msra.mxu0 0.0
      %1128 = vmatprep.subr.mxu0 0.0
      %1129 = vmatpush1.msra.mxu0 0.0
      %1130 = vmatprep.subr.mxu0 0.0
      %1131 = vmatpush1.msra.mxu0 0.0
      %1132 = vmatprep.subr.mxu0 0.0
      %1133 = vmatpush1.msra.mxu0 0.0
      %1134 = vmatprep.subr.mxu0 0.0
      %1135 = vmatpush1.msra.mxu0 0.0
      %1136 = vmatprep.mubr.f32.mxu0 0.0
      %1137 = vmatmul.mubr.f32.gmra.mrb[0].mxu0 %v1067
      %v1138 = vpop.f32.mrb[0].mxu0
      %v1139 = vadd.f32 0.0, %v1138
      %v1140 = vpop.f32.mrb[0].mxu0
      %1141 = vmatprep.mubr.f32.mxu0 0.0
      %1142 = vmatmul.mubr.f32.gmra.mrb[0].mxu0 %v1070
      %v1143 = vpop.f32.mrb[0].mxu0
      %v1144 = vadd.f32 0.0, %v1143
      %v1145 = vpop.f32.mrb[0].mxu0
      %1146 = vdwg.mxu0
      %s1147 = scalar_lea.vmem %s264, 64
      %v1148 = vld [vmem:[%s1147] sm:$0xff]
      %v1149 = vld [vmem:[%s1147 + $0x8] sm:$0xff]
      %v1150 = vadd.f32 %v1148, %v1139
      %v1151 = vadd.f32 %v1149, %v1144
      %s1152 = scalar_lea.vmem %s289, 64
      %1153 = vst.msk [vmem:[%s1152] sm:$0xff] %vm472, %v1150
      %1154 = vst.msk [vmem:[%s1152 + $0x8] sm:$0xff] %vm472, %v1151
      %s1155 = smul.u32 5, %s19
      %s1156 = smul.u32 2, %s20
      %p1157 = scmp.lt.s32.totalorder %s1155, 9
      %s1158 = scalar_select %p1157, %s1155, 9
      %p1159 = scmp.lt.s32.totalorder %s1156, 1
      %s1160 = scalar_select %p1159, %s1156, 1
      %s1161 = smul.addr %s1158, 2
      %s1162 = sadd.s32 %s1160, %s1161
      %s1163 = smul.addr %s1162, 8
      %s1164 = scalar_lea.vmem %s4, %s1163
      // Predicated region
      $region37: #{multiscale_tta_forward.7} parent=35 // pred_check
        %p1165 = pneg %p148
      $region38: #{multiscale_tta_forward.7} parent=35 // pred_check_branch
        %1167 = sbr.rel (%p1165) target = $region40
      $region39: #{multiscale_tta_forward.7} parent=35 // pred_region
        %s1168 = smul.u32 5, %s19
        %s1169 = smul.u32 2, %s20
      $region40: #{multiscale_tta_forward.7} parent=35 // pred_fallthru
        _
    $region36: #{multiscale_tta_forward.7} parent=5 // pred_fallthru
      _
    %p1170 = scmp.le.s32.totalorder 2, %s10
    // Predicated region
    $region41: #{multiscale_tta_forward.7} parent=5 // pred_check
      %p1171 = pneg %p1170
    $region42: #{multiscale_tta_forward.7} parent=5 // pred_check_branch
      %1173 = sbr.rel (%p1171) target = $region44
    $region43: #{multiscale_tta_forward.7} parent=5 // pred_region
      %s1174 = ssub.s32 %s10, 2
      // Predicated region
      $region45: #{multiscale_tta_forward.7} parent=43 // pred_check
        %p1175 = pneg %p154
      $region46: #{multiscale_tta_forward.7} parent=43 // pred_check_branch
        %1177 = sbr.rel (%p1175) target = $region48
      $region47: #{multiscale_tta_forward.7} parent=43 // pred_region
        %s1178 = smul.u32 5, %s21
        %s1179 = smul.u32 2, %s22
        %p1180 = scmp.lt.s32.totalorder %s1178, 9
        %s1181 = scalar_select %p1180, %s1178, 9
        %p1182 = scmp.lt.s32.totalorder %s1179, 1
        %s1183 = scalar_select %p1182, %s1179, 1
        %s1184 = smul.addr %s1181, 2
        %s1185 = sadd.s32 %s1183, %s1184
        %s1186 = smul.addr %s1185, 8
        %s1187 = scalar_lea.vmem %s4, %s1186
      $region48: #{multiscale_tta_forward.7} parent=43 // pred_fallthru
        _
    $region44: #{multiscale_tta_forward.7} parent=5 // pred_fallthru
      _
  $region6: #{multiscale_tta_forward.7} parent=0 // loop_footer
    %s14 = sadd.s32 1, %s10
  $region7: #{multiscale_tta_forward.7} parent=0 // loop_footer_branch
    %9 = sbr.rel target = $region3
  $region8: #{multiscale_tta_forward.7} parent=0 // loop_exit
    _

// kernel: multiscale_tta_forward.6
$region0: #{multiscale_tta_forward.6}
  #allocation0 [shape = 'u32[]', space=smem, size = 0x4, offset = 0x4, fixed_abs, tag = 'smem constant byte address 0x4 - core index']
  #allocation1 [shape = 'u32[144,128]{1,0:T(1,128)}', space=vmem, size = 0x12000, scoped, tag = 'internal scratch']
  %s0 = inlined_call_operand.vmem [shape: f32[2,4,16,16], index: 0, kind: input, shape index: {}]
  %s1 = inlined_call_operand.vmem [shape: f32[12,16], index: 1, kind: input, shape index: {}]
  %s2 = inlined_call_operand.vmem [shape: f32[16,12], index: 2, kind: input, shape index: {}]
  %s3 = inlined_call_operand.vmem [shape: f32[5,4], index: 3, kind: input, shape index: {}]
  %s4 = inlined_call_operand.vmem [shape: f32[5], index: 4, kind: input, shape index: {}]
  %s5 = inlined_call_operand.vmem [shape: f32[2,5,12,12], index: 5, kind: output, shape index: {}]
  %s6 = sld [smem:[#allocation0]]
  $region61: #{multiscale_tta_forward.6} parent=0
    _
  %s8 = ssub.s32 1, %s6
  %s9 = scalar_select 0, %s8, %s6
  $region1: #{multiscale_tta_forward.6} parent=0
    #allocation2 [shape = 'u8[4096]{0}', space=smem, size = 0x1000, scoped, tag = 'input window, operand 3, single buffered']
    #allocation3 [shape = 's32[2]{0}', space=sflag, size = 0x8, scoped, tag = 'scoped memory for multiscale_tta_forward.6']
    #allocation4 [shape = 'u8[512]{0}', space=smem, size = 0x200, scoped, tag = 'input window, operand 4, single buffered']
    #allocation5 [shape = 's32[1]{0}', space=sflag, size = 0x4, scoped, tag = 'scoped memory for multiscale_tta_forward.6']
    %10 = vsyncpa [#allocation3], 0
    %11 = vsyncpa [#allocation5], 0
    loop: start=0, step=1, limit=4
    $region2: #{multiscale_tta_forward.6} parent=1 // loop_pre_header
      _
    $region3: #{multiscale_tta_forward.6} parent=1 // loop_header
      %s13 = sphi 0, %s17
      %p14 = scmp.ge.s32.totalorder %s13, 4
      %s20 = sphi 0, %s32
      %s21 = sphi 0, %s28
      %s22 = sphi 0, %s20
      %s23 = sphi 0, %s21
      %s24 = sphi 0, %s22
      %s25 = sphi 0, %s23
      %s35 = sphi 0, %s37
      %s38 = sphi 0, %s35
      %s39 = sphi 0, %s38
      %s55 = sphi 0, %s39
      %s61 = sphi 0, %s63
      %s64 = sphi 0, %s61
      %s65 = sphi 0, %s64
      %s81 = sphi 0, %s65
      %s85 = sphi 0, %s85
      %s87 = sphi 0, %s85
      %s88 = sphi 0, %s87
      %s102 = sphi 0, %s88
      %s106 = sphi 0, %s106
      %s108 = sphi 0, %s106
      %s109 = sphi 0, %s108
      %s123 = sphi 0, %s109
      %s127 = sphi 0, %s127
      %s129 = sphi 0, %s127
      %s130 = sphi 0, %s129
      %s144 = sphi 0, %s130
      %s152 = sphi 0, %s154
      %s155 = sphi 0, %s152
      %s156 = sphi 0, %s155
      %s172 = sphi 0, %s156
    $region4: #{multiscale_tta_forward.6} parent=1 // loop_header_branch
      %16 = sbr.rel (%p14) target = $region8
    $region5: #{multiscale_tta_forward.6} parent=1 // loop_body
      %s18 = ssub.s32 %s13, 1
      %s19 = ssub.s32 %s13, 2
      %s26 = sadd.s32 1, %s21
      %p27 = scmp.ge.s32.totalorder %s26, 1
      %s28 = scalar_select %p27, 0, %s26
      %s29 = sadd.s32 1, %s20
      %s30 = scalar_select %p27, %s29, %s20
      %p31 = scmp.ge.s32.totalorder %s30, 2
      %s32 = scalar_select %p31, 0, %s30
      %s33 = ssub.s32 %s20, %s32
      %p34 = scmp.eq.s32.totalorder %s33, 0
      %s36 = sadd.s32 %s35, 1
      %s37 = scalar_select %p34, %s35, %s36
      %p40 = pneg %p34
      %p41 = scmp.eq.s32.totalorder %s13, 1
      %p42 = por %p40, %p41
      %p43 = scmp.ne.s32.totalorder %s35, %s38
      %p44 = scmp.eq.s32.totalorder %s13, 0
      %p45 = por %p43, %p44
      %p46 = scmp.ne.s32.totalorder %s35, %s38
      %p47 = scmp.eq.s32.totalorder %s18, 1
      %p48 = por %p46, %p47
      %p49 = scmp.ne.s32.totalorder %s38, %s39
      %p50 = scmp.eq.s32.totalorder %s18, 0
      %p51 = por %p49, %p50
      %p52 = scmp.ne.s32.totalorder %s38, %s39
      %p53 = scmp.eq.s32.totalorder %s19, 1
      %p54 = por %p52, %p53
      %p56 = scmp.ne.s32.totalorder %s39, %s55
      %p57 = scmp.eq.s32.totalorder %s19, 0
      %p58 = por %p56, %p57
      %s59 = ssub.s32 %s21, %s28
      %p60 = scmp.eq.s32.totalorder %s59, 0
      %s62 = sadd.s32 %s61, 1
      %s63 = scalar_select %p60, %s61, %s62
      %p66 = pneg %p60
      %p67 = scmp.eq.s32.totalorder %s13, 1
      %p68 = por %p66, %p67
      %p69 = scmp.ne.s32.totalorder %s61, %s64
      %p70 = scmp.eq.s32.totalorder %s13, 0
      %p71 = por %p69, %p70
      %p72 = scmp.ne.s32.totalorder %s61, %s64
      %p73 = scmp.eq.s32.totalorder %s18, 1
      %p74 = por %p72, %p73
      %p75 = scmp.ne.s32.totalorder %s64, %s65
      %p76 = scmp.eq.s32.totalorder %s18, 0
      %p77 = por %p75, %p76
      %p78 = scmp.ne.s32.totalorder %s64, %s65
      %p79 = scmp.eq.s32.totalorder %s19, 1
      %p80 = por %p78, %p79
      %p82 = scmp.ne.s32.totalorder %s65, %s81
      %p83 = scmp.eq.s32.totalorder %s19, 0
      %p84 = por %p82, %p83
      %s86 = sadd.s32 %s85, 1
      %p89 = scmp.eq.s32.totalorder %s13, 1
      %p90 = scmp.ne.s32.totalorder %s85, %s87
      %p91 = scmp.eq.s32.totalorder %s13, 0
      %p92 = por %p90, %p91
      %p93 = scmp.ne.s32.totalorder %s85, %s87
      %p94 = scmp.eq.s32.totalorder %s18, 1
      %p95 = por %p93, %p94
      %p96 = scmp.ne.s32.totalorder %s87, %s88
      %p97 = scmp.eq.s32.totalorder %s18, 0
      %p98 = por %p96, %p97
      %p99 = scmp.ne.s32.totalorder %s87, %s88
      %p100 = scmp.eq.s32.totalorder %s19, 1
      %p101 = por %p99, %p100
      %p103 = scmp.ne.s32.totalorder %s88, %s102
      %p104 = scmp.eq.s32.totalorder %s19, 0
      %p105 = por %p103, %p104
      %s107 = sadd.s32 %s106, 1
      %p110 = scmp.eq.s32.totalorder %s13, 1
      %p111 = scmp.ne.s32.totalorder %s106, %s108
      %p112 = scmp.eq.s32.totalorder %s13, 0
      %p113 = por %p111, %p112
      %p114 = scmp.ne.s32.totalorder %s106, %s108
      %p115 = scmp.eq.s32.totalorder %s18, 1
      %p116 = por %p114, %p115
      %p117 = scmp.ne.s32.totalorder %s108, %s109
      %p118 = scmp.eq.s32.totalorder %s18, 0
      %p119 = por %p117, %p118
      %p120 = scmp.ne.s32.totalorder %s108, %s109
      %p121 = scmp.eq.s32.totalorder %s19, 1
      %p122 = por %p120, %p121
      %p124 = scmp.ne.s32.totalorder %s109, %s123
      %p125 = scmp.eq.s32.totalorder %s19, 0
      %p126 = por %p124, %p125
      %s128 = sadd.s32 %s127, 1
      %p131 = scmp.eq.s32.totalorder %s13, 1
      %p132 = scmp.ne.s32.totalorder %s127, %s129
      %p133 = scmp.eq.s32.totalorder %s13, 0
      %p134 = por %p132, %p133
      %p135 = scmp.ne.s32.totalorder %s127, %s129
      %p136 = scmp.eq.s32.totalorder %s18, 1
      %p137 = por %p135, %p136
      %p138 = scmp.ne.s32.totalorder %s129, %s130
      %p139 = scmp.eq.s32.totalorder %s18, 0
      %p140 = por %p138, %p139
      %p141 = scmp.ne.s32.totalorder %s129, %s130
      %p142 = scmp.eq.s32.totalorder %s19, 1
      %p143 = por %p141, %p142
      %p145 = scmp.ne.s32.totalorder %s130, %s144
      %p146 = scmp.eq.s32.totalorder %s19, 0
      %p147 = por %p145, %p146
      %s148 = ssub.s32 %s20, %s32
      %s149 = ssub.s32 %s21, %s28
      %s150 = sor.u32 %s148, %s149
      %p151 = scmp.eq.s32.totalorder %s150, 0
      %s153 = sadd.s32 %s152, 1
      %s154 = scalar_select %p151, %s152, %s153
      %p157 = pneg %p151
      %p158 = scmp.eq.s32.totalorder %s13, 1
      %p159 = por %p157, %p158
      %p160 = scmp.ne.s32.totalorder %s152, %s155
      %p161 = scmp.eq.s32.totalorder %s13, 0
      %p162 = por %p160, %p161
      %p163 = scmp.ne.s32.totalorder %s152, %s155
      %p164 = scmp.eq.s32.totalorder %s18, 1
      %p165 = por %p163, %p164
      %p166 = scmp.ne.s32.totalorder %s155, %s156
      %p167 = scmp.eq.s32.totalorder %s18, 0
      %p168 = por %p166, %p167
      %p169 = scmp.ne.s32.totalorder %s155, %s156
      %p170 = scmp.eq.s32.totalorder %s19, 1
      %p171 = por %p169, %p170
      %p173 = scmp.ne.s32.totalorder %s156, %s172
      %p174 = scmp.eq.s32.totalorder %s19, 0
      %p175 = por %p173, %p174
      %p176 = scmp.le.s32.totalorder 1, %s13
      %p177 = scmp.lt.s32.totalorder %s13, 3
      %p178 = pnand %p176, %p177
      %p179 = pneg %p178
      // Predicated region
      $region9: #{multiscale_tta_forward.6} parent=5 // pred_check
        _
      $region10: #{multiscale_tta_forward.6} parent=5 // pred_check_branch
        %181 = sbr.rel (%p178) target = $region12
      $region11: #{multiscale_tta_forward.6} parent=5 // pred_region
        %s182 = ssub.s32 %s13, 1
        // Predicated region
        $region13: #{multiscale_tta_forward.6} parent=11 // pred_check
          %p183 = pneg %p77
        $region14: #{multiscale_tta_forward.6} parent=11 // pred_check_branch
          %185 = sbr.rel (%p183) target = $region16
        $region15: #{multiscale_tta_forward.6} parent=11 // pred_region
          %s186 = smul.u32 2, %s23
          %p187 = scmp.lt.s32.totalorder %s186, 1
          %s188 = scalar_select %p187, %s186, 1
          %s189 = smul.addr %s188, 8
          %s190 = scalar_lea.vmem %s1, %s189
          %s191 = smul.u32 2, %s23
        $region16: #{multiscale_tta_forward.6} parent=11 // pred_fallthru
          _
        // Predicated region
        $region17: #{multiscale_tta_forward.6} parent=11 // pred_check
          %p192 = pneg %p98
        $region18: #{multiscale_tta_forward.6} parent=11 // pred_check_branch
          %194 = sbr.rel (%p192) target = $region20
        $region19: #{multiscale_tta_forward.6} parent=11 // pred_region
          _
        $region20: #{multiscale_tta_forward.6} parent=11 // pred_fallthru
          _
        // Predicated region
        $region21: #{multiscale_tta_forward.6} parent=11 // pred_check
          %p195 = pneg %p119
        $region22: #{multiscale_tta_forward.6} parent=11 // pred_check_branch
          %197 = sbr.rel (%p195) target = $region24
        $region23: #{multiscale_tta_forward.6} parent=11 // pred_region
          %s199 = ssub.s32 128, 128
          %200 = vsyncadd [#allocation3], %s199
          %s202 = sshll.u32 %s3, 4
          %s203 = int_to_ptr.vmem [resolvable:$true] %s202
          %205 = dma.vmem_to_smem %s203, 128, [#allocation2], [#allocation3]
        $region24: #{multiscale_tta_forward.6} parent=11 // pred_fallthru
          _
        // Predicated region
        $region25: #{multiscale_tta_forward.6} parent=11 // pred_check
          %p206 = pneg %p140
        $region26: #{multiscale_tta_forward.6} parent=11 // pred_check_branch
          %208 = sbr.rel (%p206) target = $region28
        $region27: #{multiscale_tta_forward.6} parent=11 // pred_region
          %s210 = ssub.s32 16, 16
          %211 = vsyncadd [#allocation5], %s210
          %s213 = sshll.u32 %s4, 4
          %s214 = int_to_ptr.vmem [resolvable:$true] %s213
          %216 = dma.vmem_to_smem %s214, 16, [#allocation4], [#allocation5]
        $region28: #{multiscale_tta_forward.6} parent=11 // pred_fallthru
          _
      $region12: #{multiscale_tta_forward.6} parent=5 // pred_fallthru
        _
      %p217 = scmp.lt.s32.totalorder %s13, 2
      // Predicated region
      $region29: #{multiscale_tta_forward.6} parent=5 // pred_check
        %p218 = pneg %p217
      $region30: #{multiscale_tta_forward.6} parent=5 // pred_check_branch
        %220 = sbr.rel (%p218) target = $region32
      $region31: #{multiscale_tta_forward.6} parent=5 // pred_region
        // Predicated region
        $region33: #{multiscale_tta_forward.6} parent=31 // pred_check
          %p221 = pneg %p45
        $region34: #{multiscale_tta_forward.6} parent=31 // pred_check_branch
          %223 = sbr.rel (%p221) target = $region36
        $region35: #{multiscale_tta_forward.6} parent=31 // pred_region
          %p224 = scmp.lt.s32.totalorder %s20, 1
          %s225 = scalar_select %p224, %s20, 1
          %s226 = smul.addr %s225, 8
          %s227 = smul.addr %s226, 8
          %s228 = scalar_lea.vmem %s0, %s227
        $region36: #{multiscale_tta_forward.6} parent=31 // pred_fallthru
          _
      $region32: #{multiscale_tta_forward.6} parent=5 // pred_fallthru
        _
      %p229 = scmp.le.s32.totalorder 1, %s13
      %p230 = scmp.lt.s32.totalorder %s13, 3
      %p231 = pnand %p229, %p230
      %p232 = pneg %p231
      // Predicated region
      $region37: #{multiscale_tta_forward.6} parent=5 // pred_check
        _
      $region38: #{multiscale_tta_forward.6} parent=5 // pred_check_branch
        %234 = sbr.rel (%p231) target = $region40
      $region39: #{multiscale_tta_forward.6} parent=5 // pred_region
        %s235 = ssub.s32 %s13, 1
        // Predicated region
        $region41: #{multiscale_tta_forward.6} parent=39 // pred_check
          %p236 = pneg %p119
        $region42: #{multiscale_tta_forward.6} parent=39 // pred_check_branch
          %238 = sbr.rel (%p236) target = $region44
        $region43: #{multiscale_tta_forward.6} parent=39 // pred_region
          %239 = dma.done [#allocation3], 128
        $region44: #{multiscale_tta_forward.6} parent=39 // pred_fallthru
          _
        // Predicated region
        $region45: #{multiscale_tta_forward.6} parent=39 // pred_check
          %p240 = pneg %p140
        $region46: #{multiscale_tta_forward.6} parent=39 // pred_check_branch
          %242 = sbr.rel (%p240) target = $region48
        $region47: #{multiscale_tta_forward.6} parent=39 // pred_region
          %243 = dma.done [#allocation5], 16
        $region48: #{multiscale_tta_forward.6} parent=39 // pred_fallthru
          _
        %244 = sfence
        %p245 = scmp.lt.s32.totalorder %s22, 1
        %s246 = scalar_select %p245, %s22, 1
        %s247 = smul.addr %s246, 8
        %s248 = smul.addr %s247, 8
        %s249 = scalar_lea.vmem %s0, %s248
        %p250 = pneg %p51
        %p251 = pneg %p48
        %s252 = smul.u32 2, %s23
        %p253 = scmp.lt.s32.totalorder %s252, 1
        %s254 = scalar_select %p253, %s252, 1
        %s255 = smul.addr %s254, 8
        %s256 = scalar_lea.vmem %s1, %s255
        %p257 = pneg %p77
        %p258 = pneg %p74
        %p259 = pneg %p98
        %p260 = pneg %p95
        %p261 = pneg %p119
        %p262 = pneg %p116
        %p263 = pneg %p140
        %p264 = pneg %p137
        %p265 = pneg %p168
        %p266 = pneg %p165
        %s267 = smul.u32 2, %s23
        %p268 = scmp.lt.s32.totalorder %s22, 1
        %s269 = scalar_select %p268, %s22, 1
        %p270 = scmp.lt.s32.totalorder %s267, 1
        %s271 = scalar_select %p270, %s267, 1
        %s272 = smul.addr %s269, 10
        %s273 = sadd.s32 %s271, %s272
        %s274 = smul.addr %s273, 8
        %s275 = scalar_lea.vmem %s5, %s274
        %p276 = scmp.lt.s32.totalorder %s22, 1
        %s277 = scalar_select %p276, %s22, 1
        %s278 = smul.addr %s277, 8
        %s279 = smul.addr %s278, 8
        %s280 = scalar_lea.vmem %s0, %s279
        %s281 = smul.u32 2, %s23
        %p282 = scmp.lt.s32.totalorder %s281, 1
        %s283 = scalar_select %p282, %s281, 1
        %s284 = smul.addr %s283, 8
        %s285 = scalar_lea.vmem %s1, %s284
        %s286 = smul.u32 2, %s23
        %s287 = smul.u32 2, %s23
        %p288 = scmp.lt.s32.totalorder %s22, 1
        %s289 = scalar_select %p288, %s22, 1
        %p290 = scmp.lt.s32.totalorder %s287, 1
        %s291 = scalar_select %p290, %s287, 1
        %s292 = smul.addr %s289, 10
        %s293 = sadd.s32 %s291, %s292
        %s294 = smul.addr %s293, 8
        %s295 = scalar_lea.vmem %s5, %s294
        %s296 = smul.u32 2, %s23
        %v297 = vld [vmem:[%s285] sm:$0xff]
        %v298 = vld [vmem:[%s285 + $0x8] sm:$0xf]
        %v299 = vld [vmem:[%s2] sm:$0xff]
        %v300 = vld [vmem:[%s2 + $0x8] sm:$0xff]
        %v301 = vld [vmem:[%s280] sm:$0xff]
        %v302 = vld [vmem:[%s280 + $0x8] sm:$0xff]
        %vm303 = vcmask 130048
        %v305 = vsel %vm303, %v297, 0
        %v308 = vsel %vm303, %v298, 0
        %310 = vmatprep.subr.mxu0 0.0
        %311 = vmatpush1.msra.mxu0 %v301
        %312 = vmatprep.subr.mxu0 0.0
        %313 = vmatpush1.msra.mxu0 %v302
        %314 = vmatprep.subr.mxu0 0.0
        %315 = vmatpush1.msra.mxu0 0.0
        %316 = vmatprep.subr.mxu0 0.0
        %317 = vmatpush1.msra.mxu0 0.0
        %318 = vmatprep.subr.mxu0 0.0
        %319 = vmatpush1.msra.mxu0 0.0
        %320 = vmatprep.subr.mxu0 0.0
        %321 = vmatpush1.msra.mxu0 0.0
        %322 = vmatprep.subr.mxu0 0.0
        %323 = vmatpush1.msra.mxu0 0.0
        %324 = vmatprep.subr.mxu0 0.0
        %325 = vmatpush1.msra.mxu0 0.0
        %326 = vmatprep.subr.mxu0 0.0
        %327 = vmatpush1.msra.mxu0 0.0
        %328 = vmatprep.subr.mxu0 0.0
        %329 = vmatpush1.msra.mxu0 0.0
        %330 = vmatprep.subr.mxu0 0.0
        %331 = vmatpush1.msra.mxu0 0.0
        %332 = vmatprep.subr.mxu0 0.0
        %333 = vmatpush1.msra.mxu0 0.0
        %334 = vmatprep.subr.mxu0 0.0
        %335 = vmatpush1.msra.mxu0 0.0
        %336 = vmatprep.subr.mxu0 0.0
        %337 = vmatpush1.msra.mxu0 0.0
        %338 = vmatprep.subr.mxu0 0.0
        %339 = vmatpush1.msra.mxu0 0.0
        %340 = vmatprep.subr.mxu0 0.0
        %341 = vmatpush1.msra.mxu0 0.0
        %342 = vmatprep.subr.mxu0 0.0
        %343 = vmatpush1.msra.mxu0 0.0
        %344 = vmatprep.subr.mxu0 0.0
        %345 = vmatpush1.msra.mxu0 0.0
        %346 = vmatprep.subr.mxu0 0.0
        %347 = vmatpush1.msra.mxu0 0.0
        %348 = vmatprep.subr.mxu0 0.0
        %349 = vmatpush1.msra.mxu0 0.0
        %350 = vmatprep.subr.mxu0 0.0
        %351 = vmatpush1.msra.mxu0 0.0
        %352 = vmatprep.subr.mxu0 0.0
        %353 = vmatpush1.msra.mxu0 0.0
        %354 = vmatprep.subr.mxu0 0.0
        %355 = vmatpush1.msra.mxu0 0.0
        %356 = vmatprep.subr.mxu0 0.0
        %357 = vmatpush1.msra.mxu0 0.0
        %358 = vmatprep.subr.mxu0 0.0
        %359 = vmatpush1.msra.mxu0 0.0
        %360 = vmatprep.subr.mxu0 0.0
        %361 = vmatpush1.msra.mxu0 0.0
        %362 = vmatprep.subr.mxu0 0.0
        %363 = vmatpush1.msra.mxu0 0.0
        %364 = vmatprep.subr.mxu0 0.0
        %365 = vmatpush1.msra.mxu0 0.0
        %366 = vmatprep.subr.mxu0 0.0
        %367 = vmatpush1.msra.mxu0 0.0
        %368 = vmatprep.subr.mxu0 0.0
        %369 = vmatpush1.msra.mxu0 0.0
        %370 = vmatprep.subr.mxu0 0.0
        %371 = vmatpush1.msra.mxu0 0.0
        %372 = vmatprep.subr.mxu0 0.0
        %373 = vmatpush1.msra.mxu0 0.0
        %374 = vmatprep.mubr.f32.mxu0 0.0
        %375 = vmatmul.mubr.f32.gmra.mrb[0].mxu0 %v305
        %v376 = vpop.f32.mrb[0].mxu0
        %v377 = vadd.f32 0.0, %v376
        %v378 = vpop.f32.mrb[0].mxu0
        %379 = vmatprep.mubr.f32.mxu0 0.0
        %380 = vmatmul.mubr.f32.gmra.mrb[0].mxu0 %v308
        %v381 = vpop.f32.mrb[0].mxu0
        %v382 = vadd.f32 0.0, %v381
        %v383 = vpop.f32.mrb[0].mxu0
        %384 = vdwg.mxu0
        %v386 = vsel %vm303, %v377, 0
        %v389 = vsel %vm303, %v382, 0
        %391 = vmatprep.subr.mxu0 0.0
        %392 = vmatpush1.msra.mxu0 %v299
        %393 = vmatprep.subr.mxu0 0.0
        %394 = vmatpush1.msra.mxu0 %v300
        %395 = vmatprep.subr.mxu0 0.0
        %396 = vmatpush1.msra.mxu0 0.0
        %397 = vmatprep.subr.mxu0 0.0
        %398 = vmatpush1.msra.mxu0 0.0
        %399 = vmatprep.subr.mxu0 0.0
        %400 = vmatpush1.msra.mxu0 0.0
        %401 = vmatprep.subr.mxu0 0.0
        %402 = vmatpush1.msra.mxu0 0.0
        %403 = vmatprep.subr.mxu0 0.0
        %404 = vmatpush1.msra.mxu0 0.0
        %405 = vmatprep.subr.mxu0 0.0
        %406 = vmatpush1.msra.mxu0 0.0
        %407 = vmatprep.subr.mxu0 0.0
        %408 = vmatpush1.msra.mxu0 0.0
        %409 = vmatprep.subr.mxu0 0.0
        %410 = vmatpush1.msra.mxu0 0.0
        %411 = vmatprep.subr.mxu0 0.0
        %412 = vmatpush1.msra.mxu0 0.0
        %413 = vmatprep.subr.mxu0 0.0
        %414 = vmatpush1.msra.mxu0 0.0
        %415 = vmatprep.subr.mxu0 0.0
        %416 = vmatpush1.msra.mxu0 0.0
        %417 = vmatprep.subr.mxu0 0.0
        %418 = vmatpush1.msra.mxu0 0.0
        %419 = vmatprep.subr.mxu0 0.0
        %420 = vmatpush1.msra.mxu0 0.0
        %421 = vmatprep.subr.mxu0 0.0
        %422 = vmatpush1.msra.mxu0 0.0
        %423 = vmatprep.subr.mxu0 0.0
        %424 = vmatpush1.msra.mxu0 0.0
        %425 = vmatprep.subr.mxu0 0.0
        %426 = vmatpush1.msra.mxu0 0.0
        %427 = vmatprep.subr.mxu0 0.0
        %428 = vmatpush1.msra.mxu0 0.0
        %429 = vmatprep.subr.mxu0 0.0
        %430 = vmatpush1.msra.mxu0 0.0
        %431 = vmatprep.subr.mxu0 0.0
        %432 = vmatpush1.msra.mxu0 0.0
        %433 = vmatprep.subr.mxu0 0.0
        %434 = vmatpush1.msra.mxu0 0.0
        %435 = vmatprep.subr.mxu0 0.0
        %436 = vmatpush1.msra.mxu0 0.0
        %437 = vmatprep.subr.mxu0 0.0
        %438 = vmatpush1.msra.mxu0 0.0
        %439 = vmatprep.subr.mxu0 0.0
        %440 = vmatpush1.msra.mxu0 0.0
        %441 = vmatprep.subr.mxu0 0.0
        %442 = vmatpush1.msra.mxu0 0.0
        %443 = vmatprep.subr.mxu0 0.0
        %444 = vmatpush1.msra.mxu0 0.0
        %445 = vmatprep.subr.mxu0 0.0
        %446 = vmatpush1.msra.mxu0 0.0
        %447 = vmatprep.subr.mxu0 0.0
        %448 = vmatpush1.msra.mxu0 0.0
        %449 = vmatprep.subr.mxu0 0.0
        %450 = vmatpush1.msra.mxu0 0.0
        %451 = vmatprep.subr.mxu0 0.0
        %452 = vmatpush1.msra.mxu0 0.0
        %453 = vmatprep.subr.mxu0 0.0
        %454 = vmatpush1.msra.mxu0 0.0
        %455 = vmatprep.mubr.f32.mxu0 0.0
        %456 = vmatmul.mubr.f32.gmra.mrb[0].mxu0 %v386
        %v457 = vpop.f32.mrb[0].mxu0
        %v458 = vadd.f32 0.0, %v457
        %v459 = vpop.f32.mrb[0].mxu0
        %460 = vmatprep.mubr.f32.mxu0 0.0
        %461 = vmatmul.mubr.f32.gmra.mrb[0].mxu0 %v389
        %v462 = vpop.f32.mrb[0].mxu0
        %v463 = vadd.f32 0.0, %v462
        %v464 = vpop.f32.mrb[0].mxu0
        %465 = vdwg.mxu0
        %s466 = scalar_lea.vmem %s280, 16
        %v467 = vld [vmem:[%s466] sm:$0xff]
        %v468 = vld [vmem:[%s466 + $0x8] sm:$0xff]
        %469 = vmatprep.subr.mxu0 0.0
        %470 = vmatpush1.msra.mxu0 %v467
        %471 = vmatprep.subr.mxu0 0.0
        %472 = vmatpush1.msra.mxu0 %v468
        %473 = vmatprep.subr.mxu0 0.0
        %474 = vmatpush1.msra.mxu0 0.0
        %475 = vmatprep.subr.mxu0 0.0
        %476 = vmatpush1.msra.mxu0 0.0
        %477 = vmatprep.subr.mxu0 0.0
        %478 = vmatpush1.msra.mxu0 0.0
        %479 = vmatprep.subr.mxu0 0.0
        %480 = vmatpush1.msra.mxu0 0.0
        %481 = vmatprep.subr.mxu0 0.0
        %482 = vmatpush1.msra.mxu0 0.0
        %483 = vmatprep.subr.mxu0 0.0
        %484 = vmatpush1.msra.mxu0 0.0
        %485 = vmatprep.subr.mxu0 0.0
        %486 = vmatpush1.msra.mxu0 0.0
        %487 = vmatprep.subr.mxu0 0.0
        %488 = vmatpush1.msra.mxu0 0.0
        %489 = vmatprep.subr.mxu0 0.0
        %490 = vmatpush1.msra.mxu0 0.0
        %491 = vmatprep.subr.mxu0 0.0
        %492 = vmatpush1.msra.mxu0 0.0
        %493 = vmatprep.subr.mxu0 0.0
        %494 = vmatpush1.msra.mxu0 0.0
        %495 = vmatprep.subr.mxu0 0.0
        %496 = vmatpush1.msra.mxu0 0.0
        %497 = vmatprep.subr.mxu0 0.0
        %498 = vmatpush1.msra.mxu0 0.0
        %499 = vmatprep.subr.mxu0 0.0
        %500 = vmatpush1.msra.mxu0 0.0
        %501 = vmatprep.subr.mxu0 0.0
        %502 = vmatpush1.msra.mxu0 0.0
        %503 = vmatprep.subr.mxu0 0.0
        %504 = vmatpush1.msra.mxu0 0.0
        %505 = vmatprep.subr.mxu0 0.0
        %506 = vmatpush1.msra.mxu0 0.0
        %507 = vmatprep.subr.mxu0 0.0
        %508 = vmatpush1.msra.mxu0 0.0
        %509 = vmatprep.subr.mxu0 0.0
        %510 = vmatpush1.msra.mxu0 0.0
        %511 = vmatprep.subr.mxu0 0.0
        %512 = vmatpush1.msra.mxu0 0.0
        %513 = vmatprep.subr.mxu0 0.0
        %514 = vmatpush1.msra.mxu0 0.0
        %515 = vmatprep.subr.mxu0 0.0
        %516 = vmatpush1.msra.mxu0 0.0
        %517 = vmatprep.subr.mxu0 0.0
        %518 = vmatpush1.msra.mxu0 0.0
        %519 = vmatprep.subr.mxu0 0.0
        %520 = vmatpush1.msra.mxu0 0.0
        %521 = vmatprep.subr.mxu0 0.0
        %522 = vmatpush1.msra.mxu0 0.0
        %523 = vmatprep.subr.mxu0 0.0
        %524 = vmatpush1.msra.mxu0 0.0
        %525 = vmatprep.subr.mxu0 0.0
        %526 = vmatpush1.msra.mxu0 0.0
        %527 = vmatprep.subr.mxu0 0.0
        %528 = vmatpush1.msra.mxu0 0.0
        %529 = vmatprep.subr.mxu0 0.0
        %530 = vmatpush1.msra.mxu0 0.0
        %531 = vmatprep.subr.mxu0 0.0
        %532 = vmatpush1.msra.mxu0 0.0
        %533 = vmatprep.mubr.f32.mxu0 0.0
        %534 = vmatmul.mubr.f32.gmra.mrb[0].mxu0 %v305
        %v535 = vpop.f32.mrb[0].mxu0
        %v536 = vadd.f32 0.0, %v535
        %v537 = vpop.f32.mrb[0].mxu0
        %538 = vmatprep.mubr.f32.mxu0 0.0
        %539 = vmatmul.mubr.f32.gmra.mrb[0].mxu0 %v308
        %v540 = vpop.f32.mrb[0].mxu0
        %v541 = vadd.f32 0.0, %v540
        %v542 = vpop.f32.mrb[0].mxu0
        %543 = vdwg.mxu0
        %v545 = vsel %vm303, %v536, 0
        %v548 = vsel %vm303, %v541, 0
        %550 = vmatprep.subr.mxu0 0.0
        %551 = vmatpush1.msra.mxu0 %v299
        %552 = vmatprep.subr.mxu0 0.0
        %553 = vmatpush1.msra.mxu0 %v300
        %554 = vmatprep.subr.mxu0 0.0
        %555 = vmatpush1.msra.mxu0 0.0
        %556 = vmatprep.subr.mxu0 0.0
        %557 = vmatpush1.msra.mxu0 0.0
        %558 = vmatprep.subr.mxu0 0.0
        %559 = vmatpush1.msra.mxu0 0.0
        %560 = vmatprep.subr.mxu0 0.0
        %561 = vmatpush1.msra.mxu0 0.0
        %562 = vmatprep.subr.mxu0 0.0
        %563 = vmatpush1.msra.mxu0 0.0
        %564 = vmatprep.subr.mxu0 0.0
        %565 = vmatpush1.msra.mxu0 0.0
        %566 = vmatprep.subr.mxu0 0.0
        %567 = vmatpush1.msra.mxu0 0.0
        %568 = vmatprep.subr.mxu0 0.0
        %569 = vmatpush1.msra.mxu0 0.0
        %570 = vmatprep.subr.mxu0 0.0
        %571 = vmatpush1.msra.mxu0 0.0
        %572 = vmatprep.subr.mxu0 0.0
        %573 = vmatpush1.msra.mxu0 0.0
        %574 = vmatprep.subr.mxu0 0.0
        %575 = vmatpush1.msra.mxu0 0.0
        %576 = vmatprep.subr.mxu0 0.0
        %577 = vmatpush1.msra.mxu0 0.0
        %578 = vmatprep.subr.mxu0 0.0
        %579 = vmatpush1.msra.mxu0 0.0
        %580 = vmatprep.subr.mxu0 0.0
        %581 = vmatpush1.msra.mxu0 0.0
        %582 = vmatprep.subr.mxu0 0.0
        %583 = vmatpush1.msra.mxu0 0.0
        %584 = vmatprep.subr.mxu0 0.0
        %585 = vmatpush1.msra.mxu0 0.0
        %586 = vmatprep.subr.mxu0 0.0
        %587 = vmatpush1.msra.mxu0 0.0
        %588 = vmatprep.subr.mxu0 0.0
        %589 = vmatpush1.msra.mxu0 0.0
        %590 = vmatprep.subr.mxu0 0.0
        %591 = vmatpush1.msra.mxu0 0.0
        %592 = vmatprep.subr.mxu0 0.0
        %593 = vmatpush1.msra.mxu0 0.0
        %594 = vmatprep.subr.mxu0 0.0
        %595 = vmatpush1.msra.mxu0 0.0
        %596 = vmatprep.subr.mxu0 0.0
        %597 = vmatpush1.msra.mxu0 0.0
        %598 = vmatprep.subr.mxu0 0.0
        %599 = vmatpush1.msra.mxu0 0.0
        %600 = vmatprep.subr.mxu0 0.0
        %601 = vmatpush1.msra.mxu0 0.0
        %602 = vmatprep.subr.mxu0 0.0
        %603 = vmatpush1.msra.mxu0 0.0
        %604 = vmatprep.subr.mxu0 0.0
        %605 = vmatpush1.msra.mxu0 0.0
        %606 = vmatprep.subr.mxu0 0.0
        %607 = vmatpush1.msra.mxu0 0.0
        %608 = vmatprep.subr.mxu0 0.0
        %609 = vmatpush1.msra.mxu0 0.0
        %610 = vmatprep.subr.mxu0 0.0
        %611 = vmatpush1.msra.mxu0 0.0
        %612 = vmatprep.subr.mxu0 0.0
        %613 = vmatpush1.msra.mxu0 0.0
        %614 = vmatprep.mubr.f32.mxu0 0.0
        %615 = vmatmul.mubr.f32.gmra.mrb[0].mxu0 %v545
        %v616 = vpop.f32.mrb[0].mxu0
        %v617 = vadd.f32 0.0, %v616
        %v618 = vpop.f32.mrb[0].mxu0
        %619 = vmatprep.mubr.f32.mxu0 0.0
        %620 = vmatmul.mubr.f32.gmra.mrb[0].mxu0 %v548
        %v621 = vpop.f32.mrb[0].mxu0
        %v622 = vadd.f32 0.0, %v621
        %v623 = vpop.f32.mrb[0].mxu0
        %624 = vdwg.mxu0
        %s625 = scalar_lea.vmem %s280, 32
        %v626 = vld [vmem:[%s625] sm:$0xff]
        %v627 = vld [vmem:[%s625 + $0x8] sm:$0xff]
        %628 = vmatprep.subr.mxu0 0.0
        %629 = vmatpush1.msra.mxu0 %v626
        %630 = vmatprep.subr.mxu0 0.0
        %631 = vmatpush1.msra.mxu0 %v627
        %632 = vmatprep.subr.mxu0 0.0
        %633 = vmatpush1.msra.mxu0 0.0
        %634 = vmatprep.subr.mxu0 0.0
        %635 = vmatpush1.msra.mxu0 0.0
        %636 = vmatprep.subr.mxu0 0.0
        %637 = vmatpush1.msra.mxu0 0.0
        %638 = vmatprep.subr.mxu0 0.0
        %639 = vmatpush1.msra.mxu0 0.0
        %640 = vmatprep.subr.mxu0 0.0
        %641 = vmatpush1.msra.mxu0 0.0
        %642 = vmatprep.subr.mxu0 0.0
        %643 = vmatpush1.msra.mxu0 0.0
        %644 = vmatprep.subr.mxu0 0.0
        %645 = vmatpush1.msra.mxu0 0.0
        %646 = vmatprep.subr.mxu0 0.0
        %647 = vmatpush1.msra.mxu0 0.0
        %648 = vmatprep.subr.mxu0 0.0
        %649 = vmatpush1.msra.mxu0 0.0
        %650 = vmatprep.subr.mxu0 0.0
        %651 = vmatpush1.msra.mxu0 0.0
        %652 = vmatprep.subr.mxu0 0.0
        %653 = vmatpush1.msra.mxu0 0.0
        %654 = vmatprep.subr.mxu0 0.0
        %655 = vmatpush1.msra.mxu0 0.0
        %656 = vmatprep.subr.mxu0 0.0
        %657 = vmatpush1.msra.mxu0 0.0
        %658 = vmatprep.subr.mxu0 0.0
        %659 = vmatpush1.msra.mxu0 0.0
        %660 = vmatprep.subr.mxu0 0.0
        %661 = vmatpush1.msra.mxu0 0.0
        %662 = vmatprep.subr.mxu0 0.0
        %663 = vmatpush1.msra.mxu0 0.0
        %664 = vmatprep.subr.mxu0 0.0
        %665 = vmatpush1.msra.mxu0 0.0
        %666 = vmatprep.subr.mxu0 0.0
        %667 = vmatpush1.msra.mxu0 0.0
        %668 = vmatprep.subr.mxu0 0.0
        %669 = vmatpush1.msra.mxu0 0.0
        %670 = vmatprep.subr.mxu0 0.0
        %671 = vmatpush1.msra.mxu0 0.0
        %672 = vmatprep.subr.mxu0 0.0
        %673 = vmatpush1.msra.mxu0 0.0
        %674 = vmatprep.subr.mxu0 0.0
        %675 = vmatpush1.msra.mxu0 0.0
        %676 = vmatprep.subr.mxu0 0.0
        %677 = vmatpush1.msra.mxu0 0.0
        %678 = vmatprep.subr.mxu0 0.0
        %679 = vmatpush1.msra.mxu0 0.0
        %680 = vmatprep.subr.mxu0 0.0
        %681 = vmatpush1.msra.mxu0 0.0
        %682 = vmatprep.subr.mxu0 0.0
        %683 = vmatpush1.msra.mxu0 0.0
        %684 = vmatprep.subr.mxu0 0.0
        %685 = vmatpush1.msra.mxu0 0.0
        %686 = vmatprep.subr.mxu0 0.0
        %687 = vmatpush1.msra.mxu0 0.0
        %688 = vmatprep.subr.mxu0 0.0
        %689 = vmatpush1.msra.mxu0 0.0
        %690 = vmatprep.subr.mxu0 0.0
        %691 = vmatpush1.msra.mxu0 0.0
        %692 = vmatprep.mubr.f32.mxu0 0.0
        %693 = vmatmul.mubr.f32.gmra.mrb[0].mxu0 %v305
        %v694 = vpop.f32.mrb[0].mxu0
        %v695 = vadd.f32 0.0, %v694
        %v696 = vpop.f32.mrb[0].mxu0
        %697 = vmatprep.mubr.f32.mxu0 0.0
        %698 = vmatmul.mubr.f32.gmra.mrb[0].mxu0 %v308
        %v699 = vpop.f32.mrb[0].mxu0
        %v700 = vadd.f32 0.0, %v699
        %v701 = vpop.f32.mrb[0].mxu0
        %702 = vdwg.mxu0
        %v704 = vsel %vm303, %v695, 0
        %v707 = vsel %vm303, %v700, 0
        %709 = vmatprep.subr.mxu0 0.0
        %710 = vmatpush1.msra.mxu0 %v299
        %711 = vmatprep.subr.mxu0 0.0
        %712 = vmatpush1.msra.mxu0 %v300
        %713 = vmatprep.subr.mxu0 0.0
        %714 = vmatpush1.msra.mxu0 0.0
        %715 = vmatprep.subr.mxu0 0.0
        %716 = vmatpush1.msra.mxu0 0.0
        %717 = vmatprep.subr.mxu0 0.0
        %718 = vmatpush1.msra.mxu0 0.0
        %719 = vmatprep.subr.mxu0 0.0
        %720 = vmatpush1.msra.mxu0 0.0
        %721 = vmatprep.subr.mxu0 0.0
        %722 = vmatpush1.msra.mxu0 0.0
        %723 = vmatprep.subr.mxu0 0.0
        %724 = vmatpush1.msra.mxu0 0.0
        %725 = vmatprep.subr.mxu0 0.0
        %726 = vmatpush1.msra.mxu0 0.0
        %727 = vmatprep.subr.mxu0 0.0
        %728 = vmatpush1.msra.mxu0 0.0
        %729 = vmatprep.subr.mxu0 0.0
        %730 = vmatpush1.msra.mxu0 0.0
        %731 = vmatprep.subr.mxu0 0.0
        %732 = vmatpush1.msra.mxu0 0.0
        %733 = vmatprep.subr.mxu0 0.0
        %734 = vmatpush1.msra.mxu0 0.0
        %735 = vmatprep.subr.mxu0 0.0
        %736 = vmatpush1.msra.mxu0 0.0
        %737 = vmatprep.subr.mxu0 0.0
        %738 = vmatpush1.msra.mxu0 0.0
        %739 = vmatprep.subr.mxu0 0.0
        %740 = vmatpush1.msra.mxu0 0.0
        %741 = vmatprep.subr.mxu0 0.0
        %742 = vmatpush1.msra.mxu0 0.0
        %743 = vmatprep.subr.mxu0 0.0
        %744 = vmatpush1.msra.mxu0 0.0
        %745 = vmatprep.subr.mxu0 0.0
        %746 = vmatpush1.msra.mxu0 0.0
        %747 = vmatprep.subr.mxu0 0.0
        %748 = vmatpush1.msra.mxu0 0.0
        %749 = vmatprep.subr.mxu0 0.0
        %750 = vmatpush1.msra.mxu0 0.0
        %751 = vmatprep.subr.mxu0 0.0
        %752 = vmatpush1.msra.mxu0 0.0
        %753 = vmatprep.subr.mxu0 0.0
        %754 = vmatpush1.msra.mxu0 0.0
        %755 = vmatprep.subr.mxu0 0.0
        %756 = vmatpush1.msra.mxu0 0.0
        %757 = vmatprep.subr.mxu0 0.0
        %758 = vmatpush1.msra.mxu0 0.0
        %759 = vmatprep.subr.mxu0 0.0
        %760 = vmatpush1.msra.mxu0 0.0
        %761 = vmatprep.subr.mxu0 0.0
        %762 = vmatpush1.msra.mxu0 0.0
        %763 = vmatprep.subr.mxu0 0.0
        %764 = vmatpush1.msra.mxu0 0.0
        %765 = vmatprep.subr.mxu0 0.0
        %766 = vmatpush1.msra.mxu0 0.0
        %767 = vmatprep.subr.mxu0 0.0
        %768 = vmatpush1.msra.mxu0 0.0
        %769 = vmatprep.subr.mxu0 0.0
        %770 = vmatpush1.msra.mxu0 0.0
        %771 = vmatprep.subr.mxu0 0.0
        %772 = vmatpush1.msra.mxu0 0.0
        %773 = vmatprep.mubr.f32.mxu0 0.0
        %774 = vmatmul.mubr.f32.gmra.mrb[0].mxu0 %v704
        %v775 = vpop.f32.mrb[0].mxu0
        %v776 = vadd.f32 0.0, %v775
        %v777 = vpop.f32.mrb[0].mxu0
        %778 = vmatprep.mubr.f32.mxu0 0.0
        %779 = vmatmul.mubr.f32.gmra.mrb[0].mxu0 %v707
        %v780 = vpop.f32.mrb[0].mxu0
        %v781 = vadd.f32 0.0, %v780
        %v782 = vpop.f32.mrb[0].mxu0
        %783 = vdwg.mxu0
        %s784 = scalar_lea.vmem %s280, 48
        %v785 = vld [vmem:[%s784] sm:$0xff]
        %v786 = vld [vmem:[%s784 + $0x8] sm:$0xff]
        %787 = vmatprep.subr.mxu0 0.0
        %788 = vmatpush1.msra.mxu0 %v785
        %789 = vmatprep.subr.mxu0 0.0
        %790 = vmatpush1.msra.mxu0 %v786
        %791 = vmatprep.subr.mxu0 0.0
        %792 = vmatpush1.msra.mxu0 0.0
        %793 = vmatprep.subr.mxu0 0.0
        %794 = vmatpush1.msra.mxu0 0.0
        %795 = vmatprep.subr.mxu0 0.0
        %796 = vmatpush1.msra.mxu0 0.0
        %797 = vmatprep.subr.mxu0 0.0
        %798 = vmatpush1.msra.mxu0 0.0
        %799 = vmatprep.subr.mxu0 0.0
        %800 = vmatpush1.msra.mxu0 0.0
        %801 = vmatprep.subr.mxu0 0.0
        %802 = vmatpush1.msra.mxu0 0.0
        %803 = vmatprep.subr.mxu0 0.0
        %804 = vmatpush1.msra.mxu0 0.0
        %805 = vmatprep.subr.mxu0 0.0
        %806 = vmatpush1.msra.mxu0 0.0
        %807 = vmatprep.subr.mxu0 0.0
        %808 = vmatpush1.msra.mxu0 0.0
        %809 = vmatprep.subr.mxu0 0.0
        %810 = vmatpush1.msra.mxu0 0.0
        %811 = vmatprep.subr.mxu0 0.0
        %812 = vmatpush1.msra.mxu0 0.0
        %813 = vmatprep.subr.mxu0 0.0
        %814 = vmatpush1.msra.mxu0 0.0
        %815 = vmatprep.subr.mxu0 0.0
        %816 = vmatpush1.msra.mxu0 0.0
        %817 = vmatprep.subr.mxu0 0.0
        %818 = vmatpush1.msra.mxu0 0.0
        %819 = vmatprep.subr.mxu0 0.0
        %820 = vmatpush1.msra.mxu0 0.0
        %821 = vmatprep.subr.mxu0 0.0
        %822 = vmatpush1.msra.mxu0 0.0
        %823 = vmatprep.subr.mxu0 0.0
        %824 = vmatpush1.msra.mxu0 0.0
        %825 = vmatprep.subr.mxu0 0.0
        %826 = vmatpush1.msra.mxu0 0.0
        %827 = vmatprep.subr.mxu0 0.0
        %828 = vmatpush1.msra.mxu0 0.0
        %829 = vmatprep.subr.mxu0 0.0
        %830 = vmatpush1.msra.mxu0 0.0
        %831 = vmatprep.subr.mxu0 0.0
        %832 = vmatpush1.msra.mxu0 0.0
        %833 = vmatprep.subr.mxu0 0.0
        %834 = vmatpush1.msra.mxu0 0.0
        %835 = vmatprep.subr.mxu0 0.0
        %836 = vmatpush1.msra.mxu0 0.0
        %837 = vmatprep.subr.mxu0 0.0
        %838 = vmatpush1.msra.mxu0 0.0
        %839 = vmatprep.subr.mxu0 0.0
        %840 = vmatpush1.msra.mxu0 0.0
        %841 = vmatprep.subr.mxu0 0.0
        %842 = vmatpush1.msra.mxu0 0.0
        %843 = vmatprep.subr.mxu0 0.0
        %844 = vmatpush1.msra.mxu0 0.0
        %845 = vmatprep.subr.mxu0 0.0
        %846 = vmatpush1.msra.mxu0 0.0
        %847 = vmatprep.subr.mxu0 0.0
        %848 = vmatpush1.msra.mxu0 0.0
        %849 = vmatprep.subr.mxu0 0.0
        %850 = vmatpush1.msra.mxu0 0.0
        %851 = vmatprep.mubr.f32.mxu0 0.0
        %852 = vmatmul.mubr.f32.gmra.mrb[0].mxu0 %v305
        %v853 = vpop.f32.mrb[0].mxu0
        %v854 = vadd.f32 0.0, %v853
        %v855 = vpop.f32.mrb[0].mxu0
        %856 = vmatprep.mubr.f32.mxu0 0.0
        %857 = vmatmul.mubr.f32.gmra.mrb[0].mxu0 %v308
        %v858 = vpop.f32.mrb[0].mxu0
        %v859 = vadd.f32 0.0, %v858
        %v860 = vpop.f32.mrb[0].mxu0
        %861 = vdwg.mxu0
        %v863 = vsel %vm303, %v854, 0
        %v866 = vsel %vm303, %v859, 0
        %868 = vmatprep.subr.mxu0 0.0
        %869 = vmatpush1.msra.mxu0 %v299
        %870 = vmatprep.subr.mxu0 0.0
        %871 = vmatpush1.msra.mxu0 %v300
        %872 = vmatprep.subr.mxu0 0.0
        %873 = vmatpush1.msra.mxu0 0.0
        %874 = vmatprep.subr.mxu0 0.0
        %875 = vmatpush1.msra.mxu0 0.0
        %876 = vmatprep.subr.mxu0 0.0
        %877 = vmatpush1.msra.mxu0 0.0
        %878 = vmatprep.subr.mxu0 0.0
        %879 = vmatpush1.msra.mxu0 0.0
        %880 = vmatprep.subr.mxu0 0.0
        %881 = vmatpush1.msra.mxu0 0.0
        %882 = vmatprep.subr.mxu0 0.0
        %883 = vmatpush1.msra.mxu0 0.0
        %884 = vmatprep.subr.mxu0 0.0
        %885 = vmatpush1.msra.mxu0 0.0
        %886 = vmatprep.subr.mxu0 0.0
        %887 = vmatpush1.msra.mxu0 0.0
        %888 = vmatprep.subr.mxu0 0.0
        %889 = vmatpush1.msra.mxu0 0.0
        %890 = vmatprep.subr.mxu0 0.0
        %891 = vmatpush1.msra.mxu0 0.0
        %892 = vmatprep.subr.mxu0 0.0
        %893 = vmatpush1.msra.mxu0 0.0
        %894 = vmatprep.subr.mxu0 0.0
        %895 = vmatpush1.msra.mxu0 0.0
        %896 = vmatprep.subr.mxu0 0.0
        %897 = vmatpush1.msra.mxu0 0.0
        %898 = vmatprep.subr.mxu0 0.0
        %899 = vmatpush1.msra.mxu0 0.0
        %900 = vmatprep.subr.mxu0 0.0
        %901 = vmatpush1.msra.mxu0 0.0
        %902 = vmatprep.subr.mxu0 0.0
        %903 = vmatpush1.msra.mxu0 0.0
        %904 = vmatprep.subr.mxu0 0.0
        %905 = vmatpush1.msra.mxu0 0.0
        %906 = vmatprep.subr.mxu0 0.0
        %907 = vmatpush1.msra.mxu0 0.0
        %908 = vmatprep.subr.mxu0 0.0
        %909 = vmatpush1.msra.mxu0 0.0
        %910 = vmatprep.subr.mxu0 0.0
        %911 = vmatpush1.msra.mxu0 0.0
        %912 = vmatprep.subr.mxu0 0.0
        %913 = vmatpush1.msra.mxu0 0.0
        %914 = vmatprep.subr.mxu0 0.0
        %915 = vmatpush1.msra.mxu0 0.0
        %916 = vmatprep.subr.mxu0 0.0
        %917 = vmatpush1.msra.mxu0 0.0
        %918 = vmatprep.subr.mxu0 0.0
        %919 = vmatpush1.msra.mxu0 0.0
        %920 = vmatprep.subr.mxu0 0.0
        %921 = vmatpush1.msra.mxu0 0.0
        %922 = vmatprep.subr.mxu0 0.0
        %923 = vmatpush1.msra.mxu0 0.0
        %924 = vmatprep.subr.mxu0 0.0
        %925 = vmatpush1.msra.mxu0 0.0
        %926 = vmatprep.subr.mxu0 0.0
        %927 = vmatpush1.msra.mxu0 0.0
        %928 = vmatprep.subr.mxu0 0.0
        %929 = vmatpush1.msra.mxu0 0.0
        %930 = vmatprep.subr.mxu0 0.0
        %931 = vmatpush1.msra.mxu0 0.0
        %932 = vmatprep.mubr.f32.mxu0 0.0
        %933 = vmatmul.mubr.f32.gmra.mrb[0].mxu0 %v863
        %v934 = vpop.f32.mrb[0].mxu0
        %v935 = vadd.f32 0.0, %v934
        %v936 = vpop.f32.mrb[0].mxu0
        %937 = vmatprep.mubr.f32.mxu0 0.0
        %938 = vmatmul.mubr.f32.gmra.mrb[0].mxu0 %v866
        %v939 = vpop.f32.mrb[0].mxu0
        %v940 = vadd.f32 0.0, %v939
        %v941 = vpop.f32.mrb[0].mxu0
        %942 = vdwg.mxu0
        %s943 = sld [smem:[#allocation2]]
        %v944 = vstv %s943
        %v945 = vmul.f32 %v458, %v944
        %v946 = vmul.f32 %v463, %v944
        %s947 = sld [smem:[#allocation4]]
        %v948 = vstv %s947
        %v949 = vadd.f32 %v945, %v948
        %v950 = vadd.f32 %v946, %v948
        %s951 = sld [smem:[#allocation2 + $0x1]]
        %v952 = vstv %s951
        %v953 = vmul.f32 %v617, %v952
        %v954 = vmul.f32 %v622, %v952
        %v955 = vadd.f32 %v949, %v953
        %v956 = vadd.f32 %v950, %v954
        %s957 = sld [smem:[#allocation2 + $0x2]]
        %v958 = vstv %s957
        %v959 = vmul.f32 %v776, %v958
        %v960 = vmul.f32 %v781, %v958
        %v961 = vadd.f32 %v955, %v959
        %v962 = vadd.f32 %v956, %v960
        %s963 = sld [smem:[#allocation2 + $0x3]]
        %v964 = vstv %s963
        %v965 = vmul.f32 %v935, %v964
        %v966 = vmul.f32 %v940, %v964
        %v967 = vadd.f32 %v961, %v965
        %v968 = vadd.f32 %v962, %v966
        %vm969 = vcmask 97280
        %970 = vst.msk [vmem:[%s295] sm:$0xff] %vm969, %v967
        %vm971 = vcmask 93184
        %972 = vst.msk [vmem:[%s295 + $0x8] sm:$0xf] %vm971, %v968
        %s973 = sld [smem:[#allocation2 + $0x80]]
        %v974 = vstv %s973
        %v975 = vmul.f32 %v458, %v974
        %v976 = vmul.f32 %v463, %v974
        %s977 = sld [smem:[#allocation4 + $0x1]]
        %v978 = vstv %s977
        %v979 = vadd.f32 %v975, %v978
        %v980 = vadd.f32 %v976, %v978
        %s981 = sld [smem:[#allocation2 + $0x81]]
        %v982 = vstv %s981
        %v983 = vmul.f32 %v617, %v982
        %v984 = vmul.f32 %v622, %v982
        %v985 = vadd.f32 %v979, %v983
        %v986 = vadd.f32 %v980, %v984
        %s987 = sld [smem:[#allocation2 + $0x82]]
        %v988 = vstv %s987
        %v989 = vmul.f32 %v776, %v988
        %v990 = vmul.f32 %v781, %v988
        %v991 = vadd.f32 %v985, %v989
        %v992 = vadd.f32 %v986, %v990
        %s993 = sld [smem:[#allocation2 + $0x83]]
        %v994 = vstv %s993
        %v995 = vmul.f32 %v935, %v994
        %v996 = vmul.f32 %v940, %v994
        %v997 = vadd.f32 %v991, %v995
        %v998 = vadd.f32 %v992, %v996
        %s999 = scalar_lea.vmem %s295, 16
        %1000 = vst.msk [vmem:[%s999] sm:$0xff] %vm969, %v997
        %1001 = vst.msk [vmem:[%s999 + $0x8] sm:$0xf] %vm971, %v998
        %s1002 = sld [smem:[#allocation2 + $0x100]]
        %v1003 = vstv %s1002
        %v1004 = vmul.f32 %v458, %v1003
        %v1005 = vmul.f32 %v463, %v1003
        %s1006 = sld [smem:[#allocation4 + $0x2]]
        %v1007 = vstv %s1006
        %v1008 = vadd.f32 %v1004, %v1007
        %v1009 = vadd.f32 %v1005, %v1007
        %s1010 = sld [smem:[#allocation2 + $0x101]]
        %v1011 = vstv %s1010
        %v1012 = vmul.f32 %v617, %v1011
        %v1013 = vmul.f32 %v622, %v1011
        %v1014 = vadd.f32 %v1008, %v1012
        %v1015 = vadd.f32 %v1009, %v1013
        %s1016 = sld [smem:[#allocation2 + $0x102]]
        %v1017 = vstv %s1016
        %v1018 = vmul.f32 %v776, %v1017
        %v1019 = vmul.f32 %v781, %v1017
        %v1020 = vadd.f32 %v1014, %v1018
        %v1021 = vadd.f32 %v1015, %v1019
        %s1022 = sld [smem:[#allocation2 + $0x103]]
        %v1023 = vstv %s1022
        %v1024 = vmul.f32 %v935, %v1023
        %v1025 = vmul.f32 %v940, %v1023
        %v1026 = vadd.f32 %v1020, %v1024
        %v1027 = vadd.f32 %v1021, %v1025
        %s1028 = scalar_lea.vmem %s295, 32
        %1029 = vst.msk [vmem:[%s1028] sm:$0xff] %vm969, %v1026
        %1030 = vst.msk [vmem:[%s1028 + $0x8] sm:$0xf] %vm971, %v1027
        %s1031 = sld [smem:[#allocation2 + $0x180]]
        %v1032 = vstv %s1031
        %v1033 = vmul.f32 %v458, %v1032
        %v1034 = vmul.f32 %v463, %v1032
        %s1035 = sld [smem:[#allocation4 + $0x3]]
        %v1036 = vstv %s1035
        %v1037 = vadd.f32 %v1033, %v1036
        %v1038 = vadd.f32 %v1034, %v1036
        %s1039 = sld [smem:[#allocation2 + $0x181]]
        %v1040 = vstv %s1039
        %v1041 = vmul.f32 %v617, %v1040
        %v1042 = vmul.f32 %v622, %v1040
        %v1043 = vadd.f32 %v1037, %v1041
        %v1044 = vadd.f32 %v1038, %v1042
        %s1045 = sld [smem:[#allocation2 + $0x182]]
        %v1046 = vstv %s1045
        %v1047 = vmul.f32 %v776, %v1046
        %v1048 = vmul.f32 %v781, %v1046
        %v1049 = vadd.f32 %v1043, %v1047
        %v1050 = vadd.f32 %v1044, %v1048
        %s1051 = sld [smem:[#allocation2 + $0x183]]
        %v1052 = vstv %s1051
        %v1053 = vmul.f32 %v935, %v1052
        %v1054 = vmul.f32 %v940, %v1052
        %v1055 = vadd.f32 %v1049, %v1053
        %v1056 = vadd.f32 %v1050, %v1054
        %s1057 = scalar_lea.vmem %s295, 48
        %1058 = vst.msk [vmem:[%s1057] sm:$0xff] %vm969, %v1055
        %1059 = vst.msk [vmem:[%s1057 + $0x8] sm:$0xf] %vm971, %v1056
        %s1060 = sld [smem:[#allocation2 + $0x200]]
        %v1061 = vstv %s1060
        %v1062 = vmul.f32 %v458, %v1061
        %v1063 = vmul.f32 %v463, %v1061
        %s1064 = sld [smem:[#allocation4 + $0x4]]
        %v1065 = vstv %s1064
        %v1066 = vadd.f32 %v1062, %v1065
        %v1067 = vadd.f32 %v1063, %v1065
        %s1068 = sld [smem:[#allocation2 + $0x201]]
        %v1069 = vstv %s1068
        %v1070 = vmul.f32 %v617, %v1069
        %v1071 = vmul.f32 %v622, %v1069
        %v1072 = vadd.f32 %v1066, %v1070
        %v1073 = vadd.f32 %v1067, %v1071
        %s1074 = sld [smem:[#allocation2 + $0x202]]
        %v1075 = vstv %s1074
        %v1076 = vmul.f32 %v776, %v1075
        %v1077 = vmul.f32 %v781, %v1075
        %v1078 = vadd.f32 %v1072, %v1076
        %v1079 = vadd.f32 %v1073, %v1077
        %s1080 = sld [smem:[#allocation2 + $0x203]]
        %v1081 = vstv %s1080
        %v1082 = vmul.f32 %v935, %v1081
        %v1083 = vmul.f32 %v940, %v1081
        %v1084 = vadd.f32 %v1078, %v1082
        %v1085 = vadd.f32 %v1079, %v1083
        %s1086 = scalar_lea.vmem %s295, 64
        %1087 = vst.msk [vmem:[%s1086] sm:$0xff] %vm969, %v1084
        %1088 = vst.msk [vmem:[%s1086 + $0x8] sm:$0xf] %vm971, %v1085
        %s1089 = smul.u32 2, %s23
        %p1090 = scmp.lt.s32.totalorder %s22, 1
        %s1091 = scalar_select %p1090, %s22, 1
        %p1092 = scmp.lt.s32.totalorder %s1089, 1
        %s1093 = scalar_select %p1092, %s1089, 1
        %s1094 = smul.addr %s1091, 10
        %s1095 = sadd.s32 %s1093, %s1094
        %s1096 = smul.addr %s1095, 8
        %s1097 = scalar_lea.vmem %s5, %s1096
        // Predicated region
        $region49: #{multiscale_tta_forward.6} parent=39 // pred_check
          %p1098 = pneg %p165
        $region50: #{multiscale_tta_forward.6} parent=39 // pred_check_branch
          %1100 = sbr.rel (%p1098) target = $region52
        $region51: #{multiscale_tta_forward.6} parent=39 // pred_region
          %s1101 = smul.u32 2, %s23
        $region52: #{multiscale_tta_forward.6} parent=39 // pred_fallthru
          _
      $region40: #{multiscale_tta_forward.6} parent=5 // pred_fallthru
        _
      %p1102 = scmp.le.s32.totalorder 2, %s13
      // Predicated region
      $region53: #{multiscale_tta_forward.6} parent=5 // pred_check
        %p1103 = pneg %p1102
      $region54: #{multiscale_tta_forward.6} parent=5 // pred_check_branch
        %1105 = sbr.rel (%p1103) target = $region56
      $region55: #{multiscale_tta_forward.6} parent=5 // pred_region
        %s1106 = ssub.s32 %s13, 2
        // Predicated region
        $region57: #{multiscale_tta_forward.6} parent=55 // pred_check
          %p1107 = pneg %p171
        $region58: #{multiscale_tta_forward.6} parent=55 // pred_check_branch
          %1109 = sbr.rel (%p1107) target = $region60
        $region59: #{multiscale_tta_forward.6} parent=55 // pred_region
          %s1110 = smul.u32 2, %s25
          %p1111 = scmp.lt.s32.totalorder %s24, 1
          %s1112 = scalar_select %p1111, %s24, 1
          %p1113 = scmp.lt.s32.totalorder %s1110, 1
          %s1114 = scalar_select %p1113, %s1110, 1
          %s1115 = smul.addr %s1112, 10
          %s1116 = sadd.s32 %s1114, %s1115
          %s1117 = smul.addr %s1116, 8
          %s1118 = scalar_lea.vmem %s5, %s1117
        $region60: #{multiscale_tta_forward.6} parent=55 // pred_fallthru
          _
      $region56: #{multiscale_tta_forward.6} parent=5 // pred_fallthru
        _
    $region6: #{multiscale_tta_forward.6} parent=1 // loop_footer
      %s17 = sadd.s32 1, %s13
    $region7: #{multiscale_tta_forward.6} parent=1 // loop_footer_branch
      %12 = sbr.rel target = $region3
    $region8: #{multiscale_tta_forward.6} parent=1 // loop_exit
      _
    %1119 = vsyncpa [#allocation3], 1
    %s1120 = scalar_lea.sflag [#allocation3], 1
    %1121 = vsyncpa %s1120, 1
    %1122 = vsyncpa [#allocation5], 1

// kernel: multiscale_tta_forward.8
$region0: #{multiscale_tta_forward.8}
  #allocation0 [shape = 'u32[]', space=smem, size = 0x4, offset = 0x4, fixed_abs, tag = 'smem constant byte address 0x4 - core index']
  #allocation1 [shape = 'u32[144,128]{1,0:T(1,128)}', space=vmem, size = 0x12000, scoped, tag = 'internal scratch']
  %s0 = inlined_call_operand.vmem [shape: f32[2,4,16,16], index: 0, kind: input, shape index: {}]
  %s1 = inlined_call_operand.vmem [shape: f32[20,16], index: 1, kind: input, shape index: {}]
  %s2 = inlined_call_operand.vmem [shape: f32[16,20], index: 2, kind: input, shape index: {}]
  %s3 = inlined_call_operand.vmem [shape: f32[5,4], index: 3, kind: input, shape index: {}]
  %s4 = inlined_call_operand.vmem [shape: f32[5], index: 4, kind: input, shape index: {}]
  %s5 = inlined_call_operand.vmem [shape: f32[2,5,20,20], index: 5, kind: output, shape index: {}]
  %s6 = sld [smem:[#allocation0]]
  $region61: #{multiscale_tta_forward.8} parent=0
    _
  %s8 = ssub.s32 1, %s6
  %s9 = scalar_select 0, %s8, %s6
  $region1: #{multiscale_tta_forward.8} parent=0
    #allocation2 [shape = 'u8[4096]{0}', space=smem, size = 0x1000, scoped, tag = 'input window, operand 3, single buffered']
    #allocation3 [shape = 's32[2]{0}', space=sflag, size = 0x8, scoped, tag = 'scoped memory for multiscale_tta_forward.8']
    #allocation4 [shape = 'u8[512]{0}', space=smem, size = 0x200, scoped, tag = 'input window, operand 4, single buffered']
    #allocation5 [shape = 's32[1]{0}', space=sflag, size = 0x4, scoped, tag = 'scoped memory for multiscale_tta_forward.8']
    %10 = vsyncpa [#allocation3], 0
    %11 = vsyncpa [#allocation5], 0
    loop: start=0, step=1, limit=4
    $region2: #{multiscale_tta_forward.8} parent=1 // loop_pre_header
      _
    $region3: #{multiscale_tta_forward.8} parent=1 // loop_header
      %s13 = sphi 0, %s17
      %p14 = scmp.ge.s32.totalorder %s13, 4
      %s20 = sphi 0, %s32
      %s21 = sphi 0, %s28
      %s22 = sphi 0, %s20
      %s23 = sphi 0, %s21
      %s24 = sphi 0, %s22
      %s25 = sphi 0, %s23
      %s35 = sphi 0, %s37
      %s38 = sphi 0, %s35
      %s39 = sphi 0, %s38
      %s55 = sphi 0, %s39
      %s61 = sphi 0, %s63
      %s64 = sphi 0, %s61
      %s65 = sphi 0, %s64
      %s81 = sphi 0, %s65
      %s85 = sphi 0, %s85
      %s87 = sphi 0, %s85
      %s88 = sphi 0, %s87
      %s102 = sphi 0, %s88
      %s106 = sphi 0, %s106
      %s108 = sphi 0, %s106
      %s109 = sphi 0, %s108
      %s123 = sphi 0, %s109
      %s127 = sphi 0, %s127
      %s129 = sphi 0, %s127
      %s130 = sphi 0, %s129
      %s144 = sphi 0, %s130
      %s152 = sphi 0, %s154
      %s155 = sphi 0, %s152
      %s156 = sphi 0, %s155
      %s172 = sphi 0, %s156
    $region4: #{multiscale_tta_forward.8} parent=1 // loop_header_branch
      %16 = sbr.rel (%p14) target = $region8
    $region5: #{multiscale_tta_forward.8} parent=1 // loop_body
      %s18 = ssub.s32 %s13, 1
      %s19 = ssub.s32 %s13, 2
      %s26 = sadd.s32 1, %s21
      %p27 = scmp.ge.s32.totalorder %s26, 1
      %s28 = scalar_select %p27, 0, %s26
      %s29 = sadd.s32 1, %s20
      %s30 = scalar_select %p27, %s29, %s20
      %p31 = scmp.ge.s32.totalorder %s30, 2
      %s32 = scalar_select %p31, 0, %s30
      %s33 = ssub.s32 %s20, %s32
      %p34 = scmp.eq.s32.totalorder %s33, 0
      %s36 = sadd.s32 %s35, 1
      %s37 = scalar_select %p34, %s35, %s36
      %p40 = pneg %p34
      %p41 = scmp.eq.s32.totalorder %s13, 1
      %p42 = por %p40, %p41
      %p43 = scmp.ne.s32.totalorder %s35, %s38
      %p44 = scmp.eq.s32.totalorder %s13, 0
      %p45 = por %p43, %p44
      %p46 = scmp.ne.s32.totalorder %s35, %s38
      %p47 = scmp.eq.s32.totalorder %s18, 1
      %p48 = por %p46, %p47
      %p49 = scmp.ne.s32.totalorder %s38, %s39
      %p50 = scmp.eq.s32.totalorder %s18, 0
      %p51 = por %p49, %p50
      %p52 = scmp.ne.s32.totalorder %s38, %s39
      %p53 = scmp.eq.s32.totalorder %s19, 1
      %p54 = por %p52, %p53
      %p56 = scmp.ne.s32.totalorder %s39, %s55
      %p57 = scmp.eq.s32.totalorder %s19, 0
      %p58 = por %p56, %p57
      %s59 = ssub.s32 %s21, %s28
      %p60 = scmp.eq.s32.totalorder %s59, 0
      %s62 = sadd.s32 %s61, 1
      %s63 = scalar_select %p60, %s61, %s62
      %p66 = pneg %p60
      %p67 = scmp.eq.s32.totalorder %s13, 1
      %p68 = por %p66, %p67
      %p69 = scmp.ne.s32.totalorder %s61, %s64
      %p70 = scmp.eq.s32.totalorder %s13, 0
      %p71 = por %p69, %p70
      %p72 = scmp.ne.s32.totalorder %s61, %s64
      %p73 = scmp.eq.s32.totalorder %s18, 1
      %p74 = por %p72, %p73
      %p75 = scmp.ne.s32.totalorder %s64, %s65
      %p76 = scmp.eq.s32.totalorder %s18, 0
      %p77 = por %p75, %p76
      %p78 = scmp.ne.s32.totalorder %s64, %s65
      %p79 = scmp.eq.s32.totalorder %s19, 1
      %p80 = por %p78, %p79
      %p82 = scmp.ne.s32.totalorder %s65, %s81
      %p83 = scmp.eq.s32.totalorder %s19, 0
      %p84 = por %p82, %p83
      %s86 = sadd.s32 %s85, 1
      %p89 = scmp.eq.s32.totalorder %s13, 1
      %p90 = scmp.ne.s32.totalorder %s85, %s87
      %p91 = scmp.eq.s32.totalorder %s13, 0
      %p92 = por %p90, %p91
      %p93 = scmp.ne.s32.totalorder %s85, %s87
      %p94 = scmp.eq.s32.totalorder %s18, 1
      %p95 = por %p93, %p94
      %p96 = scmp.ne.s32.totalorder %s87, %s88
      %p97 = scmp.eq.s32.totalorder %s18, 0
      %p98 = por %p96, %p97
      %p99 = scmp.ne.s32.totalorder %s87, %s88
      %p100 = scmp.eq.s32.totalorder %s19, 1
      %p101 = por %p99, %p100
      %p103 = scmp.ne.s32.totalorder %s88, %s102
      %p104 = scmp.eq.s32.totalorder %s19, 0
      %p105 = por %p103, %p104
      %s107 = sadd.s32 %s106, 1
      %p110 = scmp.eq.s32.totalorder %s13, 1
      %p111 = scmp.ne.s32.totalorder %s106, %s108
      %p112 = scmp.eq.s32.totalorder %s13, 0
      %p113 = por %p111, %p112
      %p114 = scmp.ne.s32.totalorder %s106, %s108
      %p115 = scmp.eq.s32.totalorder %s18, 1
      %p116 = por %p114, %p115
      %p117 = scmp.ne.s32.totalorder %s108, %s109
      %p118 = scmp.eq.s32.totalorder %s18, 0
      %p119 = por %p117, %p118
      %p120 = scmp.ne.s32.totalorder %s108, %s109
      %p121 = scmp.eq.s32.totalorder %s19, 1
      %p122 = por %p120, %p121
      %p124 = scmp.ne.s32.totalorder %s109, %s123
      %p125 = scmp.eq.s32.totalorder %s19, 0
      %p126 = por %p124, %p125
      %s128 = sadd.s32 %s127, 1
      %p131 = scmp.eq.s32.totalorder %s13, 1
      %p132 = scmp.ne.s32.totalorder %s127, %s129
      %p133 = scmp.eq.s32.totalorder %s13, 0
      %p134 = por %p132, %p133
      %p135 = scmp.ne.s32.totalorder %s127, %s129
      %p136 = scmp.eq.s32.totalorder %s18, 1
      %p137 = por %p135, %p136
      %p138 = scmp.ne.s32.totalorder %s129, %s130
      %p139 = scmp.eq.s32.totalorder %s18, 0
      %p140 = por %p138, %p139
      %p141 = scmp.ne.s32.totalorder %s129, %s130
      %p142 = scmp.eq.s32.totalorder %s19, 1
      %p143 = por %p141, %p142
      %p145 = scmp.ne.s32.totalorder %s130, %s144
      %p146 = scmp.eq.s32.totalorder %s19, 0
      %p147 = por %p145, %p146
      %s148 = ssub.s32 %s20, %s32
      %s149 = ssub.s32 %s21, %s28
      %s150 = sor.u32 %s148, %s149
      %p151 = scmp.eq.s32.totalorder %s150, 0
      %s153 = sadd.s32 %s152, 1
      %s154 = scalar_select %p151, %s152, %s153
      %p157 = pneg %p151
      %p158 = scmp.eq.s32.totalorder %s13, 1
      %p159 = por %p157, %p158
      %p160 = scmp.ne.s32.totalorder %s152, %s155
      %p161 = scmp.eq.s32.totalorder %s13, 0
      %p162 = por %p160, %p161
      %p163 = scmp.ne.s32.totalorder %s152, %s155
      %p164 = scmp.eq.s32.totalorder %s18, 1
      %p165 = por %p163, %p164
      %p166 = scmp.ne.s32.totalorder %s155, %s156
      %p167 = scmp.eq.s32.totalorder %s18, 0
      %p168 = por %p166, %p167
      %p169 = scmp.ne.s32.totalorder %s155, %s156
      %p170 = scmp.eq.s32.totalorder %s19, 1
      %p171 = por %p169, %p170
      %p173 = scmp.ne.s32.totalorder %s156, %s172
      %p174 = scmp.eq.s32.totalorder %s19, 0
      %p175 = por %p173, %p174
      %p176 = scmp.le.s32.totalorder 1, %s13
      %p177 = scmp.lt.s32.totalorder %s13, 3
      %p178 = pnand %p176, %p177
      %p179 = pneg %p178
      // Predicated region
      $region9: #{multiscale_tta_forward.8} parent=5 // pred_check
        _
      $region10: #{multiscale_tta_forward.8} parent=5 // pred_check_branch
        %181 = sbr.rel (%p178) target = $region12
      $region11: #{multiscale_tta_forward.8} parent=5 // pred_region
        %s182 = ssub.s32 %s13, 1
        // Predicated region
        $region13: #{multiscale_tta_forward.8} parent=11 // pred_check
          %p183 = pneg %p77
        $region14: #{multiscale_tta_forward.8} parent=11 // pred_check_branch
          %185 = sbr.rel (%p183) target = $region16
        $region15: #{multiscale_tta_forward.8} parent=11 // pred_region
          %s186 = smul.u32 3, %s23
          %p187 = scmp.lt.s32.totalorder %s186, 2
          %s188 = scalar_select %p187, %s186, 2
          %s189 = smul.addr %s188, 8
          %s190 = scalar_lea.vmem %s1, %s189
          %s191 = smul.u32 3, %s23
        $region16: #{multiscale_tta_forward.8} parent=11 // pred_fallthru
          _
        // Predicated region
        $region17: #{multiscale_tta_forward.8} parent=11 // pred_check
          %p192 = pneg %p98
        $region18: #{multiscale_tta_forward.8} parent=11 // pred_check_branch
          %194 = sbr.rel (%p192) target = $region20
        $region19: #{multiscale_tta_forward.8} parent=11 // pred_region
          _
        $region20: #{multiscale_tta_forward.8} parent=11 // pred_fallthru
          _
        // Predicated region
        $region21: #{multiscale_tta_forward.8} parent=11 // pred_check
          %p195 = pneg %p119
        $region22: #{multiscale_tta_forward.8} parent=11 // pred_check_branch
          %197 = sbr.rel (%p195) target = $region24
        $region23: #{multiscale_tta_forward.8} parent=11 // pred_region
          %s199 = ssub.s32 128, 128
          %200 = vsyncadd [#allocation3], %s199
          %s202 = sshll.u32 %s3, 4
          %s203 = int_to_ptr.vmem [resolvable:$true] %s202
          %205 = dma.vmem_to_smem %s203, 128, [#allocation2], [#allocation3]
        $region24: #{multiscale_tta_forward.8} parent=11 // pred_fallthru
          _
        // Predicated region
        $region25: #{multiscale_tta_forward.8} parent=11 // pred_check
          %p206 = pneg %p140
        $region26: #{multiscale_tta_forward.8} parent=11 // pred_check_branch
          %208 = sbr.rel (%p206) target = $region28
        $region27: #{multiscale_tta_forward.8} parent=11 // pred_region
          %s210 = ssub.s32 16, 16
          %211 = vsyncadd [#allocation5], %s210
          %s213 = sshll.u32 %s4, 4
          %s214 = int_to_ptr.vmem [resolvable:$true] %s213
          %216 = dma.vmem_to_smem %s214, 16, [#allocation4], [#allocation5]
        $region28: #{multiscale_tta_forward.8} parent=11 // pred_fallthru
          _
      $region12: #{multiscale_tta_forward.8} parent=5 // pred_fallthru
        _
      %p217 = scmp.lt.s32.totalorder %s13, 2
      // Predicated region
      $region29: #{multiscale_tta_forward.8} parent=5 // pred_check
        %p218 = pneg %p217
      $region30: #{multiscale_tta_forward.8} parent=5 // pred_check_branch
        %220 = sbr.rel (%p218) target = $region32
      $region31: #{multiscale_tta_forward.8} parent=5 // pred_region
        // Predicated region
        $region33: #{multiscale_tta_forward.8} parent=31 // pred_check
          %p221 = pneg %p45
        $region34: #{multiscale_tta_forward.8} parent=31 // pred_check_branch
          %223 = sbr.rel (%p221) target = $region36
        $region35: #{multiscale_tta_forward.8} parent=31 // pred_region
          %p224 = scmp.lt.s32.totalorder %s20, 1
          %s225 = scalar_select %p224, %s20, 1
          %s226 = smul.addr %s225, 8
          %s227 = smul.addr %s226, 8
          %s228 = scalar_lea.vmem %s0, %s227
        $region36: #{multiscale_tta_forward.8} parent=31 // pred_fallthru
          _
      $region32: #{multiscale_tta_forward.8} parent=5 // pred_fallthru
        _
      %p229 = scmp.le.s32.totalorder 1, %s13
      %p230 = scmp.lt.s32.totalorder %s13, 3
      %p231 = pnand %p229, %p230
      %p232 = pneg %p231
      // Predicated region
      $region37: #{multiscale_tta_forward.8} parent=5 // pred_check
        _
      $region38: #{multiscale_tta_forward.8} parent=5 // pred_check_branch
        %234 = sbr.rel (%p231) target = $region40
      $region39: #{multiscale_tta_forward.8} parent=5 // pred_region
        %s235 = ssub.s32 %s13, 1
        // Predicated region
        $region41: #{multiscale_tta_forward.8} parent=39 // pred_check
          %p236 = pneg %p119
        $region42: #{multiscale_tta_forward.8} parent=39 // pred_check_branch
          %238 = sbr.rel (%p236) target = $region44
        $region43: #{multiscale_tta_forward.8} parent=39 // pred_region
          %239 = dma.done [#allocation3], 128
        $region44: #{multiscale_tta_forward.8} parent=39 // pred_fallthru
          _
        // Predicated region
        $region45: #{multiscale_tta_forward.8} parent=39 // pred_check
          %p240 = pneg %p140
        $region46: #{multiscale_tta_forward.8} parent=39 // pred_check_branch
          %242 = sbr.rel (%p240) target = $region48
        $region47: #{multiscale_tta_forward.8} parent=39 // pred_region
          %243 = dma.done [#allocation5], 16
        $region48: #{multiscale_tta_forward.8} parent=39 // pred_fallthru
          _
        %244 = sfence
        %p245 = scmp.lt.s32.totalorder %s22, 1
        %s246 = scalar_select %p245, %s22, 1
        %s247 = smul.addr %s246, 8
        %s248 = smul.addr %s247, 8
        %s249 = scalar_lea.vmem %s0, %s248
        %p250 = pneg %p51
        %p251 = pneg %p48
        %s252 = smul.u32 3, %s23
        %p253 = scmp.lt.s32.totalorder %s252, 2
        %s254 = scalar_select %p253, %s252, 2
        %s255 = smul.addr %s254, 8
        %s256 = scalar_lea.vmem %s1, %s255
        %p257 = pneg %p77
        %p258 = pneg %p74
        %p259 = pneg %p98
        %p260 = pneg %p95
        %p261 = pneg %p119
        %p262 = pneg %p116
        %p263 = pneg %p140
        %p264 = pneg %p137
        %p265 = pneg %p168
        %p266 = pneg %p165
        %s267 = smul.u32 3, %s23
        %p268 = scmp.lt.s32.totalorder %s22, 1
        %s269 = scalar_select %p268, %s22, 1
        %p270 = scmp.lt.s32.totalorder %s267, 2
        %s271 = scalar_select %p270, %s267, 2
        %s272 = smul.addr %s269, 15
        %s273 = sadd.s32 %s271, %s272
        %s274 = smul.addr %s273, 8
        %s275 = scalar_lea.vmem %s5, %s274
        %p276 = scmp.lt.s32.totalorder %s22, 1
        %s277 = scalar_select %p276, %s22, 1
        %s278 = smul.addr %s277, 8
        %s279 = smul.addr %s278, 8
        %s280 = scalar_lea.vmem %s0, %s279
        %s281 = smul.u32 3, %s23
        %p282 = scmp.lt.s32.totalorder %s281, 2
        %s283 = scalar_select %p282, %s281, 2
        %s284 = smul.addr %s283, 8
        %s285 = scalar_lea.vmem %s1, %s284
        %s286 = smul.u32 3, %s23
        %s287 = smul.u32 3, %s23
        %p288 = scmp.lt.s32.totalorder %s22, 1
        %s289 = scalar_select %p288, %s22, 1
        %p290 = scmp.lt.s32.totalorder %s287, 2
        %s291 = scalar_select %p290, %s287, 2
        %s292 = smul.addr %s289, 15
        %s293 = sadd.s32 %s291, %s292
        %s294 = smul.addr %s293, 8
        %s295 = scalar_lea.vmem %s5, %s294
        %s296 = smul.u32 3, %s23
        %v297 = vld [vmem:[%s285] sm:$0xff]
        %v298 = vld [vmem:[%s285 + $0x8] sm:$0xff]
        %v299 = vld [vmem:[%s285 + $0x10] sm:$0xf]
        %v300 = vld [vmem:[%s2] sm:$0xff]
        %v301 = vld [vmem:[%s2 + $0x8] sm:$0xff]
        %v302 = vld [vmem:[%s280] sm:$0xff]
        %v303 = vld [vmem:[%s280 + $0x8] sm:$0xff]
        %vm304 = vcmask 130048
        %v306 = vsel %vm304, %v297, 0
        %v309 = vsel %vm304, %v298, 0
        %v312 = vsel %vm304, %v299, 0
        %314 = vmatprep.subr.mxu0 0.0
        %315 = vmatpush1.msra.mxu0 %v302
        %316 = vmatprep.subr.mxu0 0.0
        %317 = vmatpush1.msra.mxu0 %v303
        %318 = vmatprep.subr.mxu0 0.0
        %319 = vmatpush1.msra.mxu0 0.0
        %320 = vmatprep.subr.mxu0 0.0
        %321 = vmatpush1.msra.mxu0 0.0
        %322 = vmatprep.subr.mxu0 0.0
        %323 = vmatpush1.msra.mxu0 0.0
        %324 = vmatprep.subr.mxu0 0.0
        %325 = vmatpush1.msra.mxu0 0.0
        %326 = vmatprep.subr.mxu0 0.0
        %327 = vmatpush1.msra.mxu0 0.0
        %328 = vmatprep.subr.mxu0 0.0
        %329 = vmatpush1.msra.mxu0 0.0
        %330 = vmatprep.subr.mxu0 0.0
        %331 = vmatpush1.msra.mxu0 0.0
        %332 = vmatprep.subr.mxu0 0.0
        %333 = vmatpush1.msra.mxu0 0.0
        %334 = vmatprep.subr.mxu0 0.0
        %335 = vmatpush1.msra.mxu0 0.0
        %336 = vmatprep.subr.mxu0 0.0
        %337 = vmatpush1.msra.mxu0 0.0
        %338 = vmatprep.subr.mxu0 0.0
        %339 = vmatpush1.msra.mxu0 0.0
        %340 = vmatprep.subr.mxu0 0.0
        %341 = vmatpush1.msra.mxu0 0.0
        %342 = vmatprep.subr.mxu0 0.0
        %343 = vmatpush1.msra.mxu0 0.0
        %344 = vmatprep.subr.mxu0 0.0
        %345 = vmatpush1.msra.mxu0 0.0
        %346 = vmatprep.subr.mxu0 0.0
        %347 = vmatpush1.msra.mxu0 0.0
        %348 = vmatprep.subr.mxu0 0.0
        %349 = vmatpush1.msra.mxu0 0.0
        %350 = vmatprep.subr.mxu0 0.0
        %351 = vmatpush1.msra.mxu0 0.0
        %352 = vmatprep.subr.mxu0 0.0
        %353 = vmatpush1.msra.mxu0 0.0
        %354 = vmatprep.subr.mxu0 0.0
        %355 = vmatpush1.msra.mxu0 0.0
        %356 = vmatprep.subr.mxu0 0.0
        %357 = vmatpush1.msra.mxu0 0.0
        %358 = vmatprep.subr.mxu0 0.0
        %359 = vmatpush1.msra.mxu0 0.0
        %360 = vmatprep.subr.mxu0 0.0
        %361 = vmatpush1.msra.mxu0 0.0
        %362 = vmatprep.subr.mxu0 0.0
        %363 = vmatpush1.msra.mxu0 0.0
        %364 = vmatprep.subr.mxu0 0.0
        %365 = vmatpush1.msra.mxu0 0.0
        %366 = vmatprep.subr.mxu0 0.0
        %367 = vmatpush1.msra.mxu0 0.0
        %368 = vmatprep.subr.mxu0 0.0
        %369 = vmatpush1.msra.mxu0 0.0
        %370 = vmatprep.subr.mxu0 0.0
        %371 = vmatpush1.msra.mxu0 0.0
        %372 = vmatprep.subr.mxu0 0.0
        %373 = vmatpush1.msra.mxu0 0.0
        %374 = vmatprep.subr.mxu0 0.0
        %375 = vmatpush1.msra.mxu0 0.0
        %376 = vmatprep.subr.mxu0 0.0
        %377 = vmatpush1.msra.mxu0 0.0
        %378 = vmatprep.mubr.f32.mxu0 0.0
        %379 = vmatmul.mubr.f32.gmra.mrb[0].mxu0 %v306
        %v380 = vpop.f32.mrb[0].mxu0
        %v381 = vadd.f32 0.0, %v380
        %v382 = vpop.f32.mrb[0].mxu0
        %383 = vmatprep.mubr.f32.mxu0 0.0
        %384 = vmatmul.mubr.f32.gmra.mrb[0].mxu0 %v309
        %v385 = vpop.f32.mrb[0].mxu0
        %v386 = vadd.f32 0.0, %v385
        %v387 = vpop.f32.mrb[0].mxu0
        %388 = vmatprep.mubr.f32.mxu0 0.0
        %389 = vmatmul.mubr.f32.gmra.mrb[0].mxu0 %v312
        %v390 = vpop.f32.mrb[0].mxu0
        %v391 = vadd.f32 0.0, %v390
        %v392 = vpop.f32.mrb[0].mxu0
        %393 = vdwg.mxu0
        %v395 = vsel %vm304, %v381, 0
        %v398 = vsel %vm304, %v386, 0
        %v401 = vsel %vm304, %v391, 0
        %403 = vmatprep.subr.mxu0 0.0
        %404 = vmatpush1.msra.mxu0 %v300
        %405 = vmatprep.subr.mxu0 0.0
        %406 = vmatpush1.msra.mxu0 %v301
        %407 = vmatprep.subr.mxu0 0.0
        %408 = vmatpush1.msra.mxu0 0.0
        %409 = vmatprep.subr.mxu0 0.0
        %410 = vmatpush1.msra.mxu0 0.0
        %411 = vmatprep.subr.mxu0 0.0
        %412 = vmatpush1.msra.mxu0 0.0
        %413 = vmatprep.subr.mxu0 0.0
        %414 = vmatpush1.msra.mxu0 0.0
        %415 = vmatprep.subr.mxu0 0.0
        %416 = vmatpush1.msra.mxu0 0.0
        %417 = vmatprep.subr.mxu0 0.0
        %418 = vmatpush1.msra.mxu0 0.0
        %419 = vmatprep.subr.mxu0 0.0
        %420 = vmatpush1.msra.mxu0 0.0
        %421 = vmatprep.subr.mxu0 0.0
        %422 = vmatpush1.msra.mxu0 0.0
        %423 = vmatprep.subr.mxu0 0.0
        %424 = vmatpush1.msra.mxu0 0.0
        %425 = vmatprep.subr.mxu0 0.0
        %426 = vmatpush1.msra.mxu0 0.0
        %427 = vmatprep.subr.mxu0 0.0
        %428 = vmatpush1.msra.mxu0 0.0
        %429 = vmatprep.subr.mxu0 0.0
        %430 = vmatpush1.msra.mxu0 0.0
        %431 = vmatprep.subr.mxu0 0.0
        %432 = vmatpush1.msra.mxu0 0.0
        %433 = vmatprep.subr.mxu0 0.0
        %434 = vmatpush1.msra.mxu0 0.0
        %435 = vmatprep.subr.mxu0 0.0
        %436 = vmatpush1.msra.mxu0 0.0
        %437 = vmatprep.subr.mxu0 0.0
        %438 = vmatpush1.msra.mxu0 0.0
        %439 = vmatprep.subr.mxu0 0.0
        %440 = vmatpush1.msra.mxu0 0.0
        %441 = vmatprep.subr.mxu0 0.0
        %442 = vmatpush1.msra.mxu0 0.0
        %443 = vmatprep.subr.mxu0 0.0
        %444 = vmatpush1.msra.mxu0 0.0
        %445 = vmatprep.subr.mxu0 0.0
        %446 = vmatpush1.msra.mxu0 0.0
        %447 = vmatprep.subr.mxu0 0.0
        %448 = vmatpush1.msra.mxu0 0.0
        %449 = vmatprep.subr.mxu0 0.0
        %450 = vmatpush1.msra.mxu0 0.0
        %451 = vmatprep.subr.mxu0 0.0
        %452 = vmatpush1.msra.mxu0 0.0
        %453 = vmatprep.subr.mxu0 0.0
        %454 = vmatpush1.msra.mxu0 0.0
        %455 = vmatprep.subr.mxu0 0.0
        %456 = vmatpush1.msra.mxu0 0.0
        %457 = vmatprep.subr.mxu0 0.0
        %458 = vmatpush1.msra.mxu0 0.0
        %459 = vmatprep.subr.mxu0 0.0
        %460 = vmatpush1.msra.mxu0 0.0
        %461 = vmatprep.subr.mxu0 0.0
        %462 = vmatpush1.msra.mxu0 0.0
        %463 = vmatprep.subr.mxu0 0.0
        %464 = vmatpush1.msra.mxu0 0.0
        %465 = vmatprep.subr.mxu0 0.0
        %466 = vmatpush1.msra.mxu0 0.0
        %467 = vmatprep.mubr.f32.mxu0 0.0
        %468 = vmatmul.mubr.f32.gmra.mrb[0].mxu0 %v395
        %v469 = vpop.f32.mrb[0].mxu0
        %v470 = vadd.f32 0.0, %v469
        %v471 = vpop.f32.mrb[0].mxu0
        %472 = vmatprep.mubr.f32.mxu0 0.0
        %473 = vmatmul.mubr.f32.gmra.mrb[0].mxu0 %v398
        %v474 = vpop.f32.mrb[0].mxu0
        %v475 = vadd.f32 0.0, %v474
        %v476 = vpop.f32.mrb[0].mxu0
        %477 = vmatprep.mubr.f32.mxu0 0.0
        %478 = vmatmul.mubr.f32.gmra.mrb[0].mxu0 %v401
        %v479 = vpop.f32.mrb[0].mxu0
        %v480 = vadd.f32 0.0, %v479
        %v481 = vpop.f32.mrb[0].mxu0
        %482 = vdwg.mxu0
        %s483 = scalar_lea.vmem %s280, 16
        %v484 = vld [vmem:[%s483] sm:$0xff]
        %v485 = vld [vmem:[%s483 + $0x8] sm:$0xff]
        %486 = vmatprep.subr.mxu0 0.0
        %487 = vmatpush1.msra.mxu0 %v484
        %488 = vmatprep.subr.mxu0 0.0
        %489 = vmatpush1.msra.mxu0 %v485
        %490 = vmatprep.subr.mxu0 0.0
        %491 = vmatpush1.msra.mxu0 0.0
        %492 = vmatprep.subr.mxu0 0.0
        %493 = vmatpush1.msra.mxu0 0.0
        %494 = vmatprep.subr.mxu0 0.0
        %495 = vmatpush1.msra.mxu0 0.0
        %496 = vmatprep.subr.mxu0 0.0
        %497 = vmatpush1.msra.mxu0 0.0
        %498 = vmatprep.subr.mxu0 0.0
        %499 = vmatpush1.msra.mxu0 0.0
        %500 = vmatprep.subr.mxu0 0.0
        %501 = vmatpush1.msra.mxu0 0.0
        %502 = vmatprep.subr.mxu0 0.0
        %503 = vmatpush1.msra.mxu0 0.0
        %504 = vmatprep.subr.mxu0 0.0
        %505 = vmatpush1.msra.mxu0 0.0
        %506 = vmatprep.subr.mxu0 0.0
        %507 = vmatpush1.msra.mxu0 0.0
        %508 = vmatprep.subr.mxu0 0.0
        %509 = vmatpush1.msra.mxu0 0.0
        %510 = vmatprep.subr.mxu0 0.0
        %511 = vmatpush1.msra.mxu0 0.0
        %512 = vmatprep.subr.mxu0 0.0
        %513 = vmatpush1.msra.mxu0 0.0
        %514 = vmatprep.subr.mxu0 0.0
        %515 = vmatpush1.msra.mxu0 0.0
        %516 = vmatprep.subr.mxu0 0.0
        %517 = vmatpush1.msra.mxu0 0.0
        %518 = vmatprep.subr.mxu0 0.0
        %519 = vmatpush1.msra.mxu0 0.0
        %520 = vmatprep.subr.mxu0 0.0
        %521 = vmatpush1.msra.mxu0 0.0
        %522 = vmatprep.subr.mxu0 0.0
        %523 = vmatpush1.msra.mxu0 0.0
        %524 = vmatprep.subr.mxu0 0.0
        %525 = vmatpush1.msra.mxu0 0.0
        %526 = vmatprep.subr.mxu0 0.0
        %527 = vmatpush1.msra.mxu0 0.0
        %528 = vmatprep.subr.mxu0 0.0
        %529 = vmatpush1.msra.mxu0 0.0
        %530 = vmatprep.subr.mxu0 0.0
        %531 = vmatpush1.msra.mxu0 0.0
        %532 = vmatprep.subr.mxu0 0.0
        %533 = vmatpush1.msra.mxu0 0.0
        %534 = vmatprep.subr.mxu0 0.0
        %535 = vmatpush1.msra.mxu0 0.0
        %536 = vmatprep.subr.mxu0 0.0
        %537 = vmatpush1.msra.mxu0 0.0
        %538 = vmatprep.subr.mxu0 0.0
        %539 = vmatpush1.msra.mxu0 0.0
        %540 = vmatprep.subr.mxu0 0.0
        %541 = vmatpush1.msra.mxu0 0.0
        %542 = vmatprep.subr.mxu0 0.0
        %543 = vmatpush1.msra.mxu0 0.0
        %544 = vmatprep.subr.mxu0 0.0
        %545 = vmatpush1.msra.mxu0 0.0
        %546 = vmatprep.subr.mxu0 0.0
        %547 = vmatpush1.msra.mxu0 0.0
        %548 = vmatprep.subr.mxu0 0.0
        %549 = vmatpush1.msra.mxu0 0.0
        %550 = vmatprep.mubr.f32.mxu0 0.0
        %551 = vmatmul.mubr.f32.gmra.mrb[0].mxu0 %v306
        %v552 = vpop.f32.mrb[0].mxu0
        %v553 = vadd.f32 0.0, %v552
        %v554 = vpop.f32.mrb[0].mxu0
        %555 = vmatprep.mubr.f32.mxu0 0.0
        %556 = vmatmul.mubr.f32.gmra.mrb[0].mxu0 %v309
        %v557 = vpop.f32.mrb[0].mxu0
        %v558 = vadd.f32 0.0, %v557
        %v559 = vpop.f32.mrb[0].mxu0
        %560 = vmatprep.mubr.f32.mxu0 0.0
        %561 = vmatmul.mubr.f32.gmra.mrb[0].mxu0 %v312
        %v562 = vpop.f32.mrb[0].mxu0
        %v563 = vadd.f32 0.0, %v562
        %v564 = vpop.f32.mrb[0].mxu0
        %565 = vdwg.mxu0
        %v567 = vsel %vm304, %v553, 0
        %v570 = vsel %vm304, %v558, 0
        %v573 = vsel %vm304, %v563, 0
        %575 = vmatprep.subr.mxu0 0.0
        %576 = vmatpush1.msra.mxu0 %v300
        %577 = vmatprep.subr.mxu0 0.0
        %578 = vmatpush1.msra.mxu0 %v301
        %579 = vmatprep.subr.mxu0 0.0
        %580 = vmatpush1.msra.mxu0 0.0
        %581 = vmatprep.subr.mxu0 0.0
        %582 = vmatpush1.msra.mxu0 0.0
        %583 = vmatprep.subr.mxu0 0.0
        %584 = vmatpush1.msra.mxu0 0.0
        %585 = vmatprep.subr.mxu0 0.0
        %586 = vmatpush1.msra.mxu0 0.0
        %587 = vmatprep.subr.mxu0 0.0
        %588 = vmatpush1.msra.mxu0 0.0
        %589 = vmatprep.subr.mxu0 0.0
        %590 = vmatpush1.msra.mxu0 0.0
        %591 = vmatprep.subr.mxu0 0.0
        %592 = vmatpush1.msra.mxu0 0.0
        %593 = vmatprep.subr.mxu0 0.0
        %594 = vmatpush1.msra.mxu0 0.0
        %595 = vmatprep.subr.mxu0 0.0
        %596 = vmatpush1.msra.mxu0 0.0
        %597 = vmatprep.subr.mxu0 0.0
        %598 = vmatpush1.msra.mxu0 0.0
        %599 = vmatprep.subr.mxu0 0.0
        %600 = vmatpush1.msra.mxu0 0.0
        %601 = vmatprep.subr.mxu0 0.0
        %602 = vmatpush1.msra.mxu0 0.0
        %603 = vmatprep.subr.mxu0 0.0
        %604 = vmatpush1.msra.mxu0 0.0
        %605 = vmatprep.subr.mxu0 0.0
        %606 = vmatpush1.msra.mxu0 0.0
        %607 = vmatprep.subr.mxu0 0.0
        %608 = vmatpush1.msra.mxu0 0.0
        %609 = vmatprep.subr.mxu0 0.0
        %610 = vmatpush1.msra.mxu0 0.0
        %611 = vmatprep.subr.mxu0 0.0
        %612 = vmatpush1.msra.mxu0 0.0
        %613 = vmatprep.subr.mxu0 0.0
        %614 = vmatpush1.msra.mxu0 0.0
        %615 = vmatprep.subr.mxu0 0.0
        %616 = vmatpush1.msra.mxu0 0.0
        %617 = vmatprep.subr.mxu0 0.0
        %618 = vmatpush1.msra.mxu0 0.0
        %619 = vmatprep.subr.mxu0 0.0
        %620 = vmatpush1.msra.mxu0 0.0
        %621 = vmatprep.subr.mxu0 0.0
        %622 = vmatpush1.msra.mxu0 0.0
        %623 = vmatprep.subr.mxu0 0.0
        %624 = vmatpush1.msra.mxu0 0.0
        %625 = vmatprep.subr.mxu0 0.0
        %626 = vmatpush1.msra.mxu0 0.0
        %627 = vmatprep.subr.mxu0 0.0
        %628 = vmatpush1.msra.mxu0 0.0
        %629 = vmatprep.subr.mxu0 0.0
        %630 = vmatpush1.msra.mxu0 0.0
        %631 = vmatprep.subr.mxu0 0.0
        %632 = vmatpush1.msra.mxu0 0.0
        %633 = vmatprep.subr.mxu0 0.0
        %634 = vmatpush1.msra.mxu0 0.0
        %635 = vmatprep.subr.mxu0 0.0
        %636 = vmatpush1.msra.mxu0 0.0
        %637 = vmatprep.subr.mxu0 0.0
        %638 = vmatpush1.msra.mxu0 0.0
        %639 = vmatprep.mubr.f32.mxu0 0.0
        %640 = vmatmul.mubr.f32.gmra.mrb[0].mxu0 %v567
        %v641 = vpop.f32.mrb[0].mxu0
        %v642 = vadd.f32 0.0, %v641
        %v643 = vpop.f32.mrb[0].mxu0
        %644 = vmatprep.mubr.f32.mxu0 0.0
        %645 = vmatmul.mubr.f32.gmra.mrb[0].mxu0 %v570
        %v646 = vpop.f32.mrb[0].mxu0
        %v647 = vadd.f32 0.0, %v646
        %v648 = vpop.f32.mrb[0].mxu0
        %649 = vmatprep.mubr.f32.mxu0 0.0
        %650 = vmatmul.mubr.f32.gmra.mrb[0].mxu0 %v573
        %v651 = vpop.f32.mrb[0].mxu0
        %v652 = vadd.f32 0.0, %v651
        %v653 = vpop.f32.mrb[0].mxu0
        %654 = vdwg.mxu0
        %s655 = scalar_lea.vmem %s280, 32
        %v656 = vld [vmem:[%s655] sm:$0xff]
        %v657 = vld [vmem:[%s655 + $0x8] sm:$0xff]
        %658 = vmatprep.subr.mxu0 0.0
        %659 = vmatpush1.msra.mxu0 %v656
        %660 = vmatprep.subr.mxu0 0.0
        %661 = vmatpush1.msra.mxu0 %v657
        %662 = vmatprep.subr.mxu0 0.0
        %663 = vmatpush1.msra.mxu0 0.0
        %664 = vmatprep.subr.mxu0 0.0
        %665 = vmatpush1.msra.mxu0 0.0
        %666 = vmatprep.subr.mxu0 0.0
        %667 = vmatpush1.msra.mxu0 0.0
        %668 = vmatprep.subr.mxu0 0.0
        %669 = vmatpush1.msra.mxu0 0.0
        %670 = vmatprep.subr.mxu0 0.0
        %671 = vmatpush1.msra.mxu0 0.0
        %672 = vmatprep.subr.mxu0 0.0
        %673 = vmatpush1.msra.mxu0 0.0
        %674 = vmatprep.subr.mxu0 0.0
        %675 = vmatpush1.msra.mxu0 0.0
        %676 = vmatprep.subr.mxu0 0.0
        %677 = vmatpush1.msra.mxu0 0.0
        %678 = vmatprep.subr.mxu0 0.0
        %679 = vmatpush1.msra.mxu0 0.0
        %680 = vmatprep.subr.mxu0 0.0
        %681 = vmatpush1.msra.mxu0 0.0
        %682 = vmatprep.subr.mxu0 0.0
        %683 = vmatpush1.msra.mxu0 0.0
        %684 = vmatprep.subr.mxu0 0.0
        %685 = vmatpush1.msra.mxu0 0.0
        %686 = vmatprep.subr.mxu0 0.0
        %687 = vmatpush1.msra.mxu0 0.0
        %688 = vmatprep.subr.mxu0 0.0
        %689 = vmatpush1.msra.mxu0 0.0
        %690 = vmatprep.subr.mxu0 0.0
        %691 = vmatpush1.msra.mxu0 0.0
        %692 = vmatprep.subr.mxu0 0.0
        %693 = vmatpush1.msra.mxu0 0.0
        %694 = vmatprep.subr.mxu0 0.0
        %695 = vmatpush1.msra.mxu0 0.0
        %696 = vmatprep.subr.mxu0 0.0
        %697 = vmatpush1.msra.mxu0 0.0
        %698 = vmatprep.subr.mxu0 0.0
        %699 = vmatpush1.msra.mxu0 0.0
        %700 = vmatprep.subr.mxu0 0.0
        %701 = vmatpush1.msra.mxu0 0.0
        %702 = vmatprep.subr.mxu0 0.0
        %703 = vmatpush1.msra.mxu0 0.0
        %704 = vmatprep.subr.mxu0 0.0
        %705 = vmatpush1.msra.mxu0 0.0
        %706 = vmatprep.subr.mxu0 0.0
        %707 = vmatpush1.msra.mxu0 0.0
        %708 = vmatprep.subr.mxu0 0.0
        %709 = vmatpush1.msra.mxu0 0.0
        %710 = vmatprep.subr.mxu0 0.0
        %711 = vmatpush1.msra.mxu0 0.0
        %712 = vmatprep.subr.mxu0 0.0
        %713 = vmatpush1.msra.mxu0 0.0
        %714 = vmatprep.subr.mxu0 0.0
        %715 = vmatpush1.msra.mxu0 0.0
        %716 = vmatprep.subr.mxu0 0.0
        %717 = vmatpush1.msra.mxu0 0.0
        %718 = vmatprep.subr.mxu0 0.0
        %719 = vmatpush1.msra.mxu0 0.0
        %720 = vmatprep.subr.mxu0 0.0
        %721 = vmatpush1.msra.mxu0 0.0
        %722 = vmatprep.mubr.f32.mxu0 0.0
        %723 = vmatmul.mubr.f32.gmra.mrb[0].mxu0 %v306
        %v724 = vpop.f32.mrb[0].mxu0
        %v725 = vadd.f32 0.0, %v724
        %v726 = vpop.f32.mrb[0].mxu0
        %727 = vmatprep.mubr.f32.mxu0 0.0
        %728 = vmatmul.mubr.f32.gmra.mrb[0].mxu0 %v309
        %v729 = vpop.f32.mrb[0].mxu0
        %v730 = vadd.f32 0.0, %v729
        %v731 = vpop.f32.mrb[0].mxu0
        %732 = vmatprep.mubr.f32.mxu0 0.0
        %733 = vmatmul.mubr.f32.gmra.mrb[0].mxu0 %v312
        %v734 = vpop.f32.mrb[0].mxu0
        %v735 = vadd.f32 0.0, %v734
        %v736 = vpop.f32.mrb[0].mxu0
        %737 = vdwg.mxu0
        %v739 = vsel %vm304, %v725, 0
        %v742 = vsel %vm304, %v730, 0
        %v745 = vsel %vm304, %v735, 0
        %747 = vmatprep.subr.mxu0 0.0
        %748 = vmatpush1.msra.mxu0 %v300
        %749 = vmatprep.subr.mxu0 0.0
        %750 = vmatpush1.msra.mxu0 %v301
        %751 = vmatprep.subr.mxu0 0.0
        %752 = vmatpush1.msra.mxu0 0.0
        %753 = vmatprep.subr.mxu0 0.0
        %754 = vmatpush1.msra.mxu0 0.0
        %755 = vmatprep.subr.mxu0 0.0
        %756 = vmatpush1.msra.mxu0 0.0
        %757 = vmatprep.subr.mxu0 0.0
        %758 = vmatpush1.msra.mxu0 0.0
        %759 = vmatprep.subr.mxu0 0.0
        %760 = vmatpush1.msra.mxu0 0.0
        %761 = vmatprep.subr.mxu0 0.0
        %762 = vmatpush1.msra.mxu0 0.0
        %763 = vmatprep.subr.mxu0 0.0
        %764 = vmatpush1.msra.mxu0 0.0
        %765 = vmatprep.subr.mxu0 0.0
        %766 = vmatpush1.msra.mxu0 0.0
        %767 = vmatprep.subr.mxu0 0.0
        %768 = vmatpush1.msra.mxu0 0.0
        %769 = vmatprep.subr.mxu0 0.0
        %770 = vmatpush1.msra.mxu0 0.0
        %771 = vmatprep.subr.mxu0 0.0
        %772 = vmatpush1.msra.mxu0 0.0
        %773 = vmatprep.subr.mxu0 0.0
        %774 = vmatpush1.msra.mxu0 0.0
        %775 = vmatprep.subr.mxu0 0.0
        %776 = vmatpush1.msra.mxu0 0.0
        %777 = vmatprep.subr.mxu0 0.0
        %778 = vmatpush1.msra.mxu0 0.0
        %779 = vmatprep.subr.mxu0 0.0
        %780 = vmatpush1.msra.mxu0 0.0
        %781 = vmatprep.subr.mxu0 0.0
        %782 = vmatpush1.msra.mxu0 0.0
        %783 = vmatprep.subr.mxu0 0.0
        %784 = vmatpush1.msra.mxu0 0.0
        %785 = vmatprep.subr.mxu0 0.0
        %786 = vmatpush1.msra.mxu0 0.0
        %787 = vmatprep.subr.mxu0 0.0
        %788 = vmatpush1.msra.mxu0 0.0
        %789 = vmatprep.subr.mxu0 0.0
        %790 = vmatpush1.msra.mxu0 0.0
        %791 = vmatprep.subr.mxu0 0.0
        %792 = vmatpush1.msra.mxu0 0.0
        %793 = vmatprep.subr.mxu0 0.0
        %794 = vmatpush1.msra.mxu0 0.0
        %795 = vmatprep.subr.mxu0 0.0
        %796 = vmatpush1.msra.mxu0 0.0
        %797 = vmatprep.subr.mxu0 0.0
        %798 = vmatpush1.msra.mxu0 0.0
        %799 = vmatprep.subr.mxu0 0.0
        %800 = vmatpush1.msra.mxu0 0.0
        %801 = vmatprep.subr.mxu0 0.0
        %802 = vmatpush1.msra.mxu0 0.0
        %803 = vmatprep.subr.mxu0 0.0
        %804 = vmatpush1.msra.mxu0 0.0
        %805 = vmatprep.subr.mxu0 0.0
        %806 = vmatpush1.msra.mxu0 0.0
        %807 = vmatprep.subr.mxu0 0.0
        %808 = vmatpush1.msra.mxu0 0.0
        %809 = vmatprep.subr.mxu0 0.0
        %810 = vmatpush1.msra.mxu0 0.0
        %811 = vmatprep.mubr.f32.mxu0 0.0
        %812 = vmatmul.mubr.f32.gmra.mrb[0].mxu0 %v739
        %v813 = vpop.f32.mrb[0].mxu0
        %v814 = vadd.f32 0.0, %v813
        %v815 = vpop.f32.mrb[0].mxu0
        %816 = vmatprep.mubr.f32.mxu0 0.0
        %817 = vmatmul.mubr.f32.gmra.mrb[0].mxu0 %v742
        %v818 = vpop.f32.mrb[0].mxu0
        %v819 = vadd.f32 0.0, %v818
        %v820 = vpop.f32.mrb[0].mxu0
        %821 = vmatprep.mubr.f32.mxu0 0.0
        %822 = vmatmul.mubr.f32.gmra.mrb[0].mxu0 %v745
        %v823 = vpop.f32.mrb[0].mxu0
        %v824 = vadd.f32 0.0, %v823
        %v825 = vpop.f32.mrb[0].mxu0
        %826 = vdwg.mxu0
        %s827 = scalar_lea.vmem %s280, 48
        %v828 = vld [vmem:[%s827] sm:$0xff]
        %v829 = vld [vmem:[%s827 + $0x8] sm:$0xff]
        %830 = vmatprep.subr.mxu0 0.0
        %831 = vmatpush1.msra.mxu0 %v828
        %832 = vmatprep.subr.mxu0 0.0
        %833 = vmatpush1.msra.mxu0 %v829
        %834 = vmatprep.subr.mxu0 0.0
        %835 = vmatpush1.msra.mxu0 0.0
        %836 = vmatprep.subr.mxu0 0.0
        %837 = vmatpush1.msra.mxu0 0.0
        %838 = vmatprep.subr.mxu0 0.0
        %839 = vmatpush1.msra.mxu0 0.0
        %840 = vmatprep.subr.mxu0 0.0
        %841 = vmatpush1.msra.mxu0 0.0
        %842 = vmatprep.subr.mxu0 0.0
        %843 = vmatpush1.msra.mxu0 0.0
        %844 = vmatprep.subr.mxu0 0.0
        %845 = vmatpush1.msra.mxu0 0.0
        %846 = vmatprep.subr.mxu0 0.0
        %847 = vmatpush1.msra.mxu0 0.0
        %848 = vmatprep.subr.mxu0 0.0
        %849 = vmatpush1.msra.mxu0 0.0
        %850 = vmatprep.subr.mxu0 0.0
        %851 = vmatpush1.msra.mxu0 0.0
        %852 = vmatprep.subr.mxu0 0.0
        %853 = vmatpush1.msra.mxu0 0.0
        %854 = vmatprep.subr.mxu0 0.0
        %855 = vmatpush1.msra.mxu0 0.0
        %856 = vmatprep.subr.mxu0 0.0
        %857 = vmatpush1.msra.mxu0 0.0
        %858 = vmatprep.subr.mxu0 0.0
        %859 = vmatpush1.msra.mxu0 0.0
        %860 = vmatprep.subr.mxu0 0.0
        %861 = vmatpush1.msra.mxu0 0.0
        %862 = vmatprep.subr.mxu0 0.0
        %863 = vmatpush1.msra.mxu0 0.0
        %864 = vmatprep.subr.mxu0 0.0
        %865 = vmatpush1.msra.mxu0 0.0
        %866 = vmatprep.subr.mxu0 0.0
        %867 = vmatpush1.msra.mxu0 0.0
        %868 = vmatprep.subr.mxu0 0.0
        %869 = vmatpush1.msra.mxu0 0.0
        %870 = vmatprep.subr.mxu0 0.0
        %871 = vmatpush1.msra.mxu0 0.0
        %872 = vmatprep.subr.mxu0 0.0
        %873 = vmatpush1.msra.mxu0 0.0
        %874 = vmatprep.subr.mxu0 0.0
        %875 = vmatpush1.msra.mxu0 0.0
        %876 = vmatprep.subr.mxu0 0.0
        %877 = vmatpush1.msra.mxu0 0.0
        %878 = vmatprep.subr.mxu0 0.0
        %879 = vmatpush1.msra.mxu0 0.0
        %880 = vmatprep.subr.mxu0 0.0
        %881 = vmatpush1.msra.mxu0 0.0
        %882 = vmatprep.subr.mxu0 0.0
        %883 = vmatpush1.msra.mxu0 0.0
        %884 = vmatprep.subr.mxu0 0.0
        %885 = vmatpush1.msra.mxu0 0.0
        %886 = vmatprep.subr.mxu0 0.0
        %887 = vmatpush1.msra.mxu0 0.0
        %888 = vmatprep.subr.mxu0 0.0
        %889 = vmatpush1.msra.mxu0 0.0
        %890 = vmatprep.subr.mxu0 0.0
        %891 = vmatpush1.msra.mxu0 0.0
        %892 = vmatprep.subr.mxu0 0.0
        %893 = vmatpush1.msra.mxu0 0.0
        %894 = vmatprep.mubr.f32.mxu0 0.0
        %895 = vmatmul.mubr.f32.gmra.mrb[0].mxu0 %v306
        %v896 = vpop.f32.mrb[0].mxu0
        %v897 = vadd.f32 0.0, %v896
        %v898 = vpop.f32.mrb[0].mxu0
        %899 = vmatprep.mubr.f32.mxu0 0.0
        %900 = vmatmul.mubr.f32.gmra.mrb[0].mxu0 %v309
        %v901 = vpop.f32.mrb[0].mxu0
        %v902 = vadd.f32 0.0, %v901
        %v903 = vpop.f32.mrb[0].mxu0
        %904 = vmatprep.mubr.f32.mxu0 0.0
        %905 = vmatmul.mubr.f32.gmra.mrb[0].mxu0 %v312
        %v906 = vpop.f32.mrb[0].mxu0
        %v907 = vadd.f32 0.0, %v906
        %v908 = vpop.f32.mrb[0].mxu0
        %909 = vdwg.mxu0
        %v911 = vsel %vm304, %v897, 0
        %v914 = vsel %vm304, %v902, 0
        %v917 = vsel %vm304, %v907, 0
        %919 = vmatprep.subr.mxu0 0.0
        %920 = vmatpush1.msra.mxu0 %v300
        %921 = vmatprep.subr.mxu0 0.0
        %922 = vmatpush1.msra.mxu0 %v301
        %923 = vmatprep.subr.mxu0 0.0
        %924 = vmatpush1.msra.mxu0 0.0
        %925 = vmatprep.subr.mxu0 0.0
        %926 = vmatpush1.msra.mxu0 0.0
        %927 = vmatprep.subr.mxu0 0.0
        %928 = vmatpush1.msra.mxu0 0.0
        %929 = vmatprep.subr.mxu0 0.0
        %930 = vmatpush1.msra.mxu0 0.0
        %931 = vmatprep.subr.mxu0 0.0
        %932 = vmatpush1.msra.mxu0 0.0
        %933 = vmatprep.subr.mxu0 0.0
        %934 = vmatpush1.msra.mxu0 0.0
        %935 = vmatprep.subr.mxu0 0.0
        %936 = vmatpush1.msra.mxu0 0.0
        %937 = vmatprep.subr.mxu0 0.0
        %938 = vmatpush1.msra.mxu0 0.0
        %939 = vmatprep.subr.mxu0 0.0
        %940 = vmatpush1.msra.mxu0 0.0
        %941 = vmatprep.subr.mxu0 0.0
        %942 = vmatpush1.msra.mxu0 0.0
        %943 = vmatprep.subr.mxu0 0.0
        %944 = vmatpush1.msra.mxu0 0.0
        %945 = vmatprep.subr.mxu0 0.0
        %946 = vmatpush1.msra.mxu0 0.0
        %947 = vmatprep.subr.mxu0 0.0
        %948 = vmatpush1.msra.mxu0 0.0
        %949 = vmatprep.subr.mxu0 0.0
        %950 = vmatpush1.msra.mxu0 0.0
        %951 = vmatprep.subr.mxu0 0.0
        %952 = vmatpush1.msra.mxu0 0.0
        %953 = vmatprep.subr.mxu0 0.0
        %954 = vmatpush1.msra.mxu0 0.0
        %955 = vmatprep.subr.mxu0 0.0
        %956 = vmatpush1.msra.mxu0 0.0
        %957 = vmatprep.subr.mxu0 0.0
        %958 = vmatpush1.msra.mxu0 0.0
        %959 = vmatprep.subr.mxu0 0.0
        %960 = vmatpush1.msra.mxu0 0.0
        %961 = vmatprep.subr.mxu0 0.0
        %962 = vmatpush1.msra.mxu0 0.0
        %963 = vmatprep.subr.mxu0 0.0
        %964 = vmatpush1.msra.mxu0 0.0
        %965 = vmatprep.subr.mxu0 0.0
        %966 = vmatpush1.msra.mxu0 0.0
        %967 = vmatprep.subr.mxu0 0.0
        %968 = vmatpush1.msra.mxu0 0.0
        %969 = vmatprep.subr.mxu0 0.0
        %970 = vmatpush1.msra.mxu0 0.0
        %971 = vmatprep.subr.mxu0 0.0
        %972 = vmatpush1.msra.mxu0 0.0
        %973 = vmatprep.subr.mxu0 0.0
        %974 = vmatpush1.msra.mxu0 0.0
        %975 = vmatprep.subr.mxu0 0.0
        %976 = vmatpush1.msra.mxu0 0.0
        %977 = vmatprep.subr.mxu0 0.0
        %978 = vmatpush1.msra.mxu0 0.0
        %979 = vmatprep.subr.mxu0 0.0
        %980 = vmatpush1.msra.mxu0 0.0
        %981 = vmatprep.subr.mxu0 0.0
        %982 = vmatpush1.msra.mxu0 0.0
        %983 = vmatprep.mubr.f32.mxu0 0.0
        %984 = vmatmul.mubr.f32.gmra.mrb[0].mxu0 %v911
        %v985 = vpop.f32.mrb[0].mxu0
        %v986 = vadd.f32 0.0, %v985
        %v987 = vpop.f32.mrb[0].mxu0
        %988 = vmatprep.mubr.f32.mxu0 0.0
        %989 = vmatmul.mubr.f32.gmra.mrb[0].mxu0 %v914
        %v990 = vpop.f32.mrb[0].mxu0
        %v991 = vadd.f32 0.0, %v990
        %v992 = vpop.f32.mrb[0].mxu0
        %993 = vmatprep.mubr.f32.mxu0 0.0
        %994 = vmatmul.mubr.f32.gmra.mrb[0].mxu0 %v917
        %v995 = vpop.f32.mrb[0].mxu0
        %v996 = vadd.f32 0.0, %v995
        %v997 = vpop.f32.mrb[0].mxu0
        %998 = vdwg.mxu0
        %s999 = sld [smem:[#allocation2]]
        %v1000 = vstv %s999
        %v1001 = vmul.f32 %v470, %v1000
        %v1002 = vmul.f32 %v475, %v1000
        %v1003 = vmul.f32 %v480, %v1000
        %s1004 = sld [smem:[#allocation4]]
        %v1005 = vstv %s1004
        %v1006 = vadd.f32 %v1001, %v1005
        %v1007 = vadd.f32 %v1002, %v1005
        %v1008 = vadd.f32 %v1003, %v1005
        %s1009 = sld [smem:[#allocation2 + $0x1]]
        %v1010 = vstv %s1009
        %v1011 = vmul.f32 %v642, %v1010
        %v1012 = vmul.f32 %v647, %v1010
        %v1013 = vmul.f32 %v652, %v1010
        %v1014 = vadd.f32 %v1006, %v1011
        %v1015 = vadd.f32 %v1007, %v1012
        %v1016 = vadd.f32 %v1008, %v1013
        %s1017 = sld [smem:[#allocation2 + $0x2]]
        %v1018 = vstv %s1017
        %v1019 = vmul.f32 %v814, %v1018
        %v1020 = vmul.f32 %v819, %v1018
        %v1021 = vmul.f32 %v824, %v1018
        %v1022 = vadd.f32 %v1014, %v1019
        %v1023 = vadd.f32 %v1015, %v1020
        %v1024 = vadd.f32 %v1016, %v1021
        %s1025 = sld [smem:[#allocation2 + $0x3]]
        %v1026 = vstv %s1025
        %v1027 = vmul.f32 %v986, %v1026
        %v1028 = vmul.f32 %v991, %v1026
        %v1029 = vmul.f32 %v996, %v1026
        %v1030 = vadd.f32 %v1022, %v1027
        %v1031 = vadd.f32 %v1023, %v1028
        %v1032 = vadd.f32 %v1024, %v1029
        %vm1033 = vcmask 162816
        %1034 = vst.msk [vmem:[%s295] sm:$0xff] %vm1033, %v1030
        %1035 = vst.msk [vmem:[%s295 + $0x8] sm:$0xff] %vm1033, %v1031
        %vm1036 = vcmask 158720
        %1037 = vst.msk [vmem:[%s295 + $0x10] sm:$0xf] %vm1036, %v1032
        %s1038 = sld [smem:[#allocation2 + $0x80]]
        %v1039 = vstv %s1038
        %v1040 = vmul.f32 %v470, %v1039
        %v1041 = vmul.f32 %v475, %v1039
        %v1042 = vmul.f32 %v480, %v1039
        %s1043 = sld [smem:[#allocation4 + $0x1]]
        %v1044 = vstv %s1043
        %v1045 = vadd.f32 %v1040, %v1044
        %v1046 = vadd.f32 %v1041, %v1044
        %v1047 = vadd.f32 %v1042, %v1044
        %s1048 = sld [smem:[#allocation2 + $0x81]]
        %v1049 = vstv %s1048
        %v1050 = vmul.f32 %v642, %v1049
        %v1051 = vmul.f32 %v647, %v1049
        %v1052 = vmul.f32 %v652, %v1049
        %v1053 = vadd.f32 %v1045, %v1050
        %v1054 = vadd.f32 %v1046, %v1051
        %v1055 = vadd.f32 %v1047, %v1052
        %s1056 = sld [smem:[#allocation2 + $0x82]]
        %v1057 = vstv %s1056
        %v1058 = vmul.f32 %v814, %v1057
        %v1059 = vmul.f32 %v819, %v1057
        %v1060 = vmul.f32 %v824, %v1057
        %v1061 = vadd.f32 %v1053, %v1058
        %v1062 = vadd.f32 %v1054, %v1059
        %v1063 = vadd.f32 %v1055, %v1060
        %s1064 = sld [smem:[#allocation2 + $0x83]]
        %v1065 = vstv %s1064
        %v1066 = vmul.f32 %v986, %v1065
        %v1067 = vmul.f32 %v991, %v1065
        %v1068 = vmul.f32 %v996, %v1065
        %v1069 = vadd.f32 %v1061, %v1066
        %v1070 = vadd.f32 %v1062, %v1067
        %v1071 = vadd.f32 %v1063, %v1068
        %s1072 = scalar_lea.vmem %s295, 24
        %1073 = vst.msk [vmem:[%s1072] sm:$0xff] %vm1033, %v1069
        %1074 = vst.msk [vmem:[%s1072 + $0x8] sm:$0xff] %vm1033, %v1070
        %1075 = vst.msk [vmem:[%s1072 + $0x10] sm:$0xf] %vm1036, %v1071
        %s1076 = sld [smem:[#allocation2 + $0x100]]
        %v1077 = vstv %s1076
        %v1078 = vmul.f32 %v470, %v1077
        %v1079 = vmul.f32 %v475, %v1077
        %v1080 = vmul.f32 %v480, %v1077
        %s1081 = sld [smem:[#allocation4 + $0x2]]
        %v1082 = vstv %s1081
        %v1083 = vadd.f32 %v1078, %v1082
        %v1084 = vadd.f32 %v1079, %v1082
        %v1085 = vadd.f32 %v1080, %v1082
        %s1086 = sld [smem:[#allocation2 + $0x101]]
        %v1087 = vstv %s1086
        %v1088 = vmul.f32 %v642, %v1087
        %v1089 = vmul.f32 %v647, %v1087
        %v1090 = vmul.f32 %v652, %v1087
        %v1091 = vadd.f32 %v1083, %v1088
        %v1092 = vadd.f32 %v1084, %v1089
        %v1093 = vadd.f32 %v1085, %v1090
        %s1094 = sld [smem:[#allocation2 + $0x102]]
        %v1095 = vstv %s1094
        %v1096 = vmul.f32 %v814, %v1095
        %v1097 = vmul.f32 %v819, %v1095
        %v1098 = vmul.f32 %v824, %v1095
        %v1099 = vadd.f32 %v1091, %v1096
        %v1100 = vadd.f32 %v1092, %v1097
        %v1101 = vadd.f32 %v1093, %v1098
        %s1102 = sld [smem:[#allocation2 + $0x103]]
        %v1103 = vstv %s1102
        %v1104 = vmul.f32 %v986, %v1103
        %v1105 = vmul.f32 %v991, %v1103
        %v1106 = vmul.f32 %v996, %v1103
        %v1107 = vadd.f32 %v1099, %v1104
        %v1108 = vadd.f32 %v1100, %v1105
        %v1109 = vadd.f32 %v1101, %v1106
        %s1110 = scalar_lea.vmem %s295, 48
        %1111 = vst.msk [vmem:[%s1110] sm:$0xff] %vm1033, %v1107
        %1112 = vst.msk [vmem:[%s1110 + $0x8] sm:$0xff] %vm1033, %v1108
        %1113 = vst.msk [vmem:[%s1110 + $0x10] sm:$0xf] %vm1036, %v1109
        %s1114 = sld [smem:[#allocation2 + $0x180]]
        %v1115 = vstv %s1114
        %v1116 = vmul.f32 %v470, %v1115
        %v1117 = vmul.f32 %v475, %v1115
        %v1118 = vmul.f32 %v480, %v1115
        %s1119 = sld [smem:[#allocation4 + $0x3]]
        %v1120 = vstv %s1119
        %v1121 = vadd.f32 %v1116, %v1120
        %v1122 = vadd.f32 %v1117, %v1120
        %v1123 = vadd.f32 %v1118, %v1120
        %s1124 = sld [smem:[#allocation2 + $0x181]]
        %v1125 = vstv %s1124
        %v1126 = vmul.f32 %v642, %v1125
        %v1127 = vmul.f32 %v647, %v1125
        %v1128 = vmul.f32 %v652, %v1125
        %v1129 = vadd.f32 %v1121, %v1126
        %v1130 = vadd.f32 %v1122, %v1127
        %v1131 = vadd.f32 %v1123, %v1128
        %s1132 = sld [smem:[#allocation2 + $0x182]]
        %v1133 = vstv %s1132
        %v1134 = vmul.f32 %v814, %v1133
        %v1135 = vmul.f32 %v819, %v1133
        %v1136 = vmul.f32 %v824, %v1133
        %v1137 = vadd.f32 %v1129, %v1134
        %v1138 = vadd.f32 %v1130, %v1135
        %v1139 = vadd.f32 %v1131, %v1136
        %s1140 = sld [smem:[#allocation2 + $0x183]]
        %v1141 = vstv %s1140
        %v1142 = vmul.f32 %v986, %v1141
        %v1143 = vmul.f32 %v991, %v1141
        %v1144 = vmul.f32 %v996, %v1141
        %v1145 = vadd.f32 %v1137, %v1142
        %v1146 = vadd.f32 %v1138, %v1143
        %v1147 = vadd.f32 %v1139, %v1144
        %s1148 = scalar_lea.vmem %s295, 72
        %1149 = vst.msk [vmem:[%s1148] sm:$0xff] %vm1033, %v1145
        %1150 = vst.msk [vmem:[%s1148 + $0x8] sm:$0xff] %vm1033, %v1146
        %1151 = vst.msk [vmem:[%s1148 + $0x10] sm:$0xf] %vm1036, %v1147
        %s1152 = sld [smem:[#allocation2 + $0x200]]
        %v1153 = vstv %s1152
        %v1154 = vmul.f32 %v470, %v1153
        %v1155 = vmul.f32 %v475, %v1153
        %v1156 = vmul.f32 %v480, %v1153
        %s1157 = sld [smem:[#allocation4 + $0x4]]
        %v1158 = vstv %s1157
        %v1159 = vadd.f32 %v1154, %v1158
        %v1160 = vadd.f32 %v1155, %v1158
        %v1161 = vadd.f32 %v1156, %v1158
        %s1162 = sld [smem:[#allocation2 + $0x201]]
        %v1163 = vstv %s1162
        %v1164 = vmul.f32 %v642, %v1163
        %v1165 = vmul.f32 %v647, %v1163
        %v1166 = vmul.f32 %v652, %v1163
        %v1167 = vadd.f32 %v1159, %v1164
        %v1168 = vadd.f32 %v1160, %v1165
        %v1169 = vadd.f32 %v1161, %v1166
        %s1170 = sld [smem:[#allocation2 + $0x202]]
        %v1171 = vstv %s1170
        %v1172 = vmul.f32 %v814, %v1171
        %v1173 = vmul.f32 %v819, %v1171
        %v1174 = vmul.f32 %v824, %v1171
        %v1175 = vadd.f32 %v1167, %v1172
        %v1176 = vadd.f32 %v1168, %v1173
        %v1177 = vadd.f32 %v1169, %v1174
        %s1178 = sld [smem:[#allocation2 + $0x203]]
        %v1179 = vstv %s1178
        %v1180 = vmul.f32 %v986, %v1179
        %v1181 = vmul.f32 %v991, %v1179
        %v1182 = vmul.f32 %v996, %v1179
        %v1183 = vadd.f32 %v1175, %v1180
        %v1184 = vadd.f32 %v1176, %v1181
        %v1185 = vadd.f32 %v1177, %v1182
        %s1186 = scalar_lea.vmem %s295, 96
        %1187 = vst.msk [vmem:[%s1186] sm:$0xff] %vm1033, %v1183
        %1188 = vst.msk [vmem:[%s1186 + $0x8] sm:$0xff] %vm1033, %v1184
        %1189 = vst.msk [vmem:[%s1186 + $0x10] sm:$0xf] %vm1036, %v1185
        %s1190 = smul.u32 3, %s23
        %p1191 = scmp.lt.s32.totalorder %s22, 1
        %s1192 = scalar_select %p1191, %s22, 1
        %p1193 = scmp.lt.s32.totalorder %s1190, 2
        %s1194 = scalar_select %p1193, %s1190, 2
        %s1195 = smul.addr %s1192, 15
        %s1196 = sadd.s32 %s1194, %s1195
        %s1197 = smul.addr %s1196, 8
        %s1198 = scalar_lea.vmem %s5, %s1197
        // Predicated region
        $region49: #{multiscale_tta_forward.8} parent=39 // pred_check
          %p1199 = pneg %p165
        $region50: #{multiscale_tta_forward.8} parent=39 // pred_check_branch
          %1201 = sbr.rel (%p1199) target = $region52
        $region51: #{multiscale_tta_forward.8} parent=39 // pred_region
          %s1202 = smul.u32 3, %s23
        $region52: #{multiscale_tta_forward.8} parent=39 // pred_fallthru
          _
      $region40: #{multiscale_tta_forward.8} parent=5 // pred_fallthru
        _
      %p1203 = scmp.le.s32.totalorder 2, %s13
      // Predicated region
      $region53: #{multiscale_tta_forward.8} parent=5 // pred_check
        %p1204 = pneg %p1203
      $region54: #{multiscale_tta_forward.8} parent=5 // pred_check_branch
        %1206 = sbr.rel (%p1204) target = $region56
      $region55: #{multiscale_tta_forward.8} parent=5 // pred_region
        %s1207 = ssub.s32 %s13, 2
        // Predicated region
        $region57: #{multiscale_tta_forward.8} parent=55 // pred_check
          %p1208 = pneg %p171
        $region58: #{multiscale_tta_forward.8} parent=55 // pred_check_branch
          %1210 = sbr.rel (%p1208) target = $region60
        $region59: #{multiscale_tta_forward.8} parent=55 // pred_region
          %s1211 = smul.u32 3, %s25
          %p1212 = scmp.lt.s32.totalorder %s24, 1
          %s1213 = scalar_select %p1212, %s24, 1
          %p1214 = scmp.lt.s32.totalorder %s1211, 2
          %s1215 = scalar_select %p1214, %s1211, 2
          %s1216 = smul.addr %s1213, 15
          %s1217 = sadd.s32 %s1215, %s1216
          %s1218 = smul.addr %s1217, 8
          %s1219 = scalar_lea.vmem %s5, %s1218
        $region60: #{multiscale_tta_forward.8} parent=55 // pred_fallthru
          _
      $region56: #{multiscale_tta_forward.8} parent=5 // pred_fallthru
        _
    $region6: #{multiscale_tta_forward.8} parent=1 // loop_footer
      %s17 = sadd.s32 1, %s13
    $region7: #{multiscale_tta_forward.8} parent=1 // loop_footer_branch
      %12 = sbr.rel target = $region3
    $region8: #{multiscale_tta_forward.8} parent=1 // loop_exit
      _
    %1220 = vsyncpa [#allocation3], 1
    %s1221 = scalar_lea.sflag [#allocation3], 1
    %1222 = vsyncpa %s1221, 1
    %1223 = vsyncpa [#allocation5], 1

// kernel: multiscale_tta_forward.9
$region0: #{multiscale_tta_forward.9}
  #allocation0 [shape = 'u32[]', space=smem, size = 0x4, offset = 0x4, fixed_abs, tag = 'smem constant byte address 0x4 - core index']
  #allocation1 [shape = 'u32[144,128]{1,0:T(1,128)}', space=vmem, size = 0x12000, scoped, tag = 'internal scratch']
  %s0 = inlined_call_operand.vmem [shape: f32[10,16,16], index: 0, kind: input, shape index: {}, may-alias: {0,4}]
  %s1 = inlined_call_operand.vmem [shape: f32[10,20,20], index: 1, kind: input, shape index: {}]
  %s2 = inlined_call_operand.vmem [shape: f32[16,20], index: 2, kind: input, shape index: {}]
  %s3 = inlined_call_operand.vmem [shape: f32[20,16], index: 3, kind: input, shape index: {}]
  %s4 = inlined_call_operand.vmem [shape: f32[10,16,16], index: 4, kind: output, shape index: {}, may-alias: {0,4}]
  %s5 = sld [smem:[#allocation0]]
  $region49: #{multiscale_tta_forward.9} parent=0
    _
  %s7 = ssub.s32 1, %s5
  %s8 = scalar_select 0, %s7, %s5
  loop: start=0, step=1, limit=4
  $region2: #{multiscale_tta_forward.9} parent=0 // loop_pre_header
    _
  $region3: #{multiscale_tta_forward.9} parent=0 // loop_header
    %s10 = sphi 0, %s14
    %p11 = scmp.ge.s32.totalorder %s10, 4
    %s17 = sphi 0, %s29
    %s18 = sphi 0, %s25
    %s19 = sphi 0, %s17
    %s20 = sphi 0, %s18
    %s21 = sphi 0, %s19
    %s22 = sphi 0, %s20
    %s34 = sphi 0, %s36
    %s37 = sphi 0, %s34
    %s38 = sphi 0, %s37
    %s54 = sphi 0, %s38
    %s60 = sphi 0, %s62
    %s63 = sphi 0, %s60
    %s64 = sphi 0, %s63
    %s80 = sphi 0, %s64
    %s86 = sphi 0, %s88
    %s89 = sphi 0, %s86
    %s90 = sphi 0, %s89
    %s106 = sphi 0, %s90
    %s110 = sphi 0, %s110
    %s112 = sphi 0, %s110
    %s113 = sphi 0, %s112
    %s127 = sphi 0, %s113
    %s135 = sphi 0, %s137
    %s138 = sphi 0, %s135
    %s139 = sphi 0, %s138
    %s155 = sphi 0, %s139
  $region4: #{multiscale_tta_forward.9} parent=0 // loop_header_branch
    %13 = sbr.rel (%p11) target = $region8
  $region5: #{multiscale_tta_forward.9} parent=0 // loop_body
    %s15 = ssub.s32 %s10, 1
    %s16 = ssub.s32 %s10, 2
    %s23 = sadd.s32 1, %s18
    %p24 = scmp.ge.s32.totalorder %s23, 1
    %s25 = scalar_select %p24, 0, %s23
    %s26 = sadd.s32 1, %s17
    %s27 = scalar_select %p24, %s26, %s17
    %p28 = scmp.ge.s32.totalorder %s27, 2
    %s29 = scalar_select %p28, 0, %s27
    %s30 = ssub.s32 %s17, %s29
    %s31 = ssub.s32 %s18, %s25
    %s32 = sor.u32 %s30, %s31
    %p33 = scmp.eq.s32.totalorder %s32, 0
    %s35 = sadd.s32 %s34, 1
    %s36 = scalar_select %p33, %s34, %s35
    %p39 = pneg %p33
    %p40 = scmp.eq.s32.totalorder %s10, 1
    %p41 = por %p39, %p40
    %p42 = scmp.ne.s32.totalorder %s34, %s37
    %p43 = scmp.eq.s32.totalorder %s10, 0
    %p44 = por %p42, %p43
    %p45 = scmp.ne.s32.totalorder %s34, %s37
    %p46 = scmp.eq.s32.totalorder %s15, 1
    %p47 = por %p45, %p46
    %p48 = scmp.ne.s32.totalorder %s37, %s38
    %p49 = scmp.eq.s32.totalorder %s15, 0
    %p50 = por %p48, %p49
    %p51 = scmp.ne.s32.totalorder %s37, %s38
    %p52 = scmp.eq.s32.totalorder %s16, 1
    %p53 = por %p51, %p52
    %p55 = scmp.ne.s32.totalorder %s38, %s54
    %p56 = scmp.eq.s32.totalorder %s16, 0
    %p57 = por %p55, %p56
    %s58 = ssub.s32 %s17, %s29
    %p59 = scmp.eq.s32.totalorder %s58, 0
    %s61 = sadd.s32 %s60, 1
    %s62 = scalar_select %p59, %s60, %s61
    %p65 = pneg %p59
    %p66 = scmp.eq.s32.totalorder %s10, 1
    %p67 = por %p65, %p66
    %p68 = scmp.ne.s32.totalorder %s60, %s63
    %p69 = scmp.eq.s32.totalorder %s10, 0
    %p70 = por %p68, %p69
    %p71 = scmp.ne.s32.totalorder %s60, %s63
    %p72 = scmp.eq.s32.totalorder %s15, 1
    %p73 = por %p71, %p72
    %p74 = scmp.ne.s32.totalorder %s63, %s64
    %p75 = scmp.eq.s32.totalorder %s15, 0
    %p76 = por %p74, %p75
    %p77 = scmp.ne.s32.totalorder %s63, %s64
    %p78 = scmp.eq.s32.totalorder %s16, 1
    %p79 = por %p77, %p78
    %p81 = scmp.ne.s32.totalorder %s64, %s80
    %p82 = scmp.eq.s32.totalorder %s16, 0
    %p83 = por %p81, %p82
    %s84 = ssub.s32 %s18, %s25
    %p85 = scmp.eq.s32.totalorder %s84, 0
    %s87 = sadd.s32 %s86, 1
    %s88 = scalar_select %p85, %s86, %s87
    %p91 = pneg %p85
    %p92 = scmp.eq.s32.totalorder %s10, 1
    %p93 = por %p91, %p92
    %p94 = scmp.ne.s32.totalorder %s86, %s89
    %p95 = scmp.eq.s32.totalorder %s10, 0
    %p96 = por %p94, %p95
    %p97 = scmp.ne.s32.totalorder %s86, %s89
    %p98 = scmp.eq.s32.totalorder %s15, 1
    %p99 = por %p97, %p98
    %p100 = scmp.ne.s32.totalorder %s89, %s90
    %p101 = scmp.eq.s32.totalorder %s15, 0
    %p102 = por %p100, %p101
    %p103 = scmp.ne.s32.totalorder %s89, %s90
    %p104 = scmp.eq.s32.totalorder %s16, 1
    %p105 = por %p103, %p104
    %p107 = scmp.ne.s32.totalorder %s90, %s106
    %p108 = scmp.eq.s32.totalorder %s16, 0
    %p109 = por %p107, %p108
    %s111 = sadd.s32 %s110, 1
    %p114 = scmp.eq.s32.totalorder %s10, 1
    %p115 = scmp.ne.s32.totalorder %s110, %s112
    %p116 = scmp.eq.s32.totalorder %s10, 0
    %p117 = por %p115, %p116
    %p118 = scmp.ne.s32.totalorder %s110, %s112
    %p119 = scmp.eq.s32.totalorder %s15, 1
    %p120 = por %p118, %p119
    %p121 = scmp.ne.s32.totalorder %s112, %s113
    %p122 = scmp.eq.s32.totalorder %s15, 0
    %p123 = por %p121, %p122
    %p124 = scmp.ne.s32.totalorder %s112, %s113
    %p125 = scmp.eq.s32.totalorder %s16, 1
    %p126 = por %p124, %p125
    %p128 = scmp.ne.s32.totalorder %s113, %s127
    %p129 = scmp.eq.s32.totalorder %s16, 0
    %p130 = por %p128, %p129
    %s131 = ssub.s32 %s17, %s29
    %s132 = ssub.s32 %s18, %s25
    %s133 = sor.u32 %s131, %s132
    %p134 = scmp.eq.s32.totalorder %s133, 0
    %s136 = sadd.s32 %s135, 1
    %s137 = scalar_select %p134, %s135, %s136
    %p140 = pneg %p134
    %p141 = scmp.eq.s32.totalorder %s10, 1
    %p142 = por %p140, %p141
    %p143 = scmp.ne.s32.totalorder %s135, %s138
    %p144 = scmp.eq.s32.totalorder %s10, 0
    %p145 = por %p143, %p144
    %p146 = scmp.ne.s32.totalorder %s135, %s138
    %p147 = scmp.eq.s32.totalorder %s15, 1
    %p148 = por %p146, %p147
    %p149 = scmp.ne.s32.totalorder %s138, %s139
    %p150 = scmp.eq.s32.totalorder %s15, 0
    %p151 = por %p149, %p150
    %p152 = scmp.ne.s32.totalorder %s138, %s139
    %p153 = scmp.eq.s32.totalorder %s16, 1
    %p154 = por %p152, %p153
    %p156 = scmp.ne.s32.totalorder %s139, %s155
    %p157 = scmp.eq.s32.totalorder %s16, 0
    %p158 = por %p156, %p157
    %p159 = scmp.le.s32.totalorder 1, %s10
    %p160 = scmp.lt.s32.totalorder %s10, 3
    %p161 = pnand %p159, %p160
    %p162 = pneg %p161
    // Predicated region
    $region9: #{multiscale_tta_forward.9} parent=5 // pred_check
      _
    $region10: #{multiscale_tta_forward.9} parent=5 // pred_check_branch
      %164 = sbr.rel (%p161) target = $region12
    $region11: #{multiscale_tta_forward.9} parent=5 // pred_region
      %s165 = ssub.s32 %s10, 1
      // Predicated region
      $region13: #{multiscale_tta_forward.9} parent=11 // pred_check
        %p166 = pneg %p102
      $region14: #{multiscale_tta_forward.9} parent=11 // pred_check_branch
        %168 = sbr.rel (%p166) target = $region16
      $region15: #{multiscale_tta_forward.9} parent=11 // pred_region
        %s169 = smul.u32 2, %s20
        %p170 = scmp.lt.s32.totalorder %s169, 1
        %s171 = scalar_select %p170, %s169, 1
        %s172 = smul.addr %s171, 8
        %s173 = scalar_lea.vmem %s2, %s172
        %s174 = smul.u32 2, %s20
      $region16: #{multiscale_tta_forward.9} parent=11 // pred_fallthru
        _
      // Predicated region
      $region17: #{multiscale_tta_forward.9} parent=11 // pred_check
        %p175 = pneg %p123
      $region18: #{multiscale_tta_forward.9} parent=11 // pred_check_branch
        %177 = sbr.rel (%p175) target = $region20
      $region19: #{multiscale_tta_forward.9} parent=11 // pred_region
        _
      $region20: #{multiscale_tta_forward.9} parent=11 // pred_fallthru
        _
    $region12: #{multiscale_tta_forward.9} parent=5 // pred_fallthru
      _
    %p178 = scmp.lt.s32.totalorder %s10, 2
    // Predicated region
    $region21: #{multiscale_tta_forward.9} parent=5 // pred_check
      %p179 = pneg %p178
    $region22: #{multiscale_tta_forward.9} parent=5 // pred_check_branch
      %181 = sbr.rel (%p179) target = $region24
    $region23: #{multiscale_tta_forward.9} parent=5 // pred_region
      // Predicated region
      $region25: #{multiscale_tta_forward.9} parent=23 // pred_check
        %p182 = pneg %p44
      $region26: #{multiscale_tta_forward.9} parent=23 // pred_check_branch
        %184 = sbr.rel (%p182) target = $region28
      $region27: #{multiscale_tta_forward.9} parent=23 // pred_region
        %s185 = smul.u32 5, %s17
        %s186 = smul.u32 2, %s18
        %p187 = scmp.lt.s32.totalorder %s185, 9
        %s188 = scalar_select %p187, %s185, 9
        %p189 = scmp.lt.s32.totalorder %s186, 1
        %s190 = scalar_select %p189, %s186, 1
        %s191 = smul.addr %s188, 2
        %s192 = sadd.s32 %s190, %s191
        %s193 = smul.addr %s192, 8
        %s194 = scalar_lea.vmem %s0, %s193
        %s195 = smul.u32 5, %s17
        %s196 = smul.u32 2, %s18
      $region28: #{multiscale_tta_forward.9} parent=23 // pred_fallthru
        _
      // Predicated region
      $region29: #{multiscale_tta_forward.9} parent=23 // pred_check
        %p197 = pneg %p70
      $region30: #{multiscale_tta_forward.9} parent=23 // pred_check_branch
        %199 = sbr.rel (%p197) target = $region32
      $region31: #{multiscale_tta_forward.9} parent=23 // pred_region
        %s200 = smul.u32 5, %s17
        %p201 = scmp.lt.s32.totalorder %s200, 9
        %s202 = scalar_select %p201, %s200, 9
        %s203 = smul.addr %s202, 3
        %s204 = smul.addr %s203, 8
        %s205 = scalar_lea.vmem %s1, %s204
        %s206 = smul.u32 5, %s17
      $region32: #{multiscale_tta_forward.9} parent=23 // pred_fallthru
        _
    $region24: #{multiscale_tta_forward.9} parent=5 // pred_fallthru
      _
    %p207 = scmp.le.s32.totalorder 1, %s10
    %p208 = scmp.lt.s32.totalorder %s10, 3
    %p209 = pnand %p207, %p208
    %p210 = pneg %p209
    // Predicated region
    $region33: #{multiscale_tta_forward.9} parent=5 // pred_check
      _
    $region34: #{multiscale_tta_forward.9} parent=5 // pred_check_branch
      %212 = sbr.rel (%p209) target = $region36
    $region35: #{multiscale_tta_forward.9} parent=5 // pred_region
      %s213 = ssub.s32 %s10, 1
      %s214 = smul.u32 5, %s19
      %s215 = smul.u32 2, %s20
      %p216 = scmp.lt.s32.totalorder %s214, 9
      %s217 = scalar_select %p216, %s214, 9
      %p218 = scmp.lt.s32.totalorder %s215, 1
      %s219 = scalar_select %p218, %s215, 1
      %s220 = smul.addr %s217, 2
      %s221 = sadd.s32 %s219, %s220
      %s222 = smul.addr %s221, 8
      %s223 = scalar_lea.vmem %s0, %s222
      %p224 = pneg %p50
      %p225 = pneg %p47
      %s226 = smul.u32 5, %s19
      %p227 = scmp.lt.s32.totalorder %s226, 9
      %s228 = scalar_select %p227, %s226, 9
      %s229 = smul.addr %s228, 3
      %s230 = smul.addr %s229, 8
      %s231 = scalar_lea.vmem %s1, %s230
      %p232 = pneg %p76
      %p233 = pneg %p73
      %s234 = smul.u32 2, %s20
      %p235 = scmp.lt.s32.totalorder %s234, 1
      %s236 = scalar_select %p235, %s234, 1
      %s237 = smul.addr %s236, 8
      %s238 = scalar_lea.vmem %s2, %s237
      %p239 = pneg %p102
      %p240 = pneg %p99
      %p241 = pneg %p123
      %p242 = pneg %p120
      %p243 = pneg %p151
      %p244 = pneg %p148
      %s245 = smul.u32 5, %s19
      %s246 = smul.u32 2, %s20
      %p247 = scmp.lt.s32.totalorder %s245, 9
      %s248 = scalar_select %p247, %s245, 9
      %p249 = scmp.lt.s32.totalorder %s246, 1
      %s250 = scalar_select %p249, %s246, 1
      %s251 = smul.addr %s248, 2
      %s252 = sadd.s32 %s250, %s251
      %s253 = smul.addr %s252, 8
      %s254 = scalar_lea.vmem %s4, %s253
      %s255 = smul.u32 5, %s19
      %s256 = smul.u32 2, %s20
      %p257 = scmp.lt.s32.totalorder %s255, 9
      %s258 = scalar_select %p257, %s255, 9
      %p259 = scmp.lt.s32.totalorder %s256, 1
      %s260 = scalar_select %p259, %s256, 1
      %s261 = smul.addr %s258, 2
      %s262 = sadd.s32 %s260, %s261
      %s263 = smul.addr %s262, 8
      %s264 = scalar_lea.vmem %s0, %s263
      %s265 = smul.u32 5, %s19
      %s266 = smul.u32 2, %s20
      %s267 = smul.u32 5, %s19
      %p268 = scmp.lt.s32.totalorder %s267, 9
      %s269 = scalar_select %p268, %s267, 9
      %s270 = smul.addr %s269, 3
      %s271 = smul.addr %s270, 8
      %s272 = scalar_lea.vmem %s1, %s271
      %s273 = smul.u32 5, %s19
      %s274 = smul.u32 2, %s20
      %p275 = scmp.lt.s32.totalorder %s274, 1
      %s276 = scalar_select %p275, %s274, 1
      %s277 = smul.addr %s276, 8
      %s278 = scalar_lea.vmem %s2, %s277
      %s279 = smul.u32 2, %s20
      %s280 = smul.u32 5, %s19
      %s281 = smul.u32 2, %s20
      %p282 = scmp.lt.s32.totalorder %s280, 9
      %s283 = scalar_select %p282, %s280, 9
      %p284 = scmp.lt.s32.totalorder %s281, 1
      %s285 = scalar_select %p284, %s281, 1
      %s286 = smul.addr %s283, 2
      %s287 = sadd.s32 %s285, %s286
      %s288 = smul.addr %s287, 8
      %s289 = scalar_lea.vmem %s4, %s288
      %s290 = smul.u32 5, %s19
      %s291 = smul.u32 2, %s20
      %v292 = vld [vmem:[%s278] sm:$0xff]
      %v293 = vld [vmem:[%s278 + $0x8] sm:$0xff]
      %v294 = vld [vmem:[%s3] sm:$0xff]
      %v295 = vld [vmem:[%s3 + $0x8] sm:$0xff]
      %v296 = vld [vmem:[%s3 + $0x10] sm:$0xf]
      %v297 = vld [vmem:[%s272] sm:$0xff]
      %v298 = vld [vmem:[%s272 + $0x8] sm:$0xff]
      %v299 = vld [vmem:[%s272 + $0x10] sm:$0xf]
      %vm300 = vcmask 162816
      %v302 = vsel %vm300, %v292, 0
      %v305 = vsel %vm300, %v293, 0
      %vm307 = vcmask 1043456
      %v309 = vsel %vm307, %v299, 0
      %311 = vmatprep.subr.mxu0 0.0
      %312 = vmatpush1.msra.mxu0 %v297
      %313 = vmatprep.subr.mxu0 0.0
      %314 = vmatpush1.msra.mxu0 %v298
      %315 = vmatprep.subr.mxu0 0.0
      %316 = vmatpush1.msra.mxu0 %v309
      %317 = vmatprep.subr.mxu0 0.0
      %318 = vmatpush1.msra.mxu0 0.0
      %319 = vmatprep.subr.mxu0 0.0
      %320 = vmatpush1.msra.mxu0 0.0
      %321 = vmatprep.subr.mxu0 0.0
      %322 = vmatpush1.msra.mxu0 0.0
      %323 = vmatprep.subr.mxu0 0.0
      %324 = vmatpush1.msra.mxu0 0.0
      %325 = vmatprep.subr.mxu0 0.0
      %326 = vmatpush1.msra.mxu0 0.0
      %327 = vmatprep.subr.mxu0 0.0
      %328 = vmatpush1.msra.mxu0 0.0
      %329 = vmatprep.subr.mxu0 0.0
      %330 = vmatpush1.msra.mxu0 0.0
      %331 = vmatprep.subr.mxu0 0.0
      %332 = vmatpush1.msra.mxu0 0.0
      %333 = vmatprep.subr.mxu0 0.0
      %334 = vmatpush1.msra.mxu0 0.0
      %335 = vmatprep.subr.mxu0 0.0
      %336 = vmatpush1.msra.mxu0 0.0
      %337 = vmatprep.subr.mxu0 0.0
      %338 = vmatpush1.msra.mxu0 0.0
      %339 = vmatprep.subr.mxu0 0.0
      %340 = vmatpush1.msra.mxu0 0.0
      %341 = vmatprep.subr.mxu0 0.0
      %342 = vmatpush1.msra.mxu0 0.0
      %343 = vmatprep.subr.mxu0 0.0
      %344 = vmatpush1.msra.mxu0 0.0
      %345 = vmatprep.subr.mxu0 0.0
      %346 = vmatpush1.msra.mxu0 0.0
      %347 = vmatprep.subr.mxu0 0.0
      %348 = vmatpush1.msra.mxu0 0.0
      %349 = vmatprep.subr.mxu0 0.0
      %350 = vmatpush1.msra.mxu0 0.0
      %351 = vmatprep.subr.mxu0 0.0
      %352 = vmatpush1.msra.mxu0 0.0
      %353 = vmatprep.subr.mxu0 0.0
      %354 = vmatpush1.msra.mxu0 0.0
      %355 = vmatprep.subr.mxu0 0.0
      %356 = vmatpush1.msra.mxu0 0.0
      %357 = vmatprep.subr.mxu0 0.0
      %358 = vmatpush1.msra.mxu0 0.0
      %359 = vmatprep.subr.mxu0 0.0
      %360 = vmatpush1.msra.mxu0 0.0
      %361 = vmatprep.subr.mxu0 0.0
      %362 = vmatpush1.msra.mxu0 0.0
      %363 = vmatprep.subr.mxu0 0.0
      %364 = vmatpush1.msra.mxu0 0.0
      %365 = vmatprep.subr.mxu0 0.0
      %366 = vmatpush1.msra.mxu0 0.0
      %367 = vmatprep.subr.mxu0 0.0
      %368 = vmatpush1.msra.mxu0 0.0
      %369 = vmatprep.subr.mxu0 0.0
      %370 = vmatpush1.msra.mxu0 0.0
      %371 = vmatprep.subr.mxu0 0.0
      %372 = vmatpush1.msra.mxu0 0.0
      %373 = vmatprep.subr.mxu0 0.0
      %374 = vmatpush1.msra.mxu0 0.0
      %375 = vmatprep.mubr.f32.mxu0 0.0
      %376 = vmatmul.mubr.f32.gmra.mrb[0].mxu0 %v302
      %v377 = vpop.f32.mrb[0].mxu0
      %v378 = vadd.f32 0.0, %v377
      %v379 = vpop.f32.mrb[0].mxu0
      %380 = vmatprep.mubr.f32.mxu0 0.0
      %381 = vmatmul.mubr.f32.gmra.mrb[0].mxu0 %v305
      %v382 = vpop.f32.mrb[0].mxu0
      %v383 = vadd.f32 0.0, %v382
      %v384 = vpop.f32.mrb[0].mxu0
      %385 = vdwg.mxu0
      %v387 = vsel %vm300, %v378, 0
      %v390 = vsel %vm300, %v383, 0
      %v393 = vsel %vm307, %v296, 0
      %395 = vmatprep.subr.mxu0 0.0
      %396 = vmatpush1.msra.mxu0 %v294
      %397 = vmatprep.subr.mxu0 0.0
      %398 = vmatpush1.msra.mxu0 %v295
      %399 = vmatprep.subr.mxu0 0.0
      %400 = vmatpush1.msra.mxu0 %v393
      %401 = vmatprep.subr.mxu0 0.0
      %402 = vmatpush1.msra.mxu0 0.0
      %403 = vmatprep.subr.mxu0 0.0
      %404 = vmatpush1.msra.mxu0 0.0
      %405 = vmatprep.subr.mxu0 0.0
      %406 = vmatpush1.msra.mxu0 0.0
      %407 = vmatprep.subr.mxu0 0.0
      %408 = vmatpush1.msra.mxu0 0.0
      %409 = vmatprep.subr.mxu0 0.0
      %410 = vmatpush1.msra.mxu0 0.0
      %411 = vmatprep.subr.mxu0 0.0
      %412 = vmatpush1.msra.mxu0 0.0
      %413 = vmatprep.subr.mxu0 0.0
      %414 = vmatpush1.msra.mxu0 0.0
      %415 = vmatprep.subr.mxu0 0.0
      %416 = vmatpush1.msra.mxu0 0.0
      %417 = vmatprep.subr.mxu0 0.0
      %418 = vmatpush1.msra.mxu0 0.0
      %419 = vmatprep.subr.mxu0 0.0
      %420 = vmatpush1.msra.mxu0 0.0
      %421 = vmatprep.subr.mxu0 0.0
      %422 = vmatpush1.msra.mxu0 0.0
      %423 = vmatprep.subr.mxu0 0.0
      %424 = vmatpush1.msra.mxu0 0.0
      %425 = vmatprep.subr.mxu0 0.0
      %426 = vmatpush1.msra.mxu0 0.0
      %427 = vmatprep.subr.mxu0 0.0
      %428 = vmatpush1.msra.mxu0 0.0
      %429 = vmatprep.subr.mxu0 0.0
      %430 = vmatpush1.msra.mxu0 0.0
      %431 = vmatprep.subr.mxu0 0.0
      %432 = vmatpush1.msra.mxu0 0.0
      %433 = vmatprep.subr.mxu0 0.0
      %434 = vmatpush1.msra.mxu0 0.0
      %435 = vmatprep.subr.mxu0 0.0
      %436 = vmatpush1.msra.mxu0 0.0
      %437 = vmatprep.subr.mxu0 0.0
      %438 = vmatpush1.msra.mxu0 0.0
      %439 = vmatprep.subr.mxu0 0.0
      %440 = vmatpush1.msra.mxu0 0.0
      %441 = vmatprep.subr.mxu0 0.0
      %442 = vmatpush1.msra.mxu0 0.0
      %443 = vmatprep.subr.mxu0 0.0
      %444 = vmatpush1.msra.mxu0 0.0
      %445 = vmatprep.subr.mxu0 0.0
      %446 = vmatpush1.msra.mxu0 0.0
      %447 = vmatprep.subr.mxu0 0.0
      %448 = vmatpush1.msra.mxu0 0.0
      %449 = vmatprep.subr.mxu0 0.0
      %450 = vmatpush1.msra.mxu0 0.0
      %451 = vmatprep.subr.mxu0 0.0
      %452 = vmatpush1.msra.mxu0 0.0
      %453 = vmatprep.subr.mxu0 0.0
      %454 = vmatpush1.msra.mxu0 0.0
      %455 = vmatprep.subr.mxu0 0.0
      %456 = vmatpush1.msra.mxu0 0.0
      %457 = vmatprep.subr.mxu0 0.0
      %458 = vmatpush1.msra.mxu0 0.0
      %459 = vmatprep.mubr.f32.mxu0 0.0
      %460 = vmatmul.mubr.f32.gmra.mrb[0].mxu0 %v387
      %v461 = vpop.f32.mrb[0].mxu0
      %v462 = vadd.f32 0.0, %v461
      %v463 = vpop.f32.mrb[0].mxu0
      %464 = vmatprep.mubr.f32.mxu0 0.0
      %465 = vmatmul.mubr.f32.gmra.mrb[0].mxu0 %v390
      %v466 = vpop.f32.mrb[0].mxu0
      %v467 = vadd.f32 0.0, %v466
      %v468 = vpop.f32.mrb[0].mxu0
      %469 = vdwg.mxu0
      %v470 = vld [vmem:[%s264] sm:$0xff]
      %v471 = vld [vmem:[%s264 + $0x8] sm:$0xff]
      %v472 = vadd.f32 %v470, %v462
      %v473 = vadd.f32 %v471, %v467
      %v474 = vmul.f32 %v472, 0.33333334
      %v475 = vmul.f32 %v473, 0.33333334
      %vm476 = vcmask 130048
      %477 = vst.msk [vmem:[%s289] sm:$0xff] %vm476, %v474
      %478 = vst.msk [vmem:[%s289 + $0x8] sm:$0xff] %vm476, %v475
      %s479 = scalar_lea.vmem %s272, 24
      %v480 = vld [vmem:[%s479] sm:$0xff]
      %v481 = vld [vmem:[%s479 + $0x8] sm:$0xff]
      %v482 = vld [vmem:[%s479 + $0x10] sm:$0xf]
      %v484 = vsel %vm307, %v482, 0
      %486 = vmatprep.subr.mxu0 0.0
      %487 = vmatpush1.msra.mxu0 %v480
      %488 = vmatprep.subr.mxu0 0.0
      %489 = vmatpush1.msra.mxu0 %v481
      %490 = vmatprep.subr.mxu0 0.0
      %491 = vmatpush1.msra.mxu0 %v484
      %492 = vmatprep.subr.mxu0 0.0
      %493 = vmatpush1.msra.mxu0 0.0
      %494 = vmatprep.subr.mxu0 0.0
      %495 = vmatpush1.msra.mxu0 0.0
      %496 = vmatprep.subr.mxu0 0.0
      %497 = vmatpush1.msra.mxu0 0.0
      %498 = vmatprep.subr.mxu0 0.0
      %499 = vmatpush1.msra.mxu0 0.0
      %500 = vmatprep.subr.mxu0 0.0
      %501 = vmatpush1.msra.mxu0 0.0
      %502 = vmatprep.subr.mxu0 0.0
      %503 = vmatpush1.msra.mxu0 0.0
      %504 = vmatprep.subr.mxu0 0.0
      %505 = vmatpush1.msra.mxu0 0.0
      %506 = vmatprep.subr.mxu0 0.0
      %507 = vmatpush1.msra.mxu0 0.0
      %508 = vmatprep.subr.mxu0 0.0
      %509 = vmatpush1.msra.mxu0 0.0
      %510 = vmatprep.subr.mxu0 0.0
      %511 = vmatpush1.msra.mxu0 0.0
      %512 = vmatprep.subr.mxu0 0.0
      %513 = vmatpush1.msra.mxu0 0.0
      %514 = vmatprep.subr.mxu0 0.0
      %515 = vmatpush1.msra.mxu0 0.0
      %516 = vmatprep.subr.mxu0 0.0
      %517 = vmatpush1.msra.mxu0 0.0
      %518 = vmatprep.subr.mxu0 0.0
      %519 = vmatpush1.msra.mxu0 0.0
      %520 = vmatprep.subr.mxu0 0.0
      %521 = vmatpush1.msra.mxu0 0.0
      %522 = vmatprep.subr.mxu0 0.0
      %523 = vmatpush1.msra.mxu0 0.0
      %524 = vmatprep.subr.mxu0 0.0
      %525 = vmatpush1.msra.mxu0 0.0
      %526 = vmatprep.subr.mxu0 0.0
      %527 = vmatpush1.msra.mxu0 0.0
      %528 = vmatprep.subr.mxu0 0.0
      %529 = vmatpush1.msra.mxu0 0.0
      %530 = vmatprep.subr.mxu0 0.0
      %531 = vmatpush1.msra.mxu0 0.0
      %532 = vmatprep.subr.mxu0 0.0
      %533 = vmatpush1.msra.mxu0 0.0
      %534 = vmatprep.subr.mxu0 0.0
      %535 = vmatpush1.msra.mxu0 0.0
      %536 = vmatprep.subr.mxu0 0.0
      %537 = vmatpush1.msra.mxu0 0.0
      %538 = vmatprep.subr.mxu0 0.0
      %539 = vmatpush1.msra.mxu0 0.0
      %540 = vmatprep.subr.mxu0 0.0
      %541 = vmatpush1.msra.mxu0 0.0
      %542 = vmatprep.subr.mxu0 0.0
      %543 = vmatpush1.msra.mxu0 0.0
      %544 = vmatprep.subr.mxu0 0.0
      %545 = vmatpush1.msra.mxu0 0.0
      %546 = vmatprep.subr.mxu0 0.0
      %547 = vmatpush1.msra.mxu0 0.0
      %548 = vmatprep.subr.mxu0 0.0
      %549 = vmatpush1.msra.mxu0 0.0
      %550 = vmatprep.mubr.f32.mxu0 0.0
      %551 = vmatmul.mubr.f32.gmra.mrb[0].mxu0 %v302
      %v552 = vpop.f32.mrb[0].mxu0
      %v553 = vadd.f32 0.0, %v552
      %v554 = vpop.f32.mrb[0].mxu0
      %555 = vmatprep.mubr.f32.mxu0 0.0
      %556 = vmatmul.mubr.f32.gmra.mrb[0].mxu0 %v305
      %v557 = vpop.f32.mrb[0].mxu0
      %v558 = vadd.f32 0.0, %v557
      %v559 = vpop.f32.mrb[0].mxu0
      %560 = vdwg.mxu0
      %v562 = vsel %vm300, %v553, 0
      %v565 = vsel %vm300, %v558, 0
      %567 = vmatprep.subr.mxu0 0.0
      %568 = vmatpush1.msra.mxu0 %v294
      %569 = vmatprep.subr.mxu0 0.0
      %570 = vmatpush1.msra.mxu0 %v295
      %571 = vmatprep.subr.mxu0 0.0
      %572 = vmatpush1.msra.mxu0 %v393
      %573 = vmatprep.subr.mxu0 0.0
      %574 = vmatpush1.msra.mxu0 0.0
      %575 = vmatprep.subr.mxu0 0.0
      %576 = vmatpush1.msra.mxu0 0.0
      %577 = vmatprep.subr.mxu0 0.0
      %578 = vmatpush1.msra.mxu0 0.0
      %579 = vmatprep.subr.mxu0 0.0
      %580 = vmatpush1.msra.mxu0 0.0
      %581 = vmatprep.subr.mxu0 0.0
      %582 = vmatpush1.msra.mxu0 0.0
      %583 = vmatprep.subr.mxu0 0.0
      %584 = vmatpush1.msra.mxu0 0.0
      %585 = vmatprep.subr.mxu0 0.0
      %586 = vmatpush1.msra.mxu0 0.0
      %587 = vmatprep.subr.mxu0 0.0
      %588 = vmatpush1.msra.mxu0 0.0
      %589 = vmatprep.subr.mxu0 0.0
      %590 = vmatpush1.msra.mxu0 0.0
      %591 = vmatprep.subr.mxu0 0.0
      %592 = vmatpush1.msra.mxu0 0.0
      %593 = vmatprep.subr.mxu0 0.0
      %594 = vmatpush1.msra.mxu0 0.0
      %595 = vmatprep.subr.mxu0 0.0
      %596 = vmatpush1.msra.mxu0 0.0
      %597 = vmatprep.subr.mxu0 0.0
      %598 = vmatpush1.msra.mxu0 0.0
      %599 = vmatprep.subr.mxu0 0.0
      %600 = vmatpush1.msra.mxu0 0.0
      %601 = vmatprep.subr.mxu0 0.0
      %602 = vmatpush1.msra.mxu0 0.0
      %603 = vmatprep.subr.mxu0 0.0
      %604 = vmatpush1.msra.mxu0 0.0
      %605 = vmatprep.subr.mxu0 0.0
      %606 = vmatpush1.msra.mxu0 0.0
      %607 = vmatprep.subr.mxu0 0.0
      %608 = vmatpush1.msra.mxu0 0.0
      %609 = vmatprep.subr.mxu0 0.0
      %610 = vmatpush1.msra.mxu0 0.0
      %611 = vmatprep.subr.mxu0 0.0
      %612 = vmatpush1.msra.mxu0 0.0
      %613 = vmatprep.subr.mxu0 0.0
      %614 = vmatpush1.msra.mxu0 0.0
      %615 = vmatprep.subr.mxu0 0.0
      %616 = vmatpush1.msra.mxu0 0.0
      %617 = vmatprep.subr.mxu0 0.0
      %618 = vmatpush1.msra.mxu0 0.0
      %619 = vmatprep.subr.mxu0 0.0
      %620 = vmatpush1.msra.mxu0 0.0
      %621 = vmatprep.subr.mxu0 0.0
      %622 = vmatpush1.msra.mxu0 0.0
      %623 = vmatprep.subr.mxu0 0.0
      %624 = vmatpush1.msra.mxu0 0.0
      %625 = vmatprep.subr.mxu0 0.0
      %626 = vmatpush1.msra.mxu0 0.0
      %627 = vmatprep.subr.mxu0 0.0
      %628 = vmatpush1.msra.mxu0 0.0
      %629 = vmatprep.subr.mxu0 0.0
      %630 = vmatpush1.msra.mxu0 0.0
      %631 = vmatprep.mubr.f32.mxu0 0.0
      %632 = vmatmul.mubr.f32.gmra.mrb[0].mxu0 %v562
      %v633 = vpop.f32.mrb[0].mxu0
      %v634 = vadd.f32 0.0, %v633
      %v635 = vpop.f32.mrb[0].mxu0
      %636 = vmatprep.mubr.f32.mxu0 0.0
      %637 = vmatmul.mubr.f32.gmra.mrb[0].mxu0 %v565
      %v638 = vpop.f32.mrb[0].mxu0
      %v639 = vadd.f32 0.0, %v638
      %v640 = vpop.f32.mrb[0].mxu0
      %641 = vdwg.mxu0
      %s642 = scalar_lea.vmem %s264, 16
      %v643 = vld [vmem:[%s642] sm:$0xff]
      %v644 = vld [vmem:[%s642 + $0x8] sm:$0xff]
      %v645 = vadd.f32 %v643, %v634
      %v646 = vadd.f32 %v644, %v639
      %v647 = vmul.f32 %v645, 0.33333334
      %v648 = vmul.f32 %v646, 0.33333334
      %s649 = scalar_lea.vmem %s289, 16
      %650 = vst.msk [vmem:[%s649] sm:$0xff] %vm476, %v647
      %651 = vst.msk [vmem:[%s649 + $0x8] sm:$0xff] %vm476, %v648
      %s652 = scalar_lea.vmem %s272, 48
      %v653 = vld [vmem:[%s652] sm:$0xff]
      %v654 = vld [vmem:[%s652 + $0x8] sm:$0xff]
      %v655 = vld [vmem:[%s652 + $0x10] sm:$0xf]
      %v657 = vsel %vm307, %v655, 0
      %659 = vmatprep.subr.mxu0 0.0
      %660 = vmatpush1.msra.mxu0 %v653
      %661 = vmatprep.subr.mxu0 0.0
      %662 = vmatpush1.msra.mxu0 %v654
      %663 = vmatprep.subr.mxu0 0.0
      %664 = vmatpush1.msra.mxu0 %v657
      %665 = vmatprep.subr.mxu0 0.0
      %666 = vmatpush1.msra.mxu0 0.0
      %667 = vmatprep.subr.mxu0 0.0
      %668 = vmatpush1.msra.mxu0 0.0
      %669 = vmatprep.subr.mxu0 0.0
      %670 = vmatpush1.msra.mxu0 0.0
      %671 = vmatprep.subr.mxu0 0.0
      %672 = vmatpush1.msra.mxu0 0.0
      %673 = vmatprep.subr.mxu0 0.0
      %674 = vmatpush1.msra.mxu0 0.0
      %675 = vmatprep.subr.mxu0 0.0
      %676 = vmatpush1.msra.mxu0 0.0
      %677 = vmatprep.subr.mxu0 0.0
      %678 = vmatpush1.msra.mxu0 0.0
      %679 = vmatprep.subr.mxu0 0.0
      %680 = vmatpush1.msra.mxu0 0.0
      %681 = vmatprep.subr.mxu0 0.0
      %682 = vmatpush1.msra.mxu0 0.0
      %683 = vmatprep.subr.mxu0 0.0
      %684 = vmatpush1.msra.mxu0 0.0
      %685 = vmatprep.subr.mxu0 0.0
      %686 = vmatpush1.msra.mxu0 0.0
      %687 = vmatprep.subr.mxu0 0.0
      %688 = vmatpush1.msra.mxu0 0.0
      %689 = vmatprep.subr.mxu0 0.0
      %690 = vmatpush1.msra.mxu0 0.0
      %691 = vmatprep.subr.mxu0 0.0
      %692 = vmatpush1.msra.mxu0 0.0
      %693 = vmatprep.subr.mxu0 0.0
      %694 = vmatpush1.msra.mxu0 0.0
      %695 = vmatprep.subr.mxu0 0.0
      %696 = vmatpush1.msra.mxu0 0.0
      %697 = vmatprep.subr.mxu0 0.0
      %698 = vmatpush1.msra.mxu0 0.0
      %699 = vmatprep.subr.mxu0 0.0
      %700 = vmatpush1.msra.mxu0 0.0
      %701 = vmatprep.subr.mxu0 0.0
      %702 = vmatpush1.msra.mxu0 0.0
      %703 = vmatprep.subr.mxu0 0.0
      %704 = vmatpush1.msra.mxu0 0.0
      %705 = vmatprep.subr.mxu0 0.0
      %706 = vmatpush1.msra.mxu0 0.0
      %707 = vmatprep.subr.mxu0 0.0
      %708 = vmatpush1.msra.mxu0 0.0
      %709 = vmatprep.subr.mxu0 0.0
      %710 = vmatpush1.msra.mxu0 0.0
      %711 = vmatprep.subr.mxu0 0.0
      %712 = vmatpush1.msra.mxu0 0.0
      %713 = vmatprep.subr.mxu0 0.0
      %714 = vmatpush1.msra.mxu0 0.0
      %715 = vmatprep.subr.mxu0 0.0
      %716 = vmatpush1.msra.mxu0 0.0
      %717 = vmatprep.subr.mxu0 0.0
      %718 = vmatpush1.msra.mxu0 0.0
      %719 = vmatprep.subr.mxu0 0.0
      %720 = vmatpush1.msra.mxu0 0.0
      %721 = vmatprep.subr.mxu0 0.0
      %722 = vmatpush1.msra.mxu0 0.0
      %723 = vmatprep.mubr.f32.mxu0 0.0
      %724 = vmatmul.mubr.f32.gmra.mrb[0].mxu0 %v302
      %v725 = vpop.f32.mrb[0].mxu0
      %v726 = vadd.f32 0.0, %v725
      %v727 = vpop.f32.mrb[0].mxu0
      %728 = vmatprep.mubr.f32.mxu0 0.0
      %729 = vmatmul.mubr.f32.gmra.mrb[0].mxu0 %v305
      %v730 = vpop.f32.mrb[0].mxu0
      %v731 = vadd.f32 0.0, %v730
      %v732 = vpop.f32.mrb[0].mxu0
      %733 = vdwg.mxu0
      %v735 = vsel %vm300, %v726, 0
      %v738 = vsel %vm300, %v731, 0
      %740 = vmatprep.subr.mxu0 0.0
      %741 = vmatpush1.msra.mxu0 %v294
      %742 = vmatprep.subr.mxu0 0.0
      %743 = vmatpush1.msra.mxu0 %v295
      %744 = vmatprep.subr.mxu0 0.0
      %745 = vmatpush1.msra.mxu0 %v393
      %746 = vmatprep.subr.mxu0 0.0
      %747 = vmatpush1.msra.mxu0 0.0
      %748 = vmatprep.subr.mxu0 0.0
      %749 = vmatpush1.msra.mxu0 0.0
      %750 = vmatprep.subr.mxu0 0.0
      %751 = vmatpush1.msra.mxu0 0.0
      %752 = vmatprep.subr.mxu0 0.0
      %753 = vmatpush1.msra.mxu0 0.0
      %754 = vmatprep.subr.mxu0 0.0
      %755 = vmatpush1.msra.mxu0 0.0
      %756 = vmatprep.subr.mxu0 0.0
      %757 = vmatpush1.msra.mxu0 0.0
      %758 = vmatprep.subr.mxu0 0.0
      %759 = vmatpush1.msra.mxu0 0.0
      %760 = vmatprep.subr.mxu0 0.0
      %761 = vmatpush1.msra.mxu0 0.0
      %762 = vmatprep.subr.mxu0 0.0
      %763 = vmatpush1.msra.mxu0 0.0
      %764 = vmatprep.subr.mxu0 0.0
      %765 = vmatpush1.msra.mxu0 0.0
      %766 = vmatprep.subr.mxu0 0.0
      %767 = vmatpush1.msra.mxu0 0.0
      %768 = vmatprep.subr.mxu0 0.0
      %769 = vmatpush1.msra.mxu0 0.0
      %770 = vmatprep.subr.mxu0 0.0
      %771 = vmatpush1.msra.mxu0 0.0
      %772 = vmatprep.subr.mxu0 0.0
      %773 = vmatpush1.msra.mxu0 0.0
      %774 = vmatprep.subr.mxu0 0.0
      %775 = vmatpush1.msra.mxu0 0.0
      %776 = vmatprep.subr.mxu0 0.0
      %777 = vmatpush1.msra.mxu0 0.0
      %778 = vmatprep.subr.mxu0 0.0
      %779 = vmatpush1.msra.mxu0 0.0
      %780 = vmatprep.subr.mxu0 0.0
      %781 = vmatpush1.msra.mxu0 0.0
      %782 = vmatprep.subr.mxu0 0.0
      %783 = vmatpush1.msra.mxu0 0.0
      %784 = vmatprep.subr.mxu0 0.0
      %785 = vmatpush1.msra.mxu0 0.0
      %786 = vmatprep.subr.mxu0 0.0
      %787 = vmatpush1.msra.mxu0 0.0
      %788 = vmatprep.subr.mxu0 0.0
      %789 = vmatpush1.msra.mxu0 0.0
      %790 = vmatprep.subr.mxu0 0.0
      %791 = vmatpush1.msra.mxu0 0.0
      %792 = vmatprep.subr.mxu0 0.0
      %793 = vmatpush1.msra.mxu0 0.0
      %794 = vmatprep.subr.mxu0 0.0
      %795 = vmatpush1.msra.mxu0 0.0
      %796 = vmatprep.subr.mxu0 0.0
      %797 = vmatpush1.msra.mxu0 0.0
      %798 = vmatprep.subr.mxu0 0.0
      %799 = vmatpush1.msra.mxu0 0.0
      %800 = vmatprep.subr.mxu0 0.0
      %801 = vmatpush1.msra.mxu0 0.0
      %802 = vmatprep.subr.mxu0 0.0
      %803 = vmatpush1.msra.mxu0 0.0
      %804 = vmatprep.mubr.f32.mxu0 0.0
      %805 = vmatmul.mubr.f32.gmra.mrb[0].mxu0 %v735
      %v806 = vpop.f32.mrb[0].mxu0
      %v807 = vadd.f32 0.0, %v806
      %v808 = vpop.f32.mrb[0].mxu0
      %809 = vmatprep.mubr.f32.mxu0 0.0
      %810 = vmatmul.mubr.f32.gmra.mrb[0].mxu0 %v738
      %v811 = vpop.f32.mrb[0].mxu0
      %v812 = vadd.f32 0.0, %v811
      %v813 = vpop.f32.mrb[0].mxu0
      %814 = vdwg.mxu0
      %s815 = scalar_lea.vmem %s264, 32
      %v816 = vld [vmem:[%s815] sm:$0xff]
      %v817 = vld [vmem:[%s815 + $0x8] sm:$0xff]
      %v818 = vadd.f32 %v816, %v807
      %v819 = vadd.f32 %v817, %v812
      %v820 = vmul.f32 %v818, 0.33333334
      %v821 = vmul.f32 %v819, 0.33333334
      %s822 = scalar_lea.vmem %s289, 32
      %823 = vst.msk [vmem:[%s822] sm:$0xff] %vm476, %v820
      %824 = vst.msk [vmem:[%s822 + $0x8] sm:$0xff] %vm476, %v821
      %s825 = scalar_lea.vmem %s272, 72
      %v826 = vld [vmem:[%s825] sm:$0xff]
      %v827 = vld [vmem:[%s825 + $0x8] sm:$0xff]
      %v828 = vld [vmem:[%s825 + $0x10] sm:$0xf]
      %v830 = vsel %vm307, %v828, 0
      %832 = vmatprep.subr.mxu0 0.0
      %833 = vmatpush1.msra.mxu0 %v826
      %834 = vmatprep.subr.mxu0 0.0
      %835 = vmatpush1.msra.mxu0 %v827
      %836 = vmatprep.subr.mxu0 0.0
      %837 = vmatpush1.msra.mxu0 %v830
      %838 = vmatprep.subr.mxu0 0.0
      %839 = vmatpush1.msra.mxu0 0.0
      %840 = vmatprep.subr.mxu0 0.0
      %841 = vmatpush1.msra.mxu0 0.0
      %842 = vmatprep.subr.mxu0 0.0
      %843 = vmatpush1.msra.mxu0 0.0
      %844 = vmatprep.subr.mxu0 0.0
      %845 = vmatpush1.msra.mxu0 0.0
      %846 = vmatprep.subr.mxu0 0.0
      %847 = vmatpush1.msra.mxu0 0.0
      %848 = vmatprep.subr.mxu0 0.0
      %849 = vmatpush1.msra.mxu0 0.0
      %850 = vmatprep.subr.mxu0 0.0
      %851 = vmatpush1.msra.mxu0 0.0
      %852 = vmatprep.subr.mxu0 0.0
      %853 = vmatpush1.msra.mxu0 0.0
      %854 = vmatprep.subr.mxu0 0.0
      %855 = vmatpush1.msra.mxu0 0.0
      %856 = vmatprep.subr.mxu0 0.0
      %857 = vmatpush1.msra.mxu0 0.0
      %858 = vmatprep.subr.mxu0 0.0
      %859 = vmatpush1.msra.mxu0 0.0
      %860 = vmatprep.subr.mxu0 0.0
      %861 = vmatpush1.msra.mxu0 0.0
      %862 = vmatprep.subr.mxu0 0.0
      %863 = vmatpush1.msra.mxu0 0.0
      %864 = vmatprep.subr.mxu0 0.0
      %865 = vmatpush1.msra.mxu0 0.0
      %866 = vmatprep.subr.mxu0 0.0
      %867 = vmatpush1.msra.mxu0 0.0
      %868 = vmatprep.subr.mxu0 0.0
      %869 = vmatpush1.msra.mxu0 0.0
      %870 = vmatprep.subr.mxu0 0.0
      %871 = vmatpush1.msra.mxu0 0.0
      %872 = vmatprep.subr.mxu0 0.0
      %873 = vmatpush1.msra.mxu0 0.0
      %874 = vmatprep.subr.mxu0 0.0
      %875 = vmatpush1.msra.mxu0 0.0
      %876 = vmatprep.subr.mxu0 0.0
      %877 = vmatpush1.msra.mxu0 0.0
      %878 = vmatprep.subr.mxu0 0.0
      %879 = vmatpush1.msra.mxu0 0.0
      %880 = vmatprep.subr.mxu0 0.0
      %881 = vmatpush1.msra.mxu0 0.0
      %882 = vmatprep.subr.mxu0 0.0
      %883 = vmatpush1.msra.mxu0 0.0
      %884 = vmatprep.subr.mxu0 0.0
      %885 = vmatpush1.msra.mxu0 0.0
      %886 = vmatprep.subr.mxu0 0.0
      %887 = vmatpush1.msra.mxu0 0.0
      %888 = vmatprep.subr.mxu0 0.0
      %889 = vmatpush1.msra.mxu0 0.0
      %890 = vmatprep.subr.mxu0 0.0
      %891 = vmatpush1.msra.mxu0 0.0
      %892 = vmatprep.subr.mxu0 0.0
      %893 = vmatpush1.msra.mxu0 0.0
      %894 = vmatprep.subr.mxu0 0.0
      %895 = vmatpush1.msra.mxu0 0.0
      %896 = vmatprep.mubr.f32.mxu0 0.0
      %897 = vmatmul.mubr.f32.gmra.mrb[0].mxu0 %v302
      %v898 = vpop.f32.mrb[0].mxu0
      %v899 = vadd.f32 0.0, %v898
      %v900 = vpop.f32.mrb[0].mxu0
      %901 = vmatprep.mubr.f32.mxu0 0.0
      %902 = vmatmul.mubr.f32.gmra.mrb[0].mxu0 %v305
      %v903 = vpop.f32.mrb[0].mxu0
      %v904 = vadd.f32 0.0, %v903
      %v905 = vpop.f32.mrb[0].mxu0
      %906 = vdwg.mxu0
      %v908 = vsel %vm300, %v899, 0
      %v911 = vsel %vm300, %v904, 0
      %913 = vmatprep.subr.mxu0 0.0
      %914 = vmatpush1.msra.mxu0 %v294
      %915 = vmatprep.subr.mxu0 0.0
      %916 = vmatpush1.msra.mxu0 %v295
      %917 = vmatprep.subr.mxu0 0.0
      %918 = vmatpush1.msra.mxu0 %v393
      %919 = vmatprep.subr.mxu0 0.0
      %920 = vmatpush1.msra.mxu0 0.0
      %921 = vmatprep.subr.mxu0 0.0
      %922 = vmatpush1.msra.mxu0 0.0
      %923 = vmatprep.subr.mxu0 0.0
      %924 = vmatpush1.msra.mxu0 0.0
      %925 = vmatprep.subr.mxu0 0.0
      %926 = vmatpush1.msra.mxu0 0.0
      %927 = vmatprep.subr.mxu0 0.0
      %928 = vmatpush1.msra.mxu0 0.0
      %929 = vmatprep.subr.mxu0 0.0
      %930 = vmatpush1.msra.mxu0 0.0
      %931 = vmatprep.subr.mxu0 0.0
      %932 = vmatpush1.msra.mxu0 0.0
      %933 = vmatprep.subr.mxu0 0.0
      %934 = vmatpush1.msra.mxu0 0.0
      %935 = vmatprep.subr.mxu0 0.0
      %936 = vmatpush1.msra.mxu0 0.0
      %937 = vmatprep.subr.mxu0 0.0
      %938 = vmatpush1.msra.mxu0 0.0
      %939 = vmatprep.subr.mxu0 0.0
      %940 = vmatpush1.msra.mxu0 0.0
      %941 = vmatprep.subr.mxu0 0.0
      %942 = vmatpush1.msra.mxu0 0.0
      %943 = vmatprep.subr.mxu0 0.0
      %944 = vmatpush1.msra.mxu0 0.0
      %945 = vmatprep.subr.mxu0 0.0
      %946 = vmatpush1.msra.mxu0 0.0
      %947 = vmatprep.subr.mxu0 0.0
      %948 = vmatpush1.msra.mxu0 0.0
      %949 = vmatprep.subr.mxu0 0.0
      %950 = vmatpush1.msra.mxu0 0.0
      %951 = vmatprep.subr.mxu0 0.0
      %952 = vmatpush1.msra.mxu0 0.0
      %953 = vmatprep.subr.mxu0 0.0
      %954 = vmatpush1.msra.mxu0 0.0
      %955 = vmatprep.subr.mxu0 0.0
      %956 = vmatpush1.msra.mxu0 0.0
      %957 = vmatprep.subr.mxu0 0.0
      %958 = vmatpush1.msra.mxu0 0.0
      %959 = vmatprep.subr.mxu0 0.0
      %960 = vmatpush1.msra.mxu0 0.0
      %961 = vmatprep.subr.mxu0 0.0
      %962 = vmatpush1.msra.mxu0 0.0
      %963 = vmatprep.subr.mxu0 0.0
      %964 = vmatpush1.msra.mxu0 0.0
      %965 = vmatprep.subr.mxu0 0.0
      %966 = vmatpush1.msra.mxu0 0.0
      %967 = vmatprep.subr.mxu0 0.0
      %968 = vmatpush1.msra.mxu0 0.0
      %969 = vmatprep.subr.mxu0 0.0
      %970 = vmatpush1.msra.mxu0 0.0
      %971 = vmatprep.subr.mxu0 0.0
      %972 = vmatpush1.msra.mxu0 0.0
      %973 = vmatprep.subr.mxu0 0.0
      %974 = vmatpush1.msra.mxu0 0.0
      %975 = vmatprep.subr.mxu0 0.0
      %976 = vmatpush1.msra.mxu0 0.0
      %977 = vmatprep.mubr.f32.mxu0 0.0
      %978 = vmatmul.mubr.f32.gmra.mrb[0].mxu0 %v908
      %v979 = vpop.f32.mrb[0].mxu0
      %v980 = vadd.f32 0.0, %v979
      %v981 = vpop.f32.mrb[0].mxu0
      %982 = vmatprep.mubr.f32.mxu0 0.0
      %983 = vmatmul.mubr.f32.gmra.mrb[0].mxu0 %v911
      %v984 = vpop.f32.mrb[0].mxu0
      %v985 = vadd.f32 0.0, %v984
      %v986 = vpop.f32.mrb[0].mxu0
      %987 = vdwg.mxu0
      %s988 = scalar_lea.vmem %s264, 48
      %v989 = vld [vmem:[%s988] sm:$0xff]
      %v990 = vld [vmem:[%s988 + $0x8] sm:$0xff]
      %v991 = vadd.f32 %v989, %v980
      %v992 = vadd.f32 %v990, %v985
      %v993 = vmul.f32 %v991, 0.33333334
      %v994 = vmul.f32 %v992, 0.33333334
      %s995 = scalar_lea.vmem %s289, 48
      %996 = vst.msk [vmem:[%s995] sm:$0xff] %vm476, %v993
      %997 = vst.msk [vmem:[%s995 + $0x8] sm:$0xff] %vm476, %v994
      %s998 = scalar_lea.vmem %s272, 96
      %v999 = vld [vmem:[%s998] sm:$0xff]
      %v1000 = vld [vmem:[%s998 + $0x8] sm:$0xff]
      %v1001 = vld [vmem:[%s998 + $0x10] sm:$0xf]
      %v1003 = vsel %vm307, %v1001, 0
      %1005 = vmatprep.subr.mxu0 0.0
      %1006 = vmatpush1.msra.mxu0 %v999
      %1007 = vmatprep.subr.mxu0 0.0
      %1008 = vmatpush1.msra.mxu0 %v1000
      %1009 = vmatprep.subr.mxu0 0.0
      %1010 = vmatpush1.msra.mxu0 %v1003
      %1011 = vmatprep.subr.mxu0 0.0
      %1012 = vmatpush1.msra.mxu0 0.0
      %1013 = vmatprep.subr.mxu0 0.0
      %1014 = vmatpush1.msra.mxu0 0.0
      %1015 = vmatprep.subr.mxu0 0.0
      %1016 = vmatpush1.msra.mxu0 0.0
      %1017 = vmatprep.subr.mxu0 0.0
      %1018 = vmatpush1.msra.mxu0 0.0
      %1019 = vmatprep.subr.mxu0 0.0
      %1020 = vmatpush1.msra.mxu0 0.0
      %1021 = vmatprep.subr.mxu0 0.0
      %1022 = vmatpush1.msra.mxu0 0.0
      %1023 = vmatprep.subr.mxu0 0.0
      %1024 = vmatpush1.msra.mxu0 0.0
      %1025 = vmatprep.subr.mxu0 0.0
      %1026 = vmatpush1.msra.mxu0 0.0
      %1027 = vmatprep.subr.mxu0 0.0
      %1028 = vmatpush1.msra.mxu0 0.0
      %1029 = vmatprep.subr.mxu0 0.0
      %1030 = vmatpush1.msra.mxu0 0.0
      %1031 = vmatprep.subr.mxu0 0.0
      %1032 = vmatpush1.msra.mxu0 0.0
      %1033 = vmatprep.subr.mxu0 0.0
      %1034 = vmatpush1.msra.mxu0 0.0
      %1035 = vmatprep.subr.mxu0 0.0
      %1036 = vmatpush1.msra.mxu0 0.0
      %1037 = vmatprep.subr.mxu0 0.0
      %1038 = vmatpush1.msra.mxu0 0.0
      %1039 = vmatprep.subr.mxu0 0.0
      %1040 = vmatpush1.msra.mxu0 0.0
      %1041 = vmatprep.subr.mxu0 0.0
      %1042 = vmatpush1.msra.mxu0 0.0
      %1043 = vmatprep.subr.mxu0 0.0
      %1044 = vmatpush1.msra.mxu0 0.0
      %1045 = vmatprep.subr.mxu0 0.0
      %1046 = vmatpush1.msra.mxu0 0.0
      %1047 = vmatprep.subr.mxu0 0.0
      %1048 = vmatpush1.msra.mxu0 0.0
      %1049 = vmatprep.subr.mxu0 0.0
      %1050 = vmatpush1.msra.mxu0 0.0
      %1051 = vmatprep.subr.mxu0 0.0
      %1052 = vmatpush1.msra.mxu0 0.0
      %1053 = vmatprep.subr.mxu0 0.0
      %1054 = vmatpush1.msra.mxu0 0.0
      %1055 = vmatprep.subr.mxu0 0.0
      %1056 = vmatpush1.msra.mxu0 0.0
      %1057 = vmatprep.subr.mxu0 0.0
      %1058 = vmatpush1.msra.mxu0 0.0
      %1059 = vmatprep.subr.mxu0 0.0
      %1060 = vmatpush1.msra.mxu0 0.0
      %1061 = vmatprep.subr.mxu0 0.0
      %1062 = vmatpush1.msra.mxu0 0.0
      %1063 = vmatprep.subr.mxu0 0.0
      %1064 = vmatpush1.msra.mxu0 0.0
      %1065 = vmatprep.subr.mxu0 0.0
      %1066 = vmatpush1.msra.mxu0 0.0
      %1067 = vmatprep.subr.mxu0 0.0
      %1068 = vmatpush1.msra.mxu0 0.0
      %1069 = vmatprep.mubr.f32.mxu0 0.0
      %1070 = vmatmul.mubr.f32.gmra.mrb[0].mxu0 %v302
      %v1071 = vpop.f32.mrb[0].mxu0
      %v1072 = vadd.f32 0.0, %v1071
      %v1073 = vpop.f32.mrb[0].mxu0
      %1074 = vmatprep.mubr.f32.mxu0 0.0
      %1075 = vmatmul.mubr.f32.gmra.mrb[0].mxu0 %v305
      %v1076 = vpop.f32.mrb[0].mxu0
      %v1077 = vadd.f32 0.0, %v1076
      %v1078 = vpop.f32.mrb[0].mxu0
      %1079 = vdwg.mxu0
      %v1081 = vsel %vm300, %v1072, 0
      %v1084 = vsel %vm300, %v1077, 0
      %1086 = vmatprep.subr.mxu0 0.0
      %1087 = vmatpush1.msra.mxu0 %v294
      %1088 = vmatprep.subr.mxu0 0.0
      %1089 = vmatpush1.msra.mxu0 %v295
      %1090 = vmatprep.subr.mxu0 0.0
      %1091 = vmatpush1.msra.mxu0 %v393
      %1092 = vmatprep.subr.mxu0 0.0
      %1093 = vmatpush1.msra.mxu0 0.0
      %1094 = vmatprep.subr.mxu0 0.0
      %1095 = vmatpush1.msra.mxu0 0.0
      %1096 = vmatprep.subr.mxu0 0.0
      %1097 = vmatpush1.msra.mxu0 0.0
      %1098 = vmatprep.subr.mxu0 0.0
      %1099 = vmatpush1.msra.mxu0 0.0
      %1100 = vmatprep.subr.mxu0 0.0
      %1101 = vmatpush1.msra.mxu0 0.0
      %1102 = vmatprep.subr.mxu0 0.0
      %1103 = vmatpush1.msra.mxu0 0.0
      %1104 = vmatprep.subr.mxu0 0.0
      %1105 = vmatpush1.msra.mxu0 0.0
      %1106 = vmatprep.subr.mxu0 0.0
      %1107 = vmatpush1.msra.mxu0 0.0
      %1108 = vmatprep.subr.mxu0 0.0
      %1109 = vmatpush1.msra.mxu0 0.0
      %1110 = vmatprep.subr.mxu0 0.0
      %1111 = vmatpush1.msra.mxu0 0.0
      %1112 = vmatprep.subr.mxu0 0.0
      %1113 = vmatpush1.msra.mxu0 0.0
      %1114 = vmatprep.subr.mxu0 0.0
      %1115 = vmatpush1.msra.mxu0 0.0
      %1116 = vmatprep.subr.mxu0 0.0
      %1117 = vmatpush1.msra.mxu0 0.0
      %1118 = vmatprep.subr.mxu0 0.0
      %1119 = vmatpush1.msra.mxu0 0.0
      %1120 = vmatprep.subr.mxu0 0.0
      %1121 = vmatpush1.msra.mxu0 0.0
      %1122 = vmatprep.subr.mxu0 0.0
      %1123 = vmatpush1.msra.mxu0 0.0
      %1124 = vmatprep.subr.mxu0 0.0
      %1125 = vmatpush1.msra.mxu0 0.0
      %1126 = vmatprep.subr.mxu0 0.0
      %1127 = vmatpush1.msra.mxu0 0.0
      %1128 = vmatprep.subr.mxu0 0.0
      %1129 = vmatpush1.msra.mxu0 0.0
      %1130 = vmatprep.subr.mxu0 0.0
      %1131 = vmatpush1.msra.mxu0 0.0
      %1132 = vmatprep.subr.mxu0 0.0
      %1133 = vmatpush1.msra.mxu0 0.0
      %1134 = vmatprep.subr.mxu0 0.0
      %1135 = vmatpush1.msra.mxu0 0.0
      %1136 = vmatprep.subr.mxu0 0.0
      %1137 = vmatpush1.msra.mxu0 0.0
      %1138 = vmatprep.subr.mxu0 0.0
      %1139 = vmatpush1.msra.mxu0 0.0
      %1140 = vmatprep.subr.mxu0 0.0
      %1141 = vmatpush1.msra.mxu0 0.0
      %1142 = vmatprep.subr.mxu0 0.0
      %1143 = vmatpush1.msra.mxu0 0.0
      %1144 = vmatprep.subr.mxu0 0.0
      %1145 = vmatpush1.msra.mxu0 0.0
      %1146 = vmatprep.subr.mxu0 0.0
      %1147 = vmatpush1.msra.mxu0 0.0
      %1148 = vmatprep.subr.mxu0 0.0
      %1149 = vmatpush1.msra.mxu0 0.0
      %1150 = vmatprep.mubr.f32.mxu0 0.0
      %1151 = vmatmul.mubr.f32.gmra.mrb[0].mxu0 %v1081
      %v1152 = vpop.f32.mrb[0].mxu0
      %v1153 = vadd.f32 0.0, %v1152
      %v1154 = vpop.f32.mrb[0].mxu0
      %1155 = vmatprep.mubr.f32.mxu0 0.0
      %1156 = vmatmul.mubr.f32.gmra.mrb[0].mxu0 %v1084
      %v1157 = vpop.f32.mrb[0].mxu0
      %v1158 = vadd.f32 0.0, %v1157
      %v1159 = vpop.f32.mrb[0].mxu0
      %1160 = vdwg.mxu0
      %s1161 = scalar_lea.vmem %s264, 64
      %v1162 = vld [vmem:[%s1161] sm:$0xff]
      %v1163 = vld [vmem:[%s1161 + $0x8] sm:$0xff]
      %v1164 = vadd.f32 %v1162, %v1153
      %v1165 = vadd.f32 %v1163, %v1158
      %v1166 = vmul.f32 %v1164, 0.33333334
      %v1167 = vmul.f32 %v1165, 0.33333334
      %s1168 = scalar_lea.vmem %s289, 64
      %1169 = vst.msk [vmem:[%s1168] sm:$0xff] %vm476, %v1166
      %1170 = vst.msk [vmem:[%s1168 + $0x8] sm:$0xff] %vm476, %v1167
      %s1171 = smul.u32 5, %s19
      %s1172 = smul.u32 2, %s20
      %p1173 = scmp.lt.s32.totalorder %s1171, 9
      %s1174 = scalar_select %p1173, %s1171, 9
      %p1175 = scmp.lt.s32.totalorder %s1172, 1
      %s1176 = scalar_select %p1175, %s1172, 1
      %s1177 = smul.addr %s1174, 2
      %s1178 = sadd.s32 %s1176, %s1177
      %s1179 = smul.addr %s1178, 8
      %s1180 = scalar_lea.vmem %s4, %s1179
      // Predicated region
      $region37: #{multiscale_tta_forward.9} parent=35 // pred_check
        %p1181 = pneg %p148
      $region38: #{multiscale_tta_forward.9} parent=35 // pred_check_branch
        %1183 = sbr.rel (%p1181) target = $region40
      $region39: #{multiscale_tta_forward.9} parent=35 // pred_region
        %s1184 = smul.u32 5, %s19
        %s1185 = smul.u32 2, %s20
      $region40: #{multiscale_tta_forward.9} parent=35 // pred_fallthru
        _
    $region36: #{multiscale_tta_forward.9} parent=5 // pred_fallthru
      _
    %p1186 = scmp.le.s32.totalorder 2, %s10
    // Predicated region
    $region41: #{multiscale_tta_forward.9} parent=5 // pred_check
      %p1187 = pneg %p1186
    $region42: #{multiscale_tta_forward.9} parent=5 // pred_check_branch
      %1189 = sbr.rel (%p1187) target = $region44
    $region43: #{multiscale_tta_forward.9} parent=5 // pred_region
      %s1190 = ssub.s32 %s10, 2
      // Predicated region
      $region45: #{multiscale_tta_forward.9} parent=43 // pred_check
        %p1191 = pneg %p154
      $region46: #{multiscale_tta_forward.9} parent=43 // pred_check_branch
        %1193 = sbr.rel (%p1191) target = $region48
      $region47: #{multiscale_tta_forward.9} parent=43 // pred_region
        %s1194 = smul.u32 5, %s21
        %s1195 = smul.u32 2, %s22
        %p1196 = scmp.lt.s32.totalorder %s1194, 9
        %s1197 = scalar_select %p1196, %s1194, 9
        %p1198 = scmp.lt.s32.totalorder %s1195, 1
        %s1199 = scalar_select %p1198, %s1195, 1
        %s1200 = smul.addr %s1197, 2
        %s1201 = sadd.s32 %s1199, %s1200
        %s1202 = smul.addr %s1201, 8
        %s1203 = scalar_lea.vmem %s4, %s1202
      $region48: #{multiscale_tta_forward.9} parent=43 // pred_fallthru
        _
    $region44: #{multiscale_tta_forward.9} parent=5 // pred_fallthru
      _
  $region6: #{multiscale_tta_forward.9} parent=0 // loop_footer
    %s14 = sadd.s32 1, %s10
  $region7: #{multiscale_tta_forward.9} parent=0 // loop_footer_branch
    %9 = sbr.rel target = $region3
  $region8: #{multiscale_tta_forward.9} parent=0 // loop_exit
    _

</llo_original>
